<compile_context>
chip_gen: v6e
topology: v6e:2x2x1
jax: 0.10.0
libtpu: 0.0.40
codegen_flags: <defaults>
</compile_context>

<pallas_src>
import jax
import jax.numpy as jnp
from jax.experimental import pallas as pl
from jax.experimental.pallas import tpu as pltpu

# ---- model config (OligoRNN defaults: tanh RNN, relu MLPs, max pool,
#      n_layers_mlp=1, n_layers_encoder=1, dropout=0, bidirectional=False) ----
INPUT_SIZE = 8            # two one-hot nucleotides concatenated
FEATURES_SIZE = 8
HIDDEN_SIZE = 32
HIDDEN_SIZE_ENCODER = 32
N_LAYERS = 2              # RNN layers
SEQ_LEN = 8
BATCH = 2

TILE_B = 8                # one f32 sublane tile of batch rows per grid step
OUT_LANES = 128           # lane-dense (unmasked) output store width


def oligo_rnn_kernel(*refs):
    (x_ref, feat_ref,
     enc_w1, enc_b1, enc_w2, enc_b2,
     w_ih0, w_hh0, b0, *rest) = refs
    cat_refs = rest[:2 * (N_LAYERS - 1)]          # per layer l>=1: ([W_ih;W_hh], b_ih+b_hh)
    (sh_w1, sh_b1, sh_w2, sh_b2,
     f_w1, f_b1, f_w2, f_b2,
     fin_w1_h, fin_w1_f, fin_b1, fin_w2, fin_b2,
     out_ref) = rest[2 * (N_LAYERS - 1):]

    TB = TILE_B
    L = x_ref.shape[0] // TB
    H = HIDDEN_SIZE
    f32, bf16 = jnp.float32, jnp.bfloat16

    def dot(a, w):                                # bf16 operands, f32 accumulation
        return jnp.dot(a, w, preferred_element_type=f32)

    # ---- encoding MLP: Linear + ReLU (+Dropout p=0) + Linear, all L*TB rows ----
    xb = x_ref[...].astype(bf16)                  # already a flat (L*TB, I) slab
    e = jnp.maximum(dot(xb, enc_w1[...]) + enc_b1[...], 0.0)
    e = dot(e.astype(bf16), enc_w2[...]) + enc_b2[...]

    # ---- layer-0 input projection hoisted off the recurrence (biases merged) ----
    proj0 = dot(e.astype(bf16), w_ih0[...]) + b0[...]          # (L*TB, H) f32

    w_hh0_l = w_hh0[...]                                       # bf16 (H, H)
    w_cat = [cat_refs[2 * (l - 1)][...] for l in range(1, N_LAYERS)]      # bf16 (2H, H)
    b_cat = [cat_refs[2 * (l - 1) + 1][...] for l in range(1, N_LAYERS)]  # f32 (1, H)
    sh_w1_l, sh_b1_l = sh_w1[...], sh_b1[...]
    sh_w2_l, sh_b2_l = sh_w2[...], sh_b2[...]

    def shared_mlp(h_bf):                         # Linear + ReLU + Linear per timestep
        s = jnp.maximum(dot(h_bf, sh_w1_l) + sh_b1_l, 0.0)
        return dot(s.astype(bf16), sh_w2_l) + sh_b2_l

    # ---- multi-layer tanh RNN: skewed wavefront, fully unrolled.
    # At tick T: layer 0 does step T, layer l does step T-l; every update reads
    # only pre-tick state (h_bf), so the per-tick layer chains are independent.
    # Shared MLP + running time-max are issued right after each last-layer step
    # and overlap with the next recurrent step (no epilogue, no seq scratch).
    h_bf = [jnp.zeros((TB, H), bf16) for _ in range(N_LAYERS)]
    pooled = None
    for tick in range(L + N_LAYERS - 1):
        new = list(h_bf)
        if tick < L:                              # layer 0, step = tick
            p = proj0[tick * TB:(tick + 1) * TB]
            h0 = jnp.tanh(p) if tick == 0 else jnp.tanh(p + dot(h_bf[0], w_hh0_l))
            new[0] = h0.astype(bf16)
            if N_LAYERS == 1:
                s = shared_mlp(new[0])
                pooled = s if pooled is None else jnp.maximum(pooled, s)
        for l in range(1, N_LAYERS):              # layer l, step = tick - l
            t = tick - l
            if 0 <= t < L:
                hin = jnp.concatenate([h_bf[l - 1], h_bf[l]], axis=1)   # (TB, 2H) bf16
                hl = jnp.tanh(dot(hin, w_cat[l - 1]) + b_cat[l - 1])
                new[l] = hl.astype(bf16)
                if l == N_LAYERS - 1:
                    s = shared_mlp(new[l])
                    pooled = s if pooled is None else jnp.maximum(pooled, s)
        h_bf = new

    # ---- features MLP ----
    fb = feat_ref[...].astype(bf16)
    pf = jnp.maximum(dot(fb, f_w1[...]) + f_b1[...], 0.0)
    pf = dot(pf.astype(bf16), f_w2[...]) + f_b2[...]

    # ---- final MLP; concat eliminated by splitting its first matmul ----
    y = (dot(pooled.astype(bf16), fin_w1_h[...])
         + dot(pf.astype(bf16), fin_w1_f[...]) + fin_b1[...])
    y = jnp.maximum(y, 0.0)
    # fin_w2 / fin_b2 are zero-padded to 128 lanes -> unmasked lane-dense store.
    out_ref[...] = dot(y.astype(bf16), fin_w2[...]) + fin_b2[...]


def oligo_rnn_forward(x, features, params):
    """x: (L, B, input_size), features: (B, features_size) -> (B,)."""
    (enc_w1, enc_b1, enc_w2, enc_b2, *rest) = params
    rnn_p = rest[:4 * N_LAYERS]
    (sh_w1, sh_b1, sh_w2, sh_b2,
     f_w1, f_b1, f_w2, f_b2,
     fin_w1, fin_b1, fin_w2, fin_b2) = rest[4 * N_LAYERS:]

    L, B, I = x.shape
    F = features.shape[1]
    H = HIDDEN_SIZE
    G = pl.cdiv(B, TILE_B)          # 8-sequence groups sharded over the grid
    BP = G * TILE_B

    bf = lambda a: a.astype(jnp.bfloat16)

    # Pad batch to full sublane tiles; re-lay x so each group's (L*TILE_B, I)
    # rows are one contiguous slab (clean DMA, no in-kernel reshape).
    x_p = jnp.pad(x, ((0, 0), (0, BP - B), (0, 0)))
    x_p = x_p.reshape(L, G, TILE_B, I).transpose(1, 0, 2, 3).reshape(G * L * TILE_B, I)
    feat_p = jnp.pad(features, ((0, BP - B), (0, 0)))

    # RNN params: merge the two biases; layer 0 keeps separate (hoisted) W_ih
    # and bf16 W_hh; layers >=1 get a fused bf16 [W_ih; W_hh] (2H, H) weight.
    w_ih0, w_hh0, b_ih0, b_hh0 = rnn_p[0:4]
    rnn_args = [bf(w_ih0), bf(w_hh0), b_ih0 + b_hh0]
    for l in range(1, N_LAYERS):
        w_ih, w_hh, b_ih, b_hh = rnn_p[4 * l:4 * l + 4]
        rnn_args += [bf(jnp.concatenate([w_ih, w_hh], axis=0)), b_ih + b_hh]

    # Final MLP: split the first matmul to remove the concat; pad the (H+F, 1)
    # output projection to 128 lanes for an unmasked store (slice col 0 outside).
    fin_w2_pad = jnp.zeros((H + F, OUT_LANES), jnp.float32).at[:, :1].set(fin_w2)
    fin_b2_pad = jnp.zeros((1, OUT_LANES), jnp.float32).at[:, :1].set(fin_b2)

    args = [x_p, feat_p,
            bf(enc_w1), enc_b1, bf(enc_w2), enc_b2,
            *rnn_args,
            bf(sh_w1), sh_b1, bf(sh_w2), sh_b2,
            bf(f_w1), f_b1, bf(f_w2), f_b2,
            bf(fin_w1[:H]), bf(fin_w1[H:]), fin_b1, bf(fin_w2_pad), fin_b2_pad]

    def replicated(a):  # small parameter: full array in VMEM at every grid step
        return pl.BlockSpec(a.shape, lambda g, _n=a.ndim: (0,) * _n)

    in_specs = [
        pl.BlockSpec((L * TILE_B, I), lambda g: (g, 0)),     # x: contiguous per-group slab
        pl.BlockSpec((TILE_B, F), lambda g: (g, 0)),         # features
    ] + [replicated(a) for a in args[2:]]

    out = pl.pallas_call(
        oligo_rnn_kernel,
        grid=(G,),
        out_shape=jax.ShapeDtypeStruct((BP, OUT_LANES), jnp.float32),
        in_specs=in_specs,
        out_specs=pl.BlockSpec((TILE_B, OUT_LANES), lambda g: (g, 0)),
        compiler_params=pltpu.CompilerParams(
            dimension_semantics=("parallel",)),  # shards groups across TCs when G >= 2
    )(*args)
    return out[:B, 0]                            # .flatten() of the (B, 1) output


def init_params(key):
    keys = iter(jax.random.split(key, 32))

    def lin(in_d, out_d):
        w = jax.random.normal(next(keys), (in_d, out_d), jnp.float32) / jnp.sqrt(in_d)
        b = jax.random.normal(next(keys), (1, out_d), jnp.float32) * 0.1
        return w, b

    params = []
    # encoding MLP: Linear(I->He) + ReLU + Dropout + Linear(He->He)
    w, b = lin(INPUT_SIZE, HIDDEN_SIZE_ENCODER); params += [w, b]
    w, b = lin(HIDDEN_SIZE_ENCODER, HIDDEN_SIZE_ENCODER); params += [w, b]
    # RNN layers (w_ih, w_hh, b_ih, b_hh per layer)
    for layer in range(N_LAYERS):
        in_d = HIDDEN_SIZE_ENCODER if layer == 0 else HIDDEN_SIZE
        w_ih, b_ih = lin(in_d, HIDDEN_SIZE)
        w_hh, b_hh = lin(HIDDEN_SIZE, HIDDEN_SIZE)
        params += [w_ih, w_hh, b_ih, b_hh]
    # shared MLP: Linear(H->H) + ReLU + Dropout + Linear(H->H)
    w, b = lin(HIDDEN_SIZE, HIDDEN_SIZE); params += [w, b]
    w, b = lin(HIDDEN_SIZE, HIDDEN_SIZE); params += [w, b]
    # features MLP: Linear(F->F) + ReLU + Dropout + Linear(F->F)
    w, b = lin(FEATURES_SIZE, FEATURES_SIZE); params += [w, b]
    w, b = lin(FEATURES_SIZE, FEATURES_SIZE); params += [w, b]
    # final MLP: Linear(H+F->H+F) + ReLU + Dropout + Linear(H+F->1)
    w, b = lin(HIDDEN_SIZE + FEATURES_SIZE, HIDDEN_SIZE + FEATURES_SIZE); params += [w, b]
    w, b = lin(HIDDEN_SIZE + FEATURES_SIZE, 1); params += [w, b]
    return params


def reference_forward(x, features, params, cast_bf16=False):
    """Plain-JAX reference mirroring the PyTorch forward semantics.

    cast_bf16=True mirrors the kernel's matmul precision (bf16 operands with
    f32 accumulation on every dot, including the recurrence) for a tight
    structural check; cast_bf16=False is the pure-f32 semantic reference.
    """
    def mm(a, w):
        if cast_bf16:
            a = a.astype(jnp.bfloat16)
            w = w.astype(jnp.bfloat16)
        return jnp.dot(a, w, preferred_element_type=jnp.float32)

    (enc_w1, enc_b1, enc_w2, enc_b2, *rest) = params
    rnn_p = rest[:4 * N_LAYERS]
    (sh_w1, sh_b1, sh_w2, sh_b2,
     f_w1, f_b1, f_w2, f_b2,
     fin_w1, fin_b1, fin_w2, fin_b2) = rest[4 * N_LAYERS:]
    L, B, I = x.shape
    e = mm(jnp.maximum(mm(x.reshape(L * B, I), enc_w1) + enc_b1, 0.0), enc_w2) + enc_b2
    seq = e.reshape(L, B, -1)
    for layer in range(N_LAYERS):
        w_ih, w_hh, b_ih, b_hh = rnn_p[4 * layer:4 * layer + 4]
        h = jnp.zeros((B, HIDDEN_SIZE), jnp.float32)
        outs = []
        for t in range(L):
            h = jnp.tanh(mm(seq[t], w_ih) + b_ih + mm(h, w_hh) + b_hh)
            outs.append(h)
        seq = jnp.stack(outs, axis=0)
    s = mm(jnp.maximum(mm(seq.reshape(L * B, HIDDEN_SIZE), sh_w1) + sh_b1, 0.0),
           sh_w2) + sh_b2
    s = s.reshape(L, B, HIDDEN_SIZE)
    pooled = jnp.max(s, axis=0)
    pf = mm(jnp.maximum(mm(features, f_w1) + f_b1, 0.0), f_w2) + f_b2
    cat = jnp.concatenate([pooled, pf], axis=1)
    y = mm(jnp.maximum(mm(cat, fin_w1) + fin_b1, 0.0), fin_w2) + fin_b2
    return y[:, 0]


if __name__ == "__main__":
    key = jax.random.PRNGKey(0)
    k_x, k_f, k_p = jax.random.split(key, 3)

    # deterministic example inputs
    x = jax.random.normal(k_x, (SEQ_LEN, BATCH, INPUT_SIZE), jnp.float32)
    features = jax.random.normal(k_f, (BATCH, FEATURES_SIZE), jnp.float32)
    params = init_params(k_p)

    out = jax.block_until_ready(oligo_rnn_forward(x, features, params))
    assert out.shape == (BATCH,)

    # Tight structural check vs. a reference that mirrors the kernel's
    # bf16-operand / f32-accumulate matmul precision everywhere.
    ref_bf16 = jax.block_until_ready(reference_forward(x, features, params, cast_bf16=True))
    assert jnp.allclose(out, ref_bf16, rtol=2e-3, atol=2e-3), (out, ref_bf16)

    # Loose semantic sanity check vs. the pure-f32 reference: bf16 MXU operands
    # (now including the recurrence) relax precision relative to the f32/f64
    # PyTorch model, so the tolerance is documented as 2e-1 (see header TODO).
    ref_f32 = jax.block_until_ready(reference_forward(x, features, params, cast_bf16=False))
    assert jnp.allclose(out, ref_f32, rtol=2e-1, atol=2e-1), (out, ref_f32)

    print("KERNEL_OK")
</pallas_src>

<mosaic_0001>
module attributes {stable_mosaic.version = 11 : i64} {
  func.func @oligo_rnn_kernel(%arg0: i32, %arg1: memref<64x8xf32, #tpu.memory_space<vmem>>, %arg2: memref<8x8xf32, #tpu.memory_space<vmem>>, %arg3: memref<8x32xbf16, #tpu.memory_space<vmem>>, %arg4: memref<1x32xf32, #tpu.memory_space<vmem>>, %arg5: memref<32x32xbf16, #tpu.memory_space<vmem>>, %arg6: memref<1x32xf32, #tpu.memory_space<vmem>>, %arg7: memref<32x32xbf16, #tpu.memory_space<vmem>>, %arg8: memref<32x32xbf16, #tpu.memory_space<vmem>>, %arg9: memref<1x32xf32, #tpu.memory_space<vmem>>, %arg10: memref<64x32xbf16, #tpu.memory_space<vmem>>, %arg11: memref<1x32xf32, #tpu.memory_space<vmem>>, %arg12: memref<32x32xbf16, #tpu.memory_space<vmem>>, %arg13: memref<1x32xf32, #tpu.memory_space<vmem>>, %arg14: memref<32x32xbf16, #tpu.memory_space<vmem>>, %arg15: memref<1x32xf32, #tpu.memory_space<vmem>>, %arg16: memref<8x8xbf16, #tpu.memory_space<vmem>>, %arg17: memref<1x8xf32, #tpu.memory_space<vmem>>, %arg18: memref<8x8xbf16, #tpu.memory_space<vmem>>, %arg19: memref<1x8xf32, #tpu.memory_space<vmem>>, %arg20: memref<32x40xbf16, #tpu.memory_space<vmem>>, %arg21: memref<8x40xbf16, #tpu.memory_space<vmem>>, %arg22: memref<1x40xf32, #tpu.memory_space<vmem>>, %arg23: memref<40x128xbf16, #tpu.memory_space<vmem>>, %arg24: memref<1x128xf32, #tpu.memory_space<vmem>>, %arg25: memref<8x128xf32, #tpu.memory_space<vmem>>) attributes {dimension_semantics = [#tpu.dimension_semantics<parallel>], iteration_bounds = array<i64: 1>, scalar_prefetch = 0 : i64, scratch_operands = 0 : i64, tpu.core_type = #tpu.core_type<tc>, window_params = [{transform_indices = @transform_0, window_bounds = array<i64: 64, 8>}, {transform_indices = @transform_1, window_bounds = array<i64: 8, 8>}, {pipeline_mode = #tpu.pipeline_mode<synchronous>, transform_indices = @transform_2, window_bounds = array<i64: 8, 32>}, {pipeline_mode = #tpu.pipeline_mode<synchronous>, transform_indices = @transform_3, window_bounds = array<i64: 1, 32>}, {pipeline_mode = #tpu.pipeline_mode<synchronous>, transform_indices = @transform_4, window_bounds = array<i64: 32, 32>}, {pipeline_mode = #tpu.pipeline_mode<synchronous>, transform_indices = @transform_5, window_bounds = array<i64: 1, 32>}, {pipeline_mode = #tpu.pipeline_mode<synchronous>, transform_indices = @transform_6, window_bounds = array<i64: 32, 32>}, {pipeline_mode = #tpu.pipeline_mode<synchronous>, transform_indices = @transform_7, window_bounds = array<i64: 32, 32>}, {pipeline_mode = #tpu.pipeline_mode<synchronous>, transform_indices = @transform_8, window_bounds = array<i64: 1, 32>}, {pipeline_mode = #tpu.pipeline_mode<synchronous>, transform_indices = @transform_9, window_bounds = array<i64: 64, 32>}, {pipeline_mode = #tpu.pipeline_mode<synchronous>, transform_indices = @transform_10, window_bounds = array<i64: 1, 32>}, {pipeline_mode = #tpu.pipeline_mode<synchronous>, transform_indices = @transform_11, window_bounds = array<i64: 32, 32>}, {pipeline_mode = #tpu.pipeline_mode<synchronous>, transform_indices = @transform_12, window_bounds = array<i64: 1, 32>}, {pipeline_mode = #tpu.pipeline_mode<synchronous>, transform_indices = @transform_13, window_bounds = array<i64: 32, 32>}, {pipeline_mode = #tpu.pipeline_mode<synchronous>, transform_indices = @transform_14, window_bounds = array<i64: 1, 32>}, {pipeline_mode = #tpu.pipeline_mode<synchronous>, transform_indices = @transform_15, window_bounds = array<i64: 8, 8>}, {pipeline_mode = #tpu.pipeline_mode<synchronous>, transform_indices = @transform_16, window_bounds = array<i64: 1, 8>}, {pipeline_mode = #tpu.pipeline_mode<synchronous>, transform_indices = @transform_17, window_bounds = array<i64: 8, 8>}, {pipeline_mode = #tpu.pipeline_mode<synchronous>, transform_indices = @transform_18, window_bounds = array<i64: 1, 8>}, {pipeline_mode = #tpu.pipeline_mode<synchronous>, transform_indices = @transform_19, window_bounds = array<i64: 32, 40>}, {pipeline_mode = #tpu.pipeline_mode<synchronous>, transform_indices = @transform_20, window_bounds = array<i64: 8, 40>}, {pipeline_mode = #tpu.pipeline_mode<synchronous>, transform_indices = @transform_21, window_bounds = array<i64: 1, 40>}, {pipeline_mode = #tpu.pipeline_mode<synchronous>, transform_indices = @transform_22, window_bounds = array<i64: 40, 128>}, {pipeline_mode = #tpu.pipeline_mode<synchronous>, transform_indices = @transform_23, window_bounds = array<i64: 1, 128>}, {transform_indices = @transform_24, window_bounds = array<i64: 8, 128>}]} {
    %c0 = arith.constant 0 : index
    %c0_0 = arith.constant 0 : index
    %0 = vector.load %arg1[%c0, %c0_0] : memref<64x8xf32, #tpu.memory_space<vmem>>, vector<64x8xf32>
    %1 = arith.truncf %0 : vector<64x8xf32> to vector<64x8xbf16>
    %c0_1 = arith.constant 0 : index
    %c0_2 = arith.constant 0 : index
    %2 = vector.load %arg3[%c0_1, %c0_2] : memref<8x32xbf16, #tpu.memory_space<vmem>>, vector<8x32xbf16>
    %cst = arith.constant dense<0.000000e+00> : vector<64x32xf32>
    %3 = tpu.matmul %1, %2, %cst {dimension_numbers = #tpu.dot_dimension_numbers<[1], [0], [0], [1], [0, 0, 1, 1], [], []>} : vector<64x8xbf16>, vector<8x32xbf16>, vector<64x32xf32> -> vector<64x32xf32>
    %c0_3 = arith.constant 0 : index
    %c0_4 = arith.constant 0 : index
    %4 = vector.load %arg4[%c0_3, %c0_4] : memref<1x32xf32, #tpu.memory_space<vmem>>, vector<1x32xf32>
    %5 = vector.broadcast %4 : vector<1x32xf32> to vector<64x32xf32>
    %6 = arith.addf %3, %5 : vector<64x32xf32>
    %cst_5 = arith.constant 0.000000e+00 : f32
    %7 = vector.broadcast %cst_5 : f32 to vector<64x32xf32>
    %8 = arith.maximumf %6, %7 : vector<64x32xf32>
    %9 = arith.truncf %8 : vector<64x32xf32> to vector<64x32xbf16>
    %c0_6 = arith.constant 0 : index
    %c0_7 = arith.constant 0 : index
    %10 = vector.load %arg5[%c0_6, %c0_7] : memref<32x32xbf16, #tpu.memory_space<vmem>>, vector<32x32xbf16>
    %cst_8 = arith.constant dense<0.000000e+00> : vector<64x32xf32>
    %11 = tpu.matmul %9, %10, %cst_8 {dimension_numbers = #tpu.dot_dimension_numbers<[1], [0], [0], [1], [0, 0, 1, 1], [], []>} : vector<64x32xbf16>, vector<32x32xbf16>, vector<64x32xf32> -> vector<64x32xf32>
    %c0_9 = arith.constant 0 : index
    %c0_10 = arith.constant 0 : index
    %12 = vector.load %arg6[%c0_9, %c0_10] : memref<1x32xf32, #tpu.memory_space<vmem>>, vector<1x32xf32>
    %13 = vector.broadcast %12 : vector<1x32xf32> to vector<64x32xf32>
    %14 = arith.addf %11, %13 : vector<64x32xf32>
    %15 = arith.truncf %14 : vector<64x32xf32> to vector<64x32xbf16>
    %c0_11 = arith.constant 0 : index
    %c0_12 = arith.constant 0 : index
    %16 = vector.load %arg7[%c0_11, %c0_12] : memref<32x32xbf16, #tpu.memory_space<vmem>>, vector<32x32xbf16>
    %cst_13 = arith.constant dense<0.000000e+00> : vector<64x32xf32>
    %17 = tpu.matmul %15, %16, %cst_13 {dimension_numbers = #tpu.dot_dimension_numbers<[1], [0], [0], [1], [0, 0, 1, 1], [], []>} : vector<64x32xbf16>, vector<32x32xbf16>, vector<64x32xf32> -> vector<64x32xf32>
    %c0_14 = arith.constant 0 : index
    %c0_15 = arith.constant 0 : index
    %18 = vector.load %arg9[%c0_14, %c0_15] : memref<1x32xf32, #tpu.memory_space<vmem>>, vector<1x32xf32>
    %19 = vector.broadcast %18 : vector<1x32xf32> to vector<64x32xf32>
    %20 = arith.addf %17, %19 : vector<64x32xf32>
    %c0_16 = arith.constant 0 : index
    %c0_17 = arith.constant 0 : index
    %21 = vector.load %arg8[%c0_16, %c0_17] : memref<32x32xbf16, #tpu.memory_space<vmem>>, vector<32x32xbf16>
    %c0_18 = arith.constant 0 : index
    %c0_19 = arith.constant 0 : index
    %22 = vector.load %arg10[%c0_18, %c0_19] : memref<64x32xbf16, #tpu.memory_space<vmem>>, vector<64x32xbf16>
    %c0_20 = arith.constant 0 : index
    %c0_21 = arith.constant 0 : index
    %23 = vector.load %arg11[%c0_20, %c0_21] : memref<1x32xf32, #tpu.memory_space<vmem>>, vector<1x32xf32>
    %c0_22 = arith.constant 0 : index
    %c0_23 = arith.constant 0 : index
    %24 = vector.load %arg12[%c0_22, %c0_23] : memref<32x32xbf16, #tpu.memory_space<vmem>>, vector<32x32xbf16>
    %c0_24 = arith.constant 0 : index
    %c0_25 = arith.constant 0 : index
    %25 = vector.load %arg13[%c0_24, %c0_25] : memref<1x32xf32, #tpu.memory_space<vmem>>, vector<1x32xf32>
    %c0_26 = arith.constant 0 : index
    %c0_27 = arith.constant 0 : index
    %26 = vector.load %arg14[%c0_26, %c0_27] : memref<32x32xbf16, #tpu.memory_space<vmem>>, vector<32x32xbf16>
    %c0_28 = arith.constant 0 : index
    %c0_29 = arith.constant 0 : index
    %27 = vector.load %arg15[%c0_28, %c0_29] : memref<1x32xf32, #tpu.memory_space<vmem>>, vector<1x32xf32>
    %cst_30 = arith.constant 0.000000e+00 : bf16
    %28 = vector.broadcast %cst_30 : bf16 to vector<8x32xbf16>
    %29 = vector.extract_strided_slice %20 {offsets = [0, 0], sizes = [8, 32], strides = [1, 1]} : vector<64x32xf32> to vector<8x32xf32>
    %30 = math.tanh %29 : vector<8x32xf32>
    %31 = arith.truncf %30 : vector<8x32xf32> to vector<8x32xbf16>
    %32 = vector.extract_strided_slice %20 {offsets = [8, 0], sizes = [8, 32], strides = [1, 1]} : vector<64x32xf32> to vector<8x32xf32>
    %cst_31 = arith.constant dense<0.000000e+00> : vector<8x32xf32>
    %33 = tpu.matmul %31, %21, %cst_31 {dimension_numbers = #tpu.dot_dimension_numbers<[1], [0], [0], [1], [0, 0, 1, 1], [], []>} : vector<8x32xbf16>, vector<32x32xbf16>, vector<8x32xf32> -> vector<8x32xf32>
    %34 = arith.addf %32, %33 : vector<8x32xf32>
    %35 = math.tanh %34 : vector<8x32xf32>
    %36 = arith.truncf %35 : vector<8x32xf32> to vector<8x32xbf16>
    %37 = tpu.concatenate %31, %28 in 1 : vector<8x32xbf16>, vector<8x32xbf16> -> vector<8x64xbf16>
    %cst_32 = arith.constant dense<0.000000e+00> : vector<8x32xf32>
    %38 = tpu.matmul %37, %22, %cst_32 {dimension_numbers = #tpu.dot_dimension_numbers<[1], [0], [0], [1], [0, 0, 1, 1], [], []>} : vector<8x64xbf16>, vector<64x32xbf16>, vector<8x32xf32> -> vector<8x32xf32>
    %39 = vector.broadcast %23 : vector<1x32xf32> to vector<8x32xf32>
    %40 = arith.addf %38, %39 : vector<8x32xf32>
    %41 = math.tanh %40 : vector<8x32xf32>
    %42 = arith.truncf %41 : vector<8x32xf32> to vector<8x32xbf16>
    %cst_33 = arith.constant dense<0.000000e+00> : vector<8x32xf32>
    %43 = tpu.matmul %42, %24, %cst_33 {dimension_numbers = #tpu.dot_dimension_numbers<[1], [0], [0], [1], [0, 0, 1, 1], [], []>} : vector<8x32xbf16>, vector<32x32xbf16>, vector<8x32xf32> -> vector<8x32xf32>
    %44 = vector.broadcast %25 : vector<1x32xf32> to vector<8x32xf32>
    %45 = arith.addf %43, %44 : vector<8x32xf32>
    %cst_34 = arith.constant 0.000000e+00 : f32
    %46 = vector.broadcast %cst_34 : f32 to vector<8x32xf32>
    %47 = arith.maximumf %45, %46 : vector<8x32xf32>
    %48 = arith.truncf %47 : vector<8x32xf32> to vector<8x32xbf16>
    %cst_35 = arith.constant dense<0.000000e+00> : vector<8x32xf32>
    %49 = tpu.matmul %48, %26, %cst_35 {dimension_numbers = #tpu.dot_dimension_numbers<[1], [0], [0], [1], [0, 0, 1, 1], [], []>} : vector<8x32xbf16>, vector<32x32xbf16>, vector<8x32xf32> -> vector<8x32xf32>
    %50 = vector.broadcast %27 : vector<1x32xf32> to vector<8x32xf32>
    %51 = arith.addf %49, %50 : vector<8x32xf32>
    %52 = vector.extract_strided_slice %20 {offsets = [16, 0], sizes = [8, 32], strides = [1, 1]} : vector<64x32xf32> to vector<8x32xf32>
    %cst_36 = arith.constant dense<0.000000e+00> : vector<8x32xf32>
    %53 = tpu.matmul %36, %21, %cst_36 {dimension_numbers = #tpu.dot_dimension_numbers<[1], [0], [0], [1], [0, 0, 1, 1], [], []>} : vector<8x32xbf16>, vector<32x32xbf16>, vector<8x32xf32> -> vector<8x32xf32>
    %54 = arith.addf %52, %53 : vector<8x32xf32>
    %55 = math.tanh %54 : vector<8x32xf32>
    %56 = arith.truncf %55 : vector<8x32xf32> to vector<8x32xbf16>
    %57 = tpu.concatenate %36, %42 in 1 : vector<8x32xbf16>, vector<8x32xbf16> -> vector<8x64xbf16>
    %cst_37 = arith.constant dense<0.000000e+00> : vector<8x32xf32>
    %58 = tpu.matmul %57, %22, %cst_37 {dimension_numbers = #tpu.dot_dimension_numbers<[1], [0], [0], [1], [0, 0, 1, 1], [], []>} : vector<8x64xbf16>, vector<64x32xbf16>, vector<8x32xf32> -> vector<8x32xf32>
    %59 = vector.broadcast %23 : vector<1x32xf32> to vector<8x32xf32>
    %60 = arith.addf %58, %59 : vector<8x32xf32>
    %61 = math.tanh %60 : vector<8x32xf32>
    %62 = arith.truncf %61 : vector<8x32xf32> to vector<8x32xbf16>
    %cst_38 = arith.constant dense<0.000000e+00> : vector<8x32xf32>
    %63 = tpu.matmul %62, %24, %cst_38 {dimension_numbers = #tpu.dot_dimension_numbers<[1], [0], [0], [1], [0, 0, 1, 1], [], []>} : vector<8x32xbf16>, vector<32x32xbf16>, vector<8x32xf32> -> vector<8x32xf32>
    %64 = vector.broadcast %25 : vector<1x32xf32> to vector<8x32xf32>
    %65 = arith.addf %63, %64 : vector<8x32xf32>
    %cst_39 = arith.constant 0.000000e+00 : f32
    %66 = vector.broadcast %cst_39 : f32 to vector<8x32xf32>
    %67 = arith.maximumf %65, %66 : vector<8x32xf32>
    %68 = arith.truncf %67 : vector<8x32xf32> to vector<8x32xbf16>
    %cst_40 = arith.constant dense<0.000000e+00> : vector<8x32xf32>
    %69 = tpu.matmul %68, %26, %cst_40 {dimension_numbers = #tpu.dot_dimension_numbers<[1], [0], [0], [1], [0, 0, 1, 1], [], []>} : vector<8x32xbf16>, vector<32x32xbf16>, vector<8x32xf32> -> vector<8x32xf32>
    %70 = vector.broadcast %27 : vector<1x32xf32> to vector<8x32xf32>
    %71 = arith.addf %69, %70 : vector<8x32xf32>
    %72 = arith.maximumf %51, %71 : vector<8x32xf32>
    %73 = vector.extract_strided_slice %20 {offsets = [24, 0], sizes = [8, 32], strides = [1, 1]} : vector<64x32xf32> to vector<8x32xf32>
    %cst_41 = arith.constant dense<0.000000e+00> : vector<8x32xf32>
    %74 = tpu.matmul %56, %21, %cst_41 {dimension_numbers = #tpu.dot_dimension_numbers<[1], [0], [0], [1], [0, 0, 1, 1], [], []>} : vector<8x32xbf16>, vector<32x32xbf16>, vector<8x32xf32> -> vector<8x32xf32>
    %75 = arith.addf %73, %74 : vector<8x32xf32>
    %76 = math.tanh %75 : vector<8x32xf32>
    %77 = arith.truncf %76 : vector<8x32xf32> to vector<8x32xbf16>
    %78 = tpu.concatenate %56, %62 in 1 : vector<8x32xbf16>, vector<8x32xbf16> -> vector<8x64xbf16>
    %cst_42 = arith.constant dense<0.000000e+00> : vector<8x32xf32>
    %79 = tpu.matmul %78, %22, %cst_42 {dimension_numbers = #tpu.dot_dimension_numbers<[1], [0], [0], [1], [0, 0, 1, 1], [], []>} : vector<8x64xbf16>, vector<64x32xbf16>, vector<8x32xf32> -> vector<8x32xf32>
    %80 = vector.broadcast %23 : vector<1x32xf32> to vector<8x32xf32>
    %81 = arith.addf %79, %80 : vector<8x32xf32>
    %82 = math.tanh %81 : vector<8x32xf32>
    %83 = arith.truncf %82 : vector<8x32xf32> to vector<8x32xbf16>
    %cst_43 = arith.constant dense<0.000000e+00> : vector<8x32xf32>
    %84 = tpu.matmul %83, %24, %cst_43 {dimension_numbers = #tpu.dot_dimension_numbers<[1], [0], [0], [1], [0, 0, 1, 1], [], []>} : vector<8x32xbf16>, vector<32x32xbf16>, vector<8x32xf32> -> vector<8x32xf32>
    %85 = vector.broadcast %25 : vector<1x32xf32> to vector<8x32xf32>
    %86 = arith.addf %84, %85 : vector<8x32xf32>
    %cst_44 = arith.constant 0.000000e+00 : f32
    %87 = vector.broadcast %cst_44 : f32 to vector<8x32xf32>
    %88 = arith.maximumf %86, %87 : vector<8x32xf32>
    %89 = arith.truncf %88 : vector<8x32xf32> to vector<8x32xbf16>
    %cst_45 = arith.constant dense<0.000000e+00> : vector<8x32xf32>
    %90 = tpu.matmul %89, %26, %cst_45 {dimension_numbers = #tpu.dot_dimension_numbers<[1], [0], [0], [1], [0, 0, 1, 1], [], []>} : vector<8x32xbf16>, vector<32x32xbf16>, vector<8x32xf32> -> vector<8x32xf32>
    %91 = vector.broadcast %27 : vector<1x32xf32> to vector<8x32xf32>
    %92 = arith.addf %90, %91 : vector<8x32xf32>
    %93 = arith.maximumf %72, %92 : vector<8x32xf32>
    %94 = vector.extract_strided_slice %20 {offsets = [32, 0], sizes = [8, 32], strides = [1, 1]} : vector<64x32xf32> to vector<8x32xf32>
    %cst_46 = arith.constant dense<0.000000e+00> : vector<8x32xf32>
    %95 = tpu.matmul %77, %21, %cst_46 {dimension_numbers = #tpu.dot_dimension_numbers<[1], [0], [0], [1], [0, 0, 1, 1], [], []>} : vector<8x32xbf16>, vector<32x32xbf16>, vector<8x32xf32> -> vector<8x32xf32>
    %96 = arith.addf %94, %95 : vector<8x32xf32>
    %97 = math.tanh %96 : vector<8x32xf32>
    %98 = arith.truncf %97 : vector<8x32xf32> to vector<8x32xbf16>
    %99 = tpu.concatenate %77, %83 in 1 : vector<8x32xbf16>, vector<8x32xbf16> -> vector<8x64xbf16>
    %cst_47 = arith.constant dense<0.000000e+00> : vector<8x32xf32>
    %100 = tpu.matmul %99, %22, %cst_47 {dimension_numbers = #tpu.dot_dimension_numbers<[1], [0], [0], [1], [0, 0, 1, 1], [], []>} : vector<8x64xbf16>, vector<64x32xbf16>, vector<8x32xf32> -> vector<8x32xf32>
    %101 = vector.broadcast %23 : vector<1x32xf32> to vector<8x32xf32>
    %102 = arith.addf %100, %101 : vector<8x32xf32>
    %103 = math.tanh %102 : vector<8x32xf32>
    %104 = arith.truncf %103 : vector<8x32xf32> to vector<8x32xbf16>
    %cst_48 = arith.constant dense<0.000000e+00> : vector<8x32xf32>
    %105 = tpu.matmul %104, %24, %cst_48 {dimension_numbers = #tpu.dot_dimension_numbers<[1], [0], [0], [1], [0, 0, 1, 1], [], []>} : vector<8x32xbf16>, vector<32x32xbf16>, vector<8x32xf32> -> vector<8x32xf32>
    %106 = vector.broadcast %25 : vector<1x32xf32> to vector<8x32xf32>
    %107 = arith.addf %105, %106 : vector<8x32xf32>
    %cst_49 = arith.constant 0.000000e+00 : f32
    %108 = vector.broadcast %cst_49 : f32 to vector<8x32xf32>
    %109 = arith.maximumf %107, %108 : vector<8x32xf32>
    %110 = arith.truncf %109 : vector<8x32xf32> to vector<8x32xbf16>
    %cst_50 = arith.constant dense<0.000000e+00> : vector<8x32xf32>
    %111 = tpu.matmul %110, %26, %cst_50 {dimension_numbers = #tpu.dot_dimension_numbers<[1], [0], [0], [1], [0, 0, 1, 1], [], []>} : vector<8x32xbf16>, vector<32x32xbf16>, vector<8x32xf32> -> vector<8x32xf32>
    %112 = vector.broadcast %27 : vector<1x32xf32> to vector<8x32xf32>
    %113 = arith.addf %111, %112 : vector<8x32xf32>
    %114 = arith.maximumf %93, %113 : vector<8x32xf32>
    %115 = vector.extract_strided_slice %20 {offsets = [40, 0], sizes = [8, 32], strides = [1, 1]} : vector<64x32xf32> to vector<8x32xf32>
    %cst_51 = arith.constant dense<0.000000e+00> : vector<8x32xf32>
    %116 = tpu.matmul %98, %21, %cst_51 {dimension_numbers = #tpu.dot_dimension_numbers<[1], [0], [0], [1], [0, 0, 1, 1], [], []>} : vector<8x32xbf16>, vector<32x32xbf16>, vector<8x32xf32> -> vector<8x32xf32>
    %117 = arith.addf %115, %116 : vector<8x32xf32>
    %118 = math.tanh %117 : vector<8x32xf32>
    %119 = arith.truncf %118 : vector<8x32xf32> to vector<8x32xbf16>
    %120 = tpu.concatenate %98, %104 in 1 : vector<8x32xbf16>, vector<8x32xbf16> -> vector<8x64xbf16>
    %cst_52 = arith.constant dense<0.000000e+00> : vector<8x32xf32>
    %121 = tpu.matmul %120, %22, %cst_52 {dimension_numbers = #tpu.dot_dimension_numbers<[1], [0], [0], [1], [0, 0, 1, 1], [], []>} : vector<8x64xbf16>, vector<64x32xbf16>, vector<8x32xf32> -> vector<8x32xf32>
    %122 = vector.broadcast %23 : vector<1x32xf32> to vector<8x32xf32>
    %123 = arith.addf %121, %122 : vector<8x32xf32>
    %124 = math.tanh %123 : vector<8x32xf32>
    %125 = arith.truncf %124 : vector<8x32xf32> to vector<8x32xbf16>
    %cst_53 = arith.constant dense<0.000000e+00> : vector<8x32xf32>
    %126 = tpu.matmul %125, %24, %cst_53 {dimension_numbers = #tpu.dot_dimension_numbers<[1], [0], [0], [1], [0, 0, 1, 1], [], []>} : vector<8x32xbf16>, vector<32x32xbf16>, vector<8x32xf32> -> vector<8x32xf32>
    %127 = vector.broadcast %25 : vector<1x32xf32> to vector<8x32xf32>
    %128 = arith.addf %126, %127 : vector<8x32xf32>
    %cst_54 = arith.constant 0.000000e+00 : f32
    %129 = vector.broadcast %cst_54 : f32 to vector<8x32xf32>
    %130 = arith.maximumf %128, %129 : vector<8x32xf32>
    %131 = arith.truncf %130 : vector<8x32xf32> to vector<8x32xbf16>
    %cst_55 = arith.constant dense<0.000000e+00> : vector<8x32xf32>
    %132 = tpu.matmul %131, %26, %cst_55 {dimension_numbers = #tpu.dot_dimension_numbers<[1], [0], [0], [1], [0, 0, 1, 1], [], []>} : vector<8x32xbf16>, vector<32x32xbf16>, vector<8x32xf32> -> vector<8x32xf32>
    %133 = vector.broadcast %27 : vector<1x32xf32> to vector<8x32xf32>
    %134 = arith.addf %132, %133 : vector<8x32xf32>
    %135 = arith.maximumf %114, %134 : vector<8x32xf32>
    %136 = vector.extract_strided_slice %20 {offsets = [48, 0], sizes = [8, 32], strides = [1, 1]} : vector<64x32xf32> to vector<8x32xf32>
    %cst_56 = arith.constant dense<0.000000e+00> : vector<8x32xf32>
    %137 = tpu.matmul %119, %21, %cst_56 {dimension_numbers = #tpu.dot_dimension_numbers<[1], [0], [0], [1], [0, 0, 1, 1], [], []>} : vector<8x32xbf16>, vector<32x32xbf16>, vector<8x32xf32> -> vector<8x32xf32>
    %138 = arith.addf %136, %137 : vector<8x32xf32>
    %139 = math.tanh %138 : vector<8x32xf32>
    %140 = arith.truncf %139 : vector<8x32xf32> to vector<8x32xbf16>
    %141 = tpu.concatenate %119, %125 in 1 : vector<8x32xbf16>, vector<8x32xbf16> -> vector<8x64xbf16>
    %cst_57 = arith.constant dense<0.000000e+00> : vector<8x32xf32>
    %142 = tpu.matmul %141, %22, %cst_57 {dimension_numbers = #tpu.dot_dimension_numbers<[1], [0], [0], [1], [0, 0, 1, 1], [], []>} : vector<8x64xbf16>, vector<64x32xbf16>, vector<8x32xf32> -> vector<8x32xf32>
    %143 = vector.broadcast %23 : vector<1x32xf32> to vector<8x32xf32>
    %144 = arith.addf %142, %143 : vector<8x32xf32>
    %145 = math.tanh %144 : vector<8x32xf32>
    %146 = arith.truncf %145 : vector<8x32xf32> to vector<8x32xbf16>
    %cst_58 = arith.constant dense<0.000000e+00> : vector<8x32xf32>
    %147 = tpu.matmul %146, %24, %cst_58 {dimension_numbers = #tpu.dot_dimension_numbers<[1], [0], [0], [1], [0, 0, 1, 1], [], []>} : vector<8x32xbf16>, vector<32x32xbf16>, vector<8x32xf32> -> vector<8x32xf32>
    %148 = vector.broadcast %25 : vector<1x32xf32> to vector<8x32xf32>
    %149 = arith.addf %147, %148 : vector<8x32xf32>
    %cst_59 = arith.constant 0.000000e+00 : f32
    %150 = vector.broadcast %cst_59 : f32 to vector<8x32xf32>
    %151 = arith.maximumf %149, %150 : vector<8x32xf32>
    %152 = arith.truncf %151 : vector<8x32xf32> to vector<8x32xbf16>
    %cst_60 = arith.constant dense<0.000000e+00> : vector<8x32xf32>
    %153 = tpu.matmul %152, %26, %cst_60 {dimension_numbers = #tpu.dot_dimension_numbers<[1], [0], [0], [1], [0, 0, 1, 1], [], []>} : vector<8x32xbf16>, vector<32x32xbf16>, vector<8x32xf32> -> vector<8x32xf32>
    %154 = vector.broadcast %27 : vector<1x32xf32> to vector<8x32xf32>
    %155 = arith.addf %153, %154 : vector<8x32xf32>
    %156 = arith.maximumf %135, %155 : vector<8x32xf32>
    %157 = vector.extract_strided_slice %20 {offsets = [56, 0], sizes = [8, 32], strides = [1, 1]} : vector<64x32xf32> to vector<8x32xf32>
    %cst_61 = arith.constant dense<0.000000e+00> : vector<8x32xf32>
    %158 = tpu.matmul %140, %21, %cst_61 {dimension_numbers = #tpu.dot_dimension_numbers<[1], [0], [0], [1], [0, 0, 1, 1], [], []>} : vector<8x32xbf16>, vector<32x32xbf16>, vector<8x32xf32> -> vector<8x32xf32>
    %159 = arith.addf %157, %158 : vector<8x32xf32>
    %160 = math.tanh %159 : vector<8x32xf32>
    %161 = arith.truncf %160 : vector<8x32xf32> to vector<8x32xbf16>
    %162 = tpu.concatenate %140, %146 in 1 : vector<8x32xbf16>, vector<8x32xbf16> -> vector<8x64xbf16>
    %cst_62 = arith.constant dense<0.000000e+00> : vector<8x32xf32>
    %163 = tpu.matmul %162, %22, %cst_62 {dimension_numbers = #tpu.dot_dimension_numbers<[1], [0], [0], [1], [0, 0, 1, 1], [], []>} : vector<8x64xbf16>, vector<64x32xbf16>, vector<8x32xf32> -> vector<8x32xf32>
    %164 = vector.broadcast %23 : vector<1x32xf32> to vector<8x32xf32>
    %165 = arith.addf %163, %164 : vector<8x32xf32>
    %166 = math.tanh %165 : vector<8x32xf32>
    %167 = arith.truncf %166 : vector<8x32xf32> to vector<8x32xbf16>
    %cst_63 = arith.constant dense<0.000000e+00> : vector<8x32xf32>
    %168 = tpu.matmul %167, %24, %cst_63 {dimension_numbers = #tpu.dot_dimension_numbers<[1], [0], [0], [1], [0, 0, 1, 1], [], []>} : vector<8x32xbf16>, vector<32x32xbf16>, vector<8x32xf32> -> vector<8x32xf32>
    %169 = vector.broadcast %25 : vector<1x32xf32> to vector<8x32xf32>
    %170 = arith.addf %168, %169 : vector<8x32xf32>
    %cst_64 = arith.constant 0.000000e+00 : f32
    %171 = vector.broadcast %cst_64 : f32 to vector<8x32xf32>
    %172 = arith.maximumf %170, %171 : vector<8x32xf32>
    %173 = arith.truncf %172 : vector<8x32xf32> to vector<8x32xbf16>
    %cst_65 = arith.constant dense<0.000000e+00> : vector<8x32xf32>
    %174 = tpu.matmul %173, %26, %cst_65 {dimension_numbers = #tpu.dot_dimension_numbers<[1], [0], [0], [1], [0, 0, 1, 1], [], []>} : vector<8x32xbf16>, vector<32x32xbf16>, vector<8x32xf32> -> vector<8x32xf32>
    %175 = vector.broadcast %27 : vector<1x32xf32> to vector<8x32xf32>
    %176 = arith.addf %174, %175 : vector<8x32xf32>
    %177 = arith.maximumf %156, %176 : vector<8x32xf32>
    %178 = tpu.concatenate %161, %167 in 1 : vector<8x32xbf16>, vector<8x32xbf16> -> vector<8x64xbf16>
    %cst_66 = arith.constant dense<0.000000e+00> : vector<8x32xf32>
    %179 = tpu.matmul %178, %22, %cst_66 {dimension_numbers = #tpu.dot_dimension_numbers<[1], [0], [0], [1], [0, 0, 1, 1], [], []>} : vector<8x64xbf16>, vector<64x32xbf16>, vector<8x32xf32> -> vector<8x32xf32>
    %180 = vector.broadcast %23 : vector<1x32xf32> to vector<8x32xf32>
    %181 = arith.addf %179, %180 : vector<8x32xf32>
    %182 = math.tanh %181 : vector<8x32xf32>
    %183 = arith.truncf %182 : vector<8x32xf32> to vector<8x32xbf16>
    %cst_67 = arith.constant dense<0.000000e+00> : vector<8x32xf32>
    %184 = tpu.matmul %183, %24, %cst_67 {dimension_numbers = #tpu.dot_dimension_numbers<[1], [0], [0], [1], [0, 0, 1, 1], [], []>} : vector<8x32xbf16>, vector<32x32xbf16>, vector<8x32xf32> -> vector<8x32xf32>
    %185 = vector.broadcast %25 : vector<1x32xf32> to vector<8x32xf32>
    %186 = arith.addf %184, %185 : vector<8x32xf32>
    %cst_68 = arith.constant 0.000000e+00 : f32
    %187 = vector.broadcast %cst_68 : f32 to vector<8x32xf32>
    %188 = arith.maximumf %186, %187 : vector<8x32xf32>
    %189 = arith.truncf %188 : vector<8x32xf32> to vector<8x32xbf16>
    %cst_69 = arith.constant dense<0.000000e+00> : vector<8x32xf32>
    %190 = tpu.matmul %189, %26, %cst_69 {dimension_numbers = #tpu.dot_dimension_numbers<[1], [0], [0], [1], [0, 0, 1, 1], [], []>} : vector<8x32xbf16>, vector<32x32xbf16>, vector<8x32xf32> -> vector<8x32xf32>
    %191 = vector.broadcast %27 : vector<1x32xf32> to vector<8x32xf32>
    %192 = arith.addf %190, %191 : vector<8x32xf32>
    %193 = arith.maximumf %177, %192 : vector<8x32xf32>
    %c0_70 = arith.constant 0 : index
    %c0_71 = arith.constant 0 : index
    %194 = vector.load %arg2[%c0_70, %c0_71] : memref<8x8xf32, #tpu.memory_space<vmem>>, vector<8x8xf32>
    %195 = arith.truncf %194 : vector<8x8xf32> to vector<8x8xbf16>
    %c0_72 = arith.constant 0 : index
    %c0_73 = arith.constant 0 : index
    %196 = vector.load %arg16[%c0_72, %c0_73] : memref<8x8xbf16, #tpu.memory_space<vmem>>, vector<8x8xbf16>
    %cst_74 = arith.constant dense<0.000000e+00> : vector<8x8xf32>
    %197 = tpu.matmul %195, %196, %cst_74 {dimension_numbers = #tpu.dot_dimension_numbers<[1], [0], [0], [1], [0, 0, 1, 1], [], []>} : vector<8x8xbf16>, vector<8x8xbf16>, vector<8x8xf32> -> vector<8x8xf32>
    %c0_75 = arith.constant 0 : index
    %c0_76 = arith.constant 0 : index
    %198 = vector.load %arg17[%c0_75, %c0_76] : memref<1x8xf32, #tpu.memory_space<vmem>>, vector<1x8xf32>
    %199 = vector.broadcast %198 : vector<1x8xf32> to vector<8x8xf32>
    %200 = arith.addf %197, %199 : vector<8x8xf32>
    %cst_77 = arith.constant 0.000000e+00 : f32
    %201 = vector.broadcast %cst_77 : f32 to vector<8x8xf32>
    %202 = arith.maximumf %200, %201 : vector<8x8xf32>
    %203 = arith.truncf %202 : vector<8x8xf32> to vector<8x8xbf16>
    %c0_78 = arith.constant 0 : index
    %c0_79 = arith.constant 0 : index
    %204 = vector.load %arg18[%c0_78, %c0_79] : memref<8x8xbf16, #tpu.memory_space<vmem>>, vector<8x8xbf16>
    %cst_80 = arith.constant dense<0.000000e+00> : vector<8x8xf32>
    %205 = tpu.matmul %203, %204, %cst_80 {dimension_numbers = #tpu.dot_dimension_numbers<[1], [0], [0], [1], [0, 0, 1, 1], [], []>} : vector<8x8xbf16>, vector<8x8xbf16>, vector<8x8xf32> -> vector<8x8xf32>
    %c0_81 = arith.constant 0 : index
    %c0_82 = arith.constant 0 : index
    %206 = vector.load %arg19[%c0_81, %c0_82] : memref<1x8xf32, #tpu.memory_space<vmem>>, vector<1x8xf32>
    %207 = vector.broadcast %206 : vector<1x8xf32> to vector<8x8xf32>
    %208 = arith.addf %205, %207 : vector<8x8xf32>
    %209 = arith.truncf %193 : vector<8x32xf32> to vector<8x32xbf16>
    %c0_83 = arith.constant 0 : index
    %c0_84 = arith.constant 0 : index
    %210 = vector.load %arg20[%c0_83, %c0_84] : memref<32x40xbf16, #tpu.memory_space<vmem>>, vector<32x40xbf16>
    %cst_85 = arith.constant dense<0.000000e+00> : vector<8x40xf32>
    %211 = tpu.matmul %209, %210, %cst_85 {dimension_numbers = #tpu.dot_dimension_numbers<[1], [0], [0], [1], [0, 0, 1, 1], [], []>} : vector<8x32xbf16>, vector<32x40xbf16>, vector<8x40xf32> -> vector<8x40xf32>
    %212 = arith.truncf %208 : vector<8x8xf32> to vector<8x8xbf16>
    %c0_86 = arith.constant 0 : index
    %c0_87 = arith.constant 0 : index
    %213 = vector.load %arg21[%c0_86, %c0_87] : memref<8x40xbf16, #tpu.memory_space<vmem>>, vector<8x40xbf16>
    %cst_88 = arith.constant dense<0.000000e+00> : vector<8x40xf32>
    %214 = tpu.matmul %212, %213, %cst_88 {dimension_numbers = #tpu.dot_dimension_numbers<[1], [0], [0], [1], [0, 0, 1, 1], [], []>} : vector<8x8xbf16>, vector<8x40xbf16>, vector<8x40xf32> -> vector<8x40xf32>
    %215 = arith.addf %211, %214 : vector<8x40xf32>
    %c0_89 = arith.constant 0 : index
    %c0_90 = arith.constant 0 : index
    %216 = vector.load %arg22[%c0_89, %c0_90] : memref<1x40xf32, #tpu.memory_space<vmem>>, vector<1x40xf32>
    %217 = vector.broadcast %216 : vector<1x40xf32> to vector<8x40xf32>
    %218 = arith.addf %215, %217 : vector<8x40xf32>
    %cst_91 = arith.constant 0.000000e+00 : f32
    %219 = vector.broadcast %cst_91 : f32 to vector<8x40xf32>
    %220 = arith.maximumf %218, %219 : vector<8x40xf32>
    %221 = arith.truncf %220 : vector<8x40xf32> to vector<8x40xbf16>
    %c0_92 = arith.constant 0 : index
    %c0_93 = arith.constant 0 : index
    %222 = vector.load %arg23[%c0_92, %c0_93] : memref<40x128xbf16, #tpu.memory_space<vmem>>, vector<40x128xbf16>
    %cst_94 = arith.constant dense<0.000000e+00> : vector<8x128xf32>
    %223 = tpu.matmul %221, %222, %cst_94 {dimension_numbers = #tpu.dot_dimension_numbers<[1], [0], [0], [1], [0, 0, 1, 1], [], []>} : vector<8x40xbf16>, vector<40x128xbf16>, vector<8x128xf32> -> vector<8x128xf32>
    %c0_95 = arith.constant 0 : index
    %c0_96 = arith.constant 0 : index
    %224 = vector.load %arg24[%c0_95, %c0_96] : memref<1x128xf32, #tpu.memory_space<vmem>>, vector<1x128xf32>
    %225 = vector.broadcast %224 : vector<1x128xf32> to vector<8x128xf32>
    %226 = arith.addf %223, %225 : vector<8x128xf32>
    %c0_97 = arith.constant 0 : index
    %c0_98 = arith.constant 0 : index
    %227 = vector.load %arg25[%c0_97, %c0_98] : memref<8x128xf32, #tpu.memory_space<vmem>>, vector<8x128xf32>
    tpu.vector_store %arg25[%c0_97, %c0_98], %226 {strides = array<i32>} : memref<8x128xf32, #tpu.memory_space<vmem>>, vector<8x128xf32>,
    return
  }
  func.func @transform_0(%arg0: i32) -> (i32, i32) {
    %c0_i32 = arith.constant 0 : i32
    %c0_i32_0 = arith.constant 0 : i32
    return %arg0, %c0_i32 : i32, i32
  }
  func.func @transform_1(%arg0: i32) -> (i32, i32) {
    %c0_i32 = arith.constant 0 : i32
    %c0_i32_0 = arith.constant 0 : i32
    return %arg0, %c0_i32 : i32, i32
  }
  func.func @transform_2(%arg0: i32) -> (i32, i32) {
    %c0_i32 = arith.constant 0 : i32
    %c0_i32_0 = arith.constant 0 : i32
    %c0_i32_1 = arith.constant 0 : i32
    return %c0_i32, %c0_i32_0 : i32, i32
  }
  func.func @transform_3(%arg0: i32) -> (i32, i32) {
    %c0_i32 = arith.constant 0 : i32
    %c0_i32_0 = arith.constant 0 : i32
    %c0_i32_1 = arith.constant 0 : i32
    return %c0_i32, %c0_i32_0 : i32, i32
  }
  func.func @transform_4(%arg0: i32) -> (i32, i32) {
    %c0_i32 = arith.constant 0 : i32
    %c0_i32_0 = arith.constant 0 : i32
    %c0_i32_1 = arith.constant 0 : i32
    return %c0_i32, %c0_i32_0 : i32, i32
  }
  func.func @transform_5(%arg0: i32) -> (i32, i32) {
    %c0_i32 = arith.constant 0 : i32
    %c0_i32_0 = arith.constant 0 : i32
    %c0_i32_1 = arith.constant 0 : i32
    return %c0_i32, %c0_i32_0 : i32, i32
  }
  func.func @transform_6(%arg0: i32) -> (i32, i32) {
    %c0_i32 = arith.constant 0 : i32
    %c0_i32_0 = arith.constant 0 : i32
    %c0_i32_1 = arith.constant 0 : i32
    return %c0_i32, %c0_i32_0 : i32, i32
  }
  func.func @transform_7(%arg0: i32) -> (i32, i32) {
    %c0_i32 = arith.constant 0 : i32
    %c0_i32_0 = arith.constant 0 : i32
    %c0_i32_1 = arith.constant 0 : i32
    return %c0_i32, %c0_i32_0 : i32, i32
  }
  func.func @transform_8(%arg0: i32) -> (i32, i32) {
    %c0_i32 = arith.constant 0 : i32
    %c0_i32_0 = arith.constant 0 : i32
    %c0_i32_1 = arith.constant 0 : i32
    return %c0_i32, %c0_i32_0 : i32, i32
  }
  func.func @transform_9(%arg0: i32) -> (i32, i32) {
    %c0_i32 = arith.constant 0 : i32
    %c0_i32_0 = arith.constant 0 : i32
    %c0_i32_1 = arith.constant 0 : i32
    return %c0_i32, %c0_i32_0 : i32, i32
  }
  func.func @transform_10(%arg0: i32) -> (i32, i32) {
    %c0_i32 = arith.constant 0 : i32
    %c0_i32_0 = arith.constant 0 : i32
    %c0_i32_1 = arith.constant 0 : i32
    return %c0_i32, %c0_i32_0 : i32, i32
  }
  func.func @transform_11(%arg0: i32) -> (i32, i32) {
    %c0_i32 = arith.constant 0 : i32
    %c0_i32_0 = arith.constant 0 : i32
    %c0_i32_1 = arith.constant 0 : i32
    return %c0_i32, %c0_i32_0 : i32, i32
  }
  func.func @transform_12(%arg0: i32) -> (i32, i32) {
    %c0_i32 = arith.constant 0 : i32
    %c0_i32_0 = arith.constant 0 : i32
    %c0_i32_1 = arith.constant 0 : i32
    return %c0_i32, %c0_i32_0 : i32, i32
  }
  func.func @transform_13(%arg0: i32) -> (i32, i32) {
    %c0_i32 = arith.constant 0 : i32
    %c0_i32_0 = arith.constant 0 : i32
    %c0_i32_1 = arith.constant 0 : i32
    return %c0_i32, %c0_i32_0 : i32, i32
  }
  func.func @transform_14(%arg0: i32) -> (i32, i32) {
    %c0_i32 = arith.constant 0 : i32
    %c0_i32_0 = arith.constant 0 : i32
    %c0_i32_1 = arith.constant 0 : i32
    return %c0_i32, %c0_i32_0 : i32, i32
  }
  func.func @transform_15(%arg0: i32) -> (i32, i32) {
    %c0_i32 = arith.constant 0 : i32
    %c0_i32_0 = arith.constant 0 : i32
    %c0_i32_1 = arith.constant 0 : i32
    return %c0_i32, %c0_i32_0 : i32, i32
  }
  func.func @transform_16(%arg0: i32) -> (i32, i32) {
    %c0_i32 = arith.constant 0 : i32
    %c0_i32_0 = arith.constant 0 : i32
    %c0_i32_1 = arith.constant 0 : i32
    return %c0_i32, %c0_i32_0 : i32, i32
  }
  func.func @transform_17(%arg0: i32) -> (i32, i32) {
    %c0_i32 = arith.constant 0 : i32
    %c0_i32_0 = arith.constant 0 : i32
    %c0_i32_1 = arith.constant 0 : i32
    return %c0_i32, %c0_i32_0 : i32, i32
  }
  func.func @transform_18(%arg0: i32) -> (i32, i32) {
    %c0_i32 = arith.constant 0 : i32
    %c0_i32_0 = arith.constant 0 : i32
    %c0_i32_1 = arith.constant 0 : i32
    return %c0_i32, %c0_i32_0 : i32, i32
  }
  func.func @transform_19(%arg0: i32) -> (i32, i32) {
    %c0_i32 = arith.constant 0 : i32
    %c0_i32_0 = arith.constant 0 : i32
    %c0_i32_1 = arith.constant 0 : i32
    return %c0_i32, %c0_i32_0 : i32, i32
  }
  func.func @transform_20(%arg0: i32) -> (i32, i32) {
    %c0_i32 = arith.constant 0 : i32
    %c0_i32_0 = arith.constant 0 : i32
    %c0_i32_1 = arith.constant 0 : i32
    return %c0_i32, %c0_i32_0 : i32, i32
  }
  func.func @transform_21(%arg0: i32) -> (i32, i32) {
    %c0_i32 = arith.constant 0 : i32
    %c0_i32_0 = arith.constant 0 : i32
    %c0_i32_1 = arith.constant 0 : i32
    return %c0_i32, %c0_i32_0 : i32, i32
  }
  func.func @transform_22(%arg0: i32) -> (i32, i32) {
    %c0_i32 = arith.constant 0 : i32
    %c0_i32_0 = arith.constant 0 : i32
    %c0_i32_1 = arith.constant 0 : i32
    return %c0_i32, %c0_i32_0 : i32, i32
  }
  func.func @transform_23(%arg0: i32) -> (i32, i32) {
    %c0_i32 = arith.constant 0 : i32
    %c0_i32_0 = arith.constant 0 : i32
    %c0_i32_1 = arith.constant 0 : i32
    return %c0_i32, %c0_i32_0 : i32, i32
  }
  func.func @transform_24(%arg0: i32) -> (i32, i32) {
    %c0_i32 = arith.constant 0 : i32
    %c0_i32_0 = arith.constant 0 : i32
    return %arg0, %c0_i32 : i32, i32
  }
}

</mosaic_0001>

<llo_original>
// kernel: tpu_custom_call.1
$region0: #{tpu_custom_call.1}
  #allocation0 [shape = 'u32[]', space=smem, size = 0x4, offset = 0x4, fixed_abs, tag = 'smem constant byte address 0x4 - core index']
  #allocation1 [shape = 'u32[144,128]{1,0:T(1,128)}', space=vmem, size = 0x12000, scoped, tag = 'internal scratch']
  %s0 = inlined_call_operand.vmem [shape: f32[64,8], index: 0, kind: input, shape index: {}]
  %s1 = inlined_call_operand.hbm [shape: f32[8,8], index: 1, kind: input, shape index: {}]
  %s2 = inlined_call_operand.vmem [shape: bf16[8,32], index: 2, kind: input, shape index: {}]
  %s3 = inlined_call_operand.hbm [shape: f32[1,32], index: 3, kind: input, shape index: {}]
  %s4 = inlined_call_operand.vmem [shape: bf16[32,32], index: 4, kind: input, shape index: {}]
  %s5 = inlined_call_operand.hbm [shape: f32[1,32], index: 5, kind: input, shape index: {}]
  %s6 = inlined_call_operand.vmem [shape: bf16[32,32], index: 6, kind: input, shape index: {}]
  %s7 = inlined_call_operand.vmem [shape: bf16[32,32], index: 7, kind: input, shape index: {}]
  %s8 = inlined_call_operand.hbm [shape: f32[1,32], index: 8, kind: input, shape index: {}]
  %s9 = inlined_call_operand.vmem [shape: bf16[64,32], index: 9, kind: input, shape index: {}]
  %s10 = inlined_call_operand.hbm [shape: f32[1,32], index: 10, kind: input, shape index: {}]
  %s11 = inlined_call_operand.vmem [shape: bf16[32,32], index: 11, kind: input, shape index: {}]
  %s12 = inlined_call_operand.vmem [shape: f32[1,32], index: 12, kind: input, shape index: {}]
  %s13 = inlined_call_operand.vmem [shape: bf16[32,32], index: 13, kind: input, shape index: {}]
  %s14 = inlined_call_operand.hbm [shape: f32[1,32], index: 14, kind: input, shape index: {}]
  %s15 = inlined_call_operand.vmem [shape: bf16[8,8], index: 15, kind: input, shape index: {}]
  %s16 = inlined_call_operand.hbm [shape: f32[1,8], index: 16, kind: input, shape index: {}]
  %s17 = inlined_call_operand.vmem [shape: bf16[8,8], index: 17, kind: input, shape index: {}]
  %s18 = inlined_call_operand.vmem [shape: f32[1,8], index: 18, kind: input, shape index: {}]
  %s19 = inlined_call_operand.vmem [shape: bf16[32,40], index: 19, kind: input, shape index: {}]
  %s20 = inlined_call_operand.vmem [shape: bf16[8,40], index: 20, kind: input, shape index: {}]
  %s21 = inlined_call_operand.vmem [shape: f32[1,40], index: 21, kind: input, shape index: {}]
  %s22 = inlined_call_operand.vmem [shape: bf16[40,128], index: 22, kind: input, shape index: {}]
  %s23 = inlined_call_operand.vmem [shape: f32[1,128], index: 23, kind: input, shape index: {}]
  %s24 = inlined_call_operand.hbm [shape: f32[8,128], index: 24, kind: output, shape index: {}]
  %s25 = sld [smem:[#allocation0]]
  $region134: #{tpu_custom_call.1} parent=0
    _
  %s27 = ssub.s32 1, %s25
  %s28 = scalar_select 0, %s27, %s25
  $region1: #{tpu_custom_call.1} parent=0
    #allocation2 [shape = 'u8[4096]{0}', space=vmem, size = 0x1000, scoped, tag = 'input window, operand 1, single buffered']
    #allocation3 [shape = 's32[1]{0}', space=sflag, size = 0x4, scoped, tag = 'scoped memory for tpu_custom_call.1']
    #allocation4 [shape = 's32[1]{0}', space=sflag, size = 0x4, scoped, tag = 'scoped memory for tpu_custom_call.1']
    #allocation5 [shape = 'u8[512]{0}', space=vmem, size = 0x400, scoped, tag = 'input window, operand 3, single buffered']
    #allocation6 [shape = 's32[1]{0}', space=sflag, size = 0x4, scoped, tag = 'scoped memory for tpu_custom_call.1']
    #allocation7 [shape = 'u8[512]{0}', space=vmem, size = 0x400, scoped, tag = 'input window, operand 5, single buffered']
    #allocation8 [shape = 'u8[512]{0}', space=vmem, size = 0x400, scoped, tag = 'input window, operand 8, single buffered']
    #allocation9 [shape = 's32[1]{0}', space=sflag, size = 0x4, scoped, tag = 'scoped memory for tpu_custom_call.1']
    #allocation10 [shape = 'u8[512]{0}', space=vmem, size = 0x400, scoped, tag = 'input window, operand 10, single buffered']
    #allocation11 [shape = 'u8[512]{0}', space=vmem, size = 0x400, scoped, tag = 'input window, operand 14, single buffered']
    #allocation12 [shape = 's32[1]{0}', space=sflag, size = 0x4, scoped, tag = 'scoped memory for tpu_custom_call.1']
    #allocation13 [shape = 'u8[512]{0}', space=vmem, size = 0x400, scoped, tag = 'input window, operand 16, single buffered']
    #allocation14 [shape = 'u8[4096]{0}', space=vmem, size = 0x1000, scoped, tag = 'output window, operand 0, single buffered']
    %29 = vsyncpa [#allocation3], 0
    %30 = vsyncpa [#allocation6], 0
    %31 = vsyncpa [#allocation9], 0
    %32 = vsyncpa [#allocation12], 0
    %33 = vsyncpa [#allocation4], 0
    // Predicated region
    $region2: #{tpu_custom_call.1} parent=1 // pred_check
      _
    $region3: #{tpu_custom_call.1} parent=1 // pred_check_branch
      %35 = sbr.rel (0) target = $region5
    $region4: #{tpu_custom_call.1} parent=1 // pred_region
      _
    $region5: #{tpu_custom_call.1} parent=1 // pred_fallthru
      _
    // Predicated region
    $region6: #{tpu_custom_call.1} parent=1 // pred_check
      _
    $region7: #{tpu_custom_call.1} parent=1 // pred_check_branch
      %37 = sbr.rel (0) target = $region9
    $region8: #{tpu_custom_call.1} parent=1 // pred_region
      %s39 = ssub.s32 128, 128
      %40 = vsyncadd [#allocation3], %s39
      %s42 = sshll.u32 [#allocation2], 4
      %s43 = int_to_ptr.vmem [resolvable:$true] %s42
      %45 = dma.hbm_to_vmem [thread:$0]  %s1, 128, %s43, [#allocation3]
    $region9: #{tpu_custom_call.1} parent=1 // pred_fallthru
      _
    // Predicated region
    $region10: #{tpu_custom_call.1} parent=1 // pred_check
      _
    $region11: #{tpu_custom_call.1} parent=1 // pred_check_branch
      %47 = sbr.rel (0) target = $region13
    $region12: #{tpu_custom_call.1} parent=1 // pred_region
      _
    $region13: #{tpu_custom_call.1} parent=1 // pred_fallthru
      _
    // Predicated region
    $region14: #{tpu_custom_call.1} parent=1 // pred_check
      _
    $region15: #{tpu_custom_call.1} parent=1 // pred_check_branch
      %49 = sbr.rel (0) target = $region17
    $region16: #{tpu_custom_call.1} parent=1 // pred_region
      %s51 = ssub.s32 16, 16
      %52 = vsyncadd [#allocation6], %s51
      %s54 = sshll.u32 [#allocation5], 4
      %s55 = int_to_ptr.vmem [resolvable:$true] %s54
      %57 = dma.hbm_to_vmem [thread:$0]  %s3, 16, %s55, [#allocation6]
    $region17: #{tpu_custom_call.1} parent=1 // pred_fallthru
      _
    // Predicated region
    $region18: #{tpu_custom_call.1} parent=1 // pred_check
      _
    $region19: #{tpu_custom_call.1} parent=1 // pred_check_branch
      %59 = sbr.rel (0) target = $region21
    $region20: #{tpu_custom_call.1} parent=1 // pred_region
      _
    $region21: #{tpu_custom_call.1} parent=1 // pred_fallthru
      _
    // Predicated region
    $region22: #{tpu_custom_call.1} parent=1 // pred_check
      _
    $region23: #{tpu_custom_call.1} parent=1 // pred_check_branch
      %61 = sbr.rel (0) target = $region25
    $region24: #{tpu_custom_call.1} parent=1 // pred_region
      %s63 = ssub.s32 16, 16
      %64 = vsyncadd [#allocation6], %s63
      %s66 = sshll.u32 [#allocation7], 4
      %s67 = int_to_ptr.vmem [resolvable:$true] %s66
      %69 = dma.hbm_to_vmem [thread:$0]  %s5, 16, %s67, [#allocation6]
    $region25: #{tpu_custom_call.1} parent=1 // pred_fallthru
      _
    // Predicated region
    $region26: #{tpu_custom_call.1} parent=1 // pred_check
      _
    $region27: #{tpu_custom_call.1} parent=1 // pred_check_branch
      %71 = sbr.rel (0) target = $region29
    $region28: #{tpu_custom_call.1} parent=1 // pred_region
      _
    $region29: #{tpu_custom_call.1} parent=1 // pred_fallthru
      _
    // Predicated region
    $region30: #{tpu_custom_call.1} parent=1 // pred_check
      _
    $region31: #{tpu_custom_call.1} parent=1 // pred_check_branch
      %73 = sbr.rel (0) target = $region33
    $region32: #{tpu_custom_call.1} parent=1 // pred_region
      _
    $region33: #{tpu_custom_call.1} parent=1 // pred_fallthru
      _
    // Predicated region
    $region34: #{tpu_custom_call.1} parent=1 // pred_check
      _
    $region35: #{tpu_custom_call.1} parent=1 // pred_check_branch
      %75 = sbr.rel (0) target = $region37
    $region36: #{tpu_custom_call.1} parent=1 // pred_region
      %s77 = ssub.s32 16, 16
      %78 = vsyncadd [#allocation9], %s77
      %s80 = sshll.u32 [#allocation8], 4
      %s81 = int_to_ptr.vmem [resolvable:$true] %s80
      %83 = dma.hbm_to_vmem [thread:$0]  %s8, 16, %s81, [#allocation9]
    $region37: #{tpu_custom_call.1} parent=1 // pred_fallthru
      _
    // Predicated region
    $region38: #{tpu_custom_call.1} parent=1 // pred_check
      _
    $region39: #{tpu_custom_call.1} parent=1 // pred_check_branch
      %85 = sbr.rel (0) target = $region41
    $region40: #{tpu_custom_call.1} parent=1 // pred_region
      _
    $region41: #{tpu_custom_call.1} parent=1 // pred_fallthru
      _
    // Predicated region
    $region42: #{tpu_custom_call.1} parent=1 // pred_check
      _
    $region43: #{tpu_custom_call.1} parent=1 // pred_check_branch
      %87 = sbr.rel (0) target = $region45
    $region44: #{tpu_custom_call.1} parent=1 // pred_region
      %s89 = ssub.s32 16, 16
      %90 = vsyncadd [#allocation9], %s89
      %s92 = sshll.u32 [#allocation10], 4
      %s93 = int_to_ptr.vmem [resolvable:$true] %s92
      %95 = dma.hbm_to_vmem [thread:$0]  %s10, 16, %s93, [#allocation9]
    $region45: #{tpu_custom_call.1} parent=1 // pred_fallthru
      _
    // Predicated region
    $region46: #{tpu_custom_call.1} parent=1 // pred_check
      _
    $region47: #{tpu_custom_call.1} parent=1 // pred_check_branch
      %97 = sbr.rel (0) target = $region49
    $region48: #{tpu_custom_call.1} parent=1 // pred_region
      _
    $region49: #{tpu_custom_call.1} parent=1 // pred_fallthru
      _
    // Predicated region
    $region50: #{tpu_custom_call.1} parent=1 // pred_check
      _
    $region51: #{tpu_custom_call.1} parent=1 // pred_check_branch
      %99 = sbr.rel (0) target = $region53
    $region52: #{tpu_custom_call.1} parent=1 // pred_region
      _
    $region53: #{tpu_custom_call.1} parent=1 // pred_fallthru
      _
    // Predicated region
    $region54: #{tpu_custom_call.1} parent=1 // pred_check
      _
    $region55: #{tpu_custom_call.1} parent=1 // pred_check_branch
      %101 = sbr.rel (0) target = $region57
    $region56: #{tpu_custom_call.1} parent=1 // pred_region
      _
    $region57: #{tpu_custom_call.1} parent=1 // pred_fallthru
      _
    // Predicated region
    $region58: #{tpu_custom_call.1} parent=1 // pred_check
      _
    $region59: #{tpu_custom_call.1} parent=1 // pred_check_branch
      %103 = sbr.rel (0) target = $region61
    $region60: #{tpu_custom_call.1} parent=1 // pred_region
      %s105 = ssub.s32 16, 16
      %106 = vsyncadd [#allocation12], %s105
      %s108 = sshll.u32 [#allocation11], 4
      %s109 = int_to_ptr.vmem [resolvable:$true] %s108
      %111 = dma.hbm_to_vmem [thread:$0]  %s14, 16, %s109, [#allocation12]
    $region61: #{tpu_custom_call.1} parent=1 // pred_fallthru
      _
    // Predicated region
    $region62: #{tpu_custom_call.1} parent=1 // pred_check
      _
    $region63: #{tpu_custom_call.1} parent=1 // pred_check_branch
      %113 = sbr.rel (0) target = $region65
    $region64: #{tpu_custom_call.1} parent=1 // pred_region
      _
    $region65: #{tpu_custom_call.1} parent=1 // pred_fallthru
      _
    // Predicated region
    $region66: #{tpu_custom_call.1} parent=1 // pred_check
      _
    $region67: #{tpu_custom_call.1} parent=1 // pred_check_branch
      %115 = sbr.rel (0) target = $region69
    $region68: #{tpu_custom_call.1} parent=1 // pred_region
      %s117 = ssub.s32 16, 16
      %118 = vsyncadd [#allocation12], %s117
      %s120 = sshll.u32 [#allocation13], 4
      %s121 = int_to_ptr.vmem [resolvable:$true] %s120
      %123 = dma.hbm_to_vmem [thread:$0]  %s16, 16, %s121, [#allocation12]
    $region69: #{tpu_custom_call.1} parent=1 // pred_fallthru
      _
    // Predicated region
    $region70: #{tpu_custom_call.1} parent=1 // pred_check
      _
    $region71: #{tpu_custom_call.1} parent=1 // pred_check_branch
      %125 = sbr.rel (0) target = $region73
    $region72: #{tpu_custom_call.1} parent=1 // pred_region
      _
    $region73: #{tpu_custom_call.1} parent=1 // pred_fallthru
      _
    // Predicated region
    $region74: #{tpu_custom_call.1} parent=1 // pred_check
      _
    $region75: #{tpu_custom_call.1} parent=1 // pred_check_branch
      %127 = sbr.rel (0) target = $region77
    $region76: #{tpu_custom_call.1} parent=1 // pred_region
      _
    $region77: #{tpu_custom_call.1} parent=1 // pred_fallthru
      _
    // Predicated region
    $region78: #{tpu_custom_call.1} parent=1 // pred_check
      _
    $region79: #{tpu_custom_call.1} parent=1 // pred_check_branch
      %129 = sbr.rel (0) target = $region81
    $region80: #{tpu_custom_call.1} parent=1 // pred_region
      _
    $region81: #{tpu_custom_call.1} parent=1 // pred_fallthru
      _
    // Predicated region
    $region82: #{tpu_custom_call.1} parent=1 // pred_check
      _
    $region83: #{tpu_custom_call.1} parent=1 // pred_check_branch
      %131 = sbr.rel (0) target = $region85
    $region84: #{tpu_custom_call.1} parent=1 // pred_region
      _
    $region85: #{tpu_custom_call.1} parent=1 // pred_fallthru
      _
    // Predicated region
    $region86: #{tpu_custom_call.1} parent=1 // pred_check
      _
    $region87: #{tpu_custom_call.1} parent=1 // pred_check_branch
      %133 = sbr.rel (0) target = $region89
    $region88: #{tpu_custom_call.1} parent=1 // pred_region
      _
    $region89: #{tpu_custom_call.1} parent=1 // pred_fallthru
      _
    // Predicated region
    $region90: #{tpu_custom_call.1} parent=1 // pred_check
      _
    $region91: #{tpu_custom_call.1} parent=1 // pred_check_branch
      %135 = sbr.rel (0) target = $region93
    $region92: #{tpu_custom_call.1} parent=1 // pred_region
      _
    $region93: #{tpu_custom_call.1} parent=1 // pred_fallthru
      _
    // Predicated region
    $region94: #{tpu_custom_call.1} parent=1 // pred_check
      _
    $region95: #{tpu_custom_call.1} parent=1 // pred_check_branch
      %137 = sbr.rel (0) target = $region97
    $region96: #{tpu_custom_call.1} parent=1 // pred_region
      _
    $region97: #{tpu_custom_call.1} parent=1 // pred_fallthru
      _
    // Predicated region
    $region98: #{tpu_custom_call.1} parent=1 // pred_check
      _
    $region99: #{tpu_custom_call.1} parent=1 // pred_check_branch
      %139 = sbr.rel (0) target = $region101
    $region100: #{tpu_custom_call.1} parent=1 // pred_region
      %140 = dma.done [#allocation3], 128
    $region101: #{tpu_custom_call.1} parent=1 // pred_fallthru
      _
    // Predicated region
    $region102: #{tpu_custom_call.1} parent=1 // pred_check
      _
    $region103: #{tpu_custom_call.1} parent=1 // pred_check_branch
      %142 = sbr.rel (0) target = $region105
    $region104: #{tpu_custom_call.1} parent=1 // pred_region
      %143 = dma.done [#allocation6], 16
    $region105: #{tpu_custom_call.1} parent=1 // pred_fallthru
      _
    // Predicated region
    $region106: #{tpu_custom_call.1} parent=1 // pred_check
      _
    $region107: #{tpu_custom_call.1} parent=1 // pred_check_branch
      %145 = sbr.rel (0) target = $region109
    $region108: #{tpu_custom_call.1} parent=1 // pred_region
      %146 = dma.done [#allocation6], 16
    $region109: #{tpu_custom_call.1} parent=1 // pred_fallthru
      _
    // Predicated region
    $region110: #{tpu_custom_call.1} parent=1 // pred_check
      _
    $region111: #{tpu_custom_call.1} parent=1 // pred_check_branch
      %148 = sbr.rel (0) target = $region113
    $region112: #{tpu_custom_call.1} parent=1 // pred_region
      %149 = dma.done [#allocation9], 16
    $region113: #{tpu_custom_call.1} parent=1 // pred_fallthru
      _
    // Predicated region
    $region114: #{tpu_custom_call.1} parent=1 // pred_check
      _
    $region115: #{tpu_custom_call.1} parent=1 // pred_check_branch
      %151 = sbr.rel (0) target = $region117
    $region116: #{tpu_custom_call.1} parent=1 // pred_region
      %152 = dma.done [#allocation9], 16
    $region117: #{tpu_custom_call.1} parent=1 // pred_fallthru
      _
    // Predicated region
    $region118: #{tpu_custom_call.1} parent=1 // pred_check
      _
    $region119: #{tpu_custom_call.1} parent=1 // pred_check_branch
      %154 = sbr.rel (0) target = $region121
    $region120: #{tpu_custom_call.1} parent=1 // pred_region
      %155 = dma.done [#allocation12], 16
    $region121: #{tpu_custom_call.1} parent=1 // pred_fallthru
      _
    // Predicated region
    $region122: #{tpu_custom_call.1} parent=1 // pred_check
      _
    $region123: #{tpu_custom_call.1} parent=1 // pred_check_branch
      %157 = sbr.rel (0) target = $region125
    $region124: #{tpu_custom_call.1} parent=1 // pred_region
      %158 = dma.done [#allocation12], 16
    $region125: #{tpu_custom_call.1} parent=1 // pred_fallthru
      _
    %v160 = vld [vmem:[%s0] sm:$0xff]
    %v161 = vld [vmem:[%s0 + $0x8] sm:$0xff]
    %v162 = vld [vmem:[%s0 + $0x10] sm:$0xff]
    %v163 = vld [vmem:[%s0 + $0x18] sm:$0xff]
    %v164 = vld [vmem:[%s0 + $0x20] sm:$0xff]
    %v165 = vld [vmem:[%s0 + $0x28] sm:$0xff]
    %v166 = vld [vmem:[%s0 + $0x30] sm:$0xff]
    %v167 = vld [vmem:[%s0 + $0x38] sm:$0xff]
    %v168 = vpack.c.bf16 %v161, %v160
    %v169 = vpack.c.bf16 %v163, %v162
    %v170 = vpack.c.bf16 %v165, %v164
    %v171 = vpack.c.bf16 %v167, %v166
    %v172 = vld [vmem:[%s2] sm:$0xf]
    %v173 = vld [vmem:[#allocation5] sm:$0x1]
    %v175 = vlaneseq
    %v176 = vshrl.u32 %v175, 7
    %v177 = vsub.s32 0, %v176
    %v178 = vrot.slane %v173, %v177
    %vm180 = vcmask 64512
    %v182 = vsel %vm180, %v168, 0
    %v185 = vsel %vm180, %v169, 0
    %v188 = vsel %vm180, %v170, 0
    %v191 = vsel %vm180, %v171, 0
    %vm193 = vcmask 1043456
    %v195 = vsel %vm193, %v172, 0
    %197 = vmatprep.subr.bf16.mxu0 0
    %198 = vmatpush1.bf16.msra.mxu0 0
    %199 = vmatprep.subr.bf16.mxu0 0
    %200 = vmatpush1.bf16.msra.mxu0 0
    %201 = vmatprep.subr.bf16.mxu0 0
    %202 = vmatpush1.bf16.msra.mxu0 0
    %203 = vmatprep.subr.bf16.mxu0 0
    %204 = vmatpush1.bf16.msra.mxu0 0
    %205 = vmatprep.subr.bf16.mxu0 0
    %206 = vmatpush1.bf16.msra.mxu0 0
    %207 = vmatprep.subr.bf16.mxu0 0
    %208 = vmatpush1.bf16.msra.mxu0 0
    %209 = vmatprep.subr.bf16.mxu0 0
    %210 = vmatpush1.bf16.msra.mxu0 0
    %211 = vmatprep.subr.bf16.mxu0 0
    %212 = vmatpush1.bf16.msra.mxu0 %v195
    %213 = vmatprep.subr.bf16.mxu0 0
    %214 = vmatpush2.bf16.msra.mxu0 0
    %215 = vmatprep.subr.bf16.mxu0 0
    %216 = vmatpush2.bf16.msra.mxu0 0
    %217 = vmatprep.subr.bf16.mxu0 0
    %218 = vmatpush2.bf16.msra.mxu0 0
    %219 = vmatprep.subr.bf16.mxu0 0
    %220 = vmatpush2.bf16.msra.mxu0 0
    %221 = vmatprep.subr.bf16.mxu0 0
    %222 = vmatpush2.bf16.msra.mxu0 0
    %223 = vmatprep.subr.bf16.mxu0 0
    %224 = vmatpush2.bf16.msra.mxu0 0
    %225 = vmatprep.subr.bf16.mxu0 0
    %226 = vmatpush2.bf16.msra.mxu0 0
    %227 = vmatprep.subr.bf16.mxu0 0
    %228 = vmatpush2.bf16.msra.mxu0 0
    %229 = vmatprep.mubr.bf16.mxu0 0
    %230 = vmatmul.mubr.bf16.gmra.mxu0 %v182
    %v231 = vpop.f32.mrf.mxu0
    %v232 = vadd.f32 %v178, %v231
    %v233 = vpop.f32.mrf.mxu0
    %v234 = vpop.f32.mrf.mxu0
    %v235 = vadd.f32 %v178, %v234
    %v236 = vpop.f32.mrf.mxu0
    %237 = vmatprep.mubr.bf16.mxu0 0
    %238 = vmatmul.mubr.bf16.gmra.mxu0 %v185
    %v239 = vpop.f32.mrf.mxu0
    %v240 = vadd.f32 %v178, %v239
    %v241 = vpop.f32.mrf.mxu0
    %v242 = vpop.f32.mrf.mxu0
    %v243 = vadd.f32 %v178, %v242
    %v244 = vpop.f32.mrf.mxu0
    %245 = vmatprep.mubr.bf16.mxu0 0
    %246 = vmatmul.mubr.bf16.gmra.mxu0 %v188
    %v247 = vpop.f32.mrf.mxu0
    %v248 = vadd.f32 %v178, %v247
    %v249 = vpop.f32.mrf.mxu0
    %v250 = vpop.f32.mrf.mxu0
    %v251 = vadd.f32 %v178, %v250
    %v252 = vpop.f32.mrf.mxu0
    %253 = vmatprep.mubr.bf16.mxu0 0
    %254 = vmatmul.mubr.bf16.gmra.mxu0 %v191
    %v255 = vpop.f32.mrf.mxu0
    %v256 = vadd.f32 %v178, %v255
    %v257 = vpop.f32.mrf.mxu0
    %v258 = vpop.f32.mrf.mxu0
    %v259 = vadd.f32 %v178, %v258
    %v260 = vpop.f32.mrf.mxu0
    %261 = vdwg.mxu0
    %v262 = vmax.f32 %v232, 0.0
    %v263 = vmax.f32 %v235, 0.0
    %v264 = vmax.f32 %v240, 0.0
    %v265 = vmax.f32 %v243, 0.0
    %v266 = vmax.f32 %v248, 0.0
    %v267 = vmax.f32 %v251, 0.0
    %v268 = vmax.f32 %v256, 0.0
    %v269 = vmax.f32 %v259, 0.0
    %v270 = vpack.c.bf16 %v263, %v262
    %v271 = vpack.c.bf16 %v265, %v264
    %v272 = vpack.c.bf16 %v267, %v266
    %v273 = vpack.c.bf16 %v269, %v268
    %v274 = vld [vmem:[%s4] sm:$0xf]
    %v275 = vld [vmem:[%s4 + $0x4] sm:$0xf]
    %v276 = vld [vmem:[%s4 + $0x8] sm:$0xf]
    %v277 = vld [vmem:[%s4 + $0xc] sm:$0xf]
    %v278 = vld [vmem:[#allocation7] sm:$0x1]
    %v280 = vlaneseq
    %v281 = vshrl.u32 %v280, 7
    %v282 = vsub.s32 0, %v281
    %v283 = vrot.slane %v278, %v282
    %v289 = vunpack.c.l.b16 %v274
    %v290 = vunpack.c.l.b16 %v275
    %v291 = vunpack.c.l.b16 %v276
    %v292 = vunpack.c.l.b16 %v277
    %v293 = vpack.c.b16 %v290, %v289
    %v294 = vpack.c.b16 %v292, %v291
    %vm297 = vcmask 261120
    %v299 = vsel %vm297, %v270, 0
    %v302 = vsel %vm297, %v271, 0
    %v305 = vsel %vm297, %v272, 0
    %v308 = vsel %vm297, %v273, 0
    %310 = vmatprep.subr.bf16.mxu0 0
    %311 = vmatpush1.bf16.msra.mxu0 0
    %312 = vmatprep.subr.bf16.mxu0 0
    %313 = vmatpush1.bf16.msra.mxu0 0
    %314 = vmatprep.subr.bf16.mxu0 0
    %315 = vmatpush1.bf16.msra.mxu0 0
    %316 = vmatprep.subr.bf16.mxu0 0
    %317 = vmatpush1.bf16.msra.mxu0 0
    %318 = vmatprep.subr.bf16.mxu0 0
    %319 = vmatpush1.bf16.msra.mxu0 0
    %320 = vmatprep.subr.bf16.mxu0 0
    %321 = vmatpush1.bf16.msra.mxu0 0
    %322 = vmatprep.subr.bf16.mxu0 0
    %323 = vmatpush1.bf16.msra.mxu0 %v294
    %324 = vmatprep.subr.bf16.mxu0 0
    %325 = vmatpush1.bf16.msra.mxu0 %v293
    %326 = vmatprep.subr.bf16.mxu0 0
    %327 = vmatpush2.bf16.msra.mxu0 0
    %328 = vmatprep.subr.bf16.mxu0 0
    %329 = vmatpush2.bf16.msra.mxu0 0
    %330 = vmatprep.subr.bf16.mxu0 0
    %331 = vmatpush2.bf16.msra.mxu0 0
    %332 = vmatprep.subr.bf16.mxu0 0
    %333 = vmatpush2.bf16.msra.mxu0 0
    %334 = vmatprep.subr.bf16.mxu0 0
    %335 = vmatpush2.bf16.msra.mxu0 0
    %336 = vmatprep.subr.bf16.mxu0 0
    %337 = vmatpush2.bf16.msra.mxu0 0
    %338 = vmatprep.subr.bf16.mxu0 0
    %339 = vmatpush2.bf16.msra.mxu0 0
    %340 = vmatprep.subr.bf16.mxu0 0
    %341 = vmatpush2.bf16.msra.mxu0 0
    %342 = vmatprep.mubr.bf16.mxu0 0
    %343 = vmatmul.mubr.bf16.gmra.mxu0 %v299
    %v344 = vpop.f32.mrf.mxu0
    %v345 = vadd.f32 %v283, %v344
    %v346 = vpop.f32.mrf.mxu0
    %v347 = vpop.f32.mrf.mxu0
    %v348 = vadd.f32 %v283, %v347
    %v349 = vpop.f32.mrf.mxu0
    %350 = vmatprep.mubr.bf16.mxu0 0
    %351 = vmatmul.mubr.bf16.gmra.mxu0 %v302
    %v352 = vpop.f32.mrf.mxu0
    %v353 = vadd.f32 %v283, %v352
    %v354 = vpop.f32.mrf.mxu0
    %v355 = vpop.f32.mrf.mxu0
    %v356 = vadd.f32 %v283, %v355
    %v357 = vpop.f32.mrf.mxu0
    %358 = vmatprep.mubr.bf16.mxu0 0
    %359 = vmatmul.mubr.bf16.gmra.mxu0 %v305
    %v360 = vpop.f32.mrf.mxu0
    %v361 = vadd.f32 %v283, %v360
    %v362 = vpop.f32.mrf.mxu0
    %v363 = vpop.f32.mrf.mxu0
    %v364 = vadd.f32 %v283, %v363
    %v365 = vpop.f32.mrf.mxu0
    %366 = vmatprep.mubr.bf16.mxu0 0
    %367 = vmatmul.mubr.bf16.gmra.mxu0 %v308
    %v368 = vpop.f32.mrf.mxu0
    %v369 = vadd.f32 %v283, %v368
    %v370 = vpop.f32.mrf.mxu0
    %v371 = vpop.f32.mrf.mxu0
    %v372 = vadd.f32 %v283, %v371
    %v373 = vpop.f32.mrf.mxu0
    %374 = vdwg.mxu0
    %v375 = vpack.c.bf16 %v348, %v345
    %v376 = vpack.c.bf16 %v356, %v353
    %v377 = vpack.c.bf16 %v364, %v361
    %v378 = vpack.c.bf16 %v372, %v369
    %v379 = vld [vmem:[%s6] sm:$0xf]
    %v380 = vld [vmem:[%s6 + $0x4] sm:$0xf]
    %v381 = vld [vmem:[%s6 + $0x8] sm:$0xf]
    %v382 = vld [vmem:[%s6 + $0xc] sm:$0xf]
    %v383 = vld [vmem:[#allocation8] sm:$0x1]
    %v385 = vlaneseq
    %v386 = vshrl.u32 %v385, 7
    %v387 = vsub.s32 0, %v386
    %v388 = vrot.slane %v383, %v387
    %v394 = vunpack.c.l.b16 %v379
    %v395 = vunpack.c.l.b16 %v380
    %v396 = vunpack.c.l.b16 %v381
    %v397 = vunpack.c.l.b16 %v382
    %v398 = vpack.c.b16 %v395, %v394
    %v399 = vpack.c.b16 %v397, %v396
    %v403 = vsel %vm297, %v375, 0
    %v406 = vsel %vm297, %v376, 0
    %v409 = vsel %vm297, %v377, 0
    %v412 = vsel %vm297, %v378, 0
    %414 = vmatprep.subr.bf16.mxu0 0
    %415 = vmatpush1.bf16.msra.mxu0 0
    %416 = vmatprep.subr.bf16.mxu0 0
    %417 = vmatpush1.bf16.msra.mxu0 0
    %418 = vmatprep.subr.bf16.mxu0 0
    %419 = vmatpush1.bf16.msra.mxu0 0
    %420 = vmatprep.subr.bf16.mxu0 0
    %421 = vmatpush1.bf16.msra.mxu0 0
    %422 = vmatprep.subr.bf16.mxu0 0
    %423 = vmatpush1.bf16.msra.mxu0 0
    %424 = vmatprep.subr.bf16.mxu0 0
    %425 = vmatpush1.bf16.msra.mxu0 0
    %426 = vmatprep.subr.bf16.mxu0 0
    %427 = vmatpush1.bf16.msra.mxu0 %v399
    %428 = vmatprep.subr.bf16.mxu0 0
    %429 = vmatpush1.bf16.msra.mxu0 %v398
    %430 = vmatprep.subr.bf16.mxu0 0
    %431 = vmatpush2.bf16.msra.mxu0 0
    %432 = vmatprep.subr.bf16.mxu0 0
    %433 = vmatpush2.bf16.msra.mxu0 0
    %434 = vmatprep.subr.bf16.mxu0 0
    %435 = vmatpush2.bf16.msra.mxu0 0
    %436 = vmatprep.subr.bf16.mxu0 0
    %437 = vmatpush2.bf16.msra.mxu0 0
    %438 = vmatprep.subr.bf16.mxu0 0
    %439 = vmatpush2.bf16.msra.mxu0 0
    %440 = vmatprep.subr.bf16.mxu0 0
    %441 = vmatpush2.bf16.msra.mxu0 0
    %442 = vmatprep.subr.bf16.mxu0 0
    %443 = vmatpush2.bf16.msra.mxu0 0
    %444 = vmatprep.subr.bf16.mxu0 0
    %445 = vmatpush2.bf16.msra.mxu0 0
    %446 = vmatprep.mubr.bf16.mxu0 0
    %447 = vmatmul.mubr.bf16.gmra.mxu0 %v403
    %v448 = vpop.f32.mrf.mxu0
    %v449 = vadd.f32 %v388, %v448
    %v450 = vpop.f32.mrf.mxu0
    %v451 = vpop.f32.mrf.mxu0
    %v452 = vadd.f32 %v388, %v451
    %v453 = vpop.f32.mrf.mxu0
    %454 = vmatprep.mubr.bf16.mxu0 0
    %455 = vmatmul.mubr.bf16.gmra.mxu0 %v406
    %v456 = vpop.f32.mrf.mxu0
    %v457 = vadd.f32 %v388, %v456
    %v458 = vpop.f32.mrf.mxu0
    %v459 = vpop.f32.mrf.mxu0
    %v460 = vadd.f32 %v388, %v459
    %v461 = vpop.f32.mrf.mxu0
    %462 = vmatprep.mubr.bf16.mxu0 0
    %463 = vmatmul.mubr.bf16.gmra.mxu0 %v409
    %v464 = vpop.f32.mrf.mxu0
    %v465 = vadd.f32 %v388, %v464
    %v466 = vpop.f32.mrf.mxu0
    %v467 = vpop.f32.mrf.mxu0
    %v468 = vadd.f32 %v388, %v467
    %v469 = vpop.f32.mrf.mxu0
    %470 = vmatprep.mubr.bf16.mxu0 0
    %471 = vmatmul.mubr.bf16.gmra.mxu0 %v412
    %v472 = vpop.f32.mrf.mxu0
    %v473 = vadd.f32 %v388, %v472
    %v474 = vpop.f32.mrf.mxu0
    %v475 = vpop.f32.mrf.mxu0
    %v476 = vadd.f32 %v388, %v475
    %v477 = vpop.f32.mrf.mxu0
    %478 = vdwg.mxu0
    %v479 = vld [vmem:[%s7] sm:$0xf]
    %v480 = vld [vmem:[%s7 + $0x4] sm:$0xf]
    %v481 = vld [vmem:[%s7 + $0x8] sm:$0xf]
    %v482 = vld [vmem:[%s7 + $0xc] sm:$0xf]
    %v483 = vld [vmem:[%s9] sm:$0xf]
    %v484 = vld [vmem:[%s9 + $0x4] sm:$0xf]
    %v485 = vld [vmem:[%s9 + $0x8] sm:$0xf]
    %v486 = vld [vmem:[%s9 + $0xc] sm:$0xf]
    %v487 = vld [vmem:[%s9 + $0x10] sm:$0xf]
    %v488 = vld [vmem:[%s9 + $0x14] sm:$0xf]
    %v489 = vld [vmem:[%s9 + $0x18] sm:$0xf]
    %v490 = vld [vmem:[%s9 + $0x1c] sm:$0xf]
    %v491 = vld [vmem:[#allocation10] sm:$0x1]
    %v492 = vld [vmem:[%s11] sm:$0xf]
    %v493 = vld [vmem:[%s11 + $0x4] sm:$0xf]
    %v494 = vld [vmem:[%s11 + $0x8] sm:$0xf]
    %v495 = vld [vmem:[%s11 + $0xc] sm:$0xf]
    %v496 = vld [vmem:[%s12] sm:$0x1]
    %v497 = vld [vmem:[%s13] sm:$0xf]
    %v498 = vld [vmem:[%s13 + $0x4] sm:$0xf]
    %v499 = vld [vmem:[%s13 + $0x8] sm:$0xf]
    %v500 = vld [vmem:[%s13 + $0xc] sm:$0xf]
    %v501 = vld [vmem:[#allocation11] sm:$0x1]
    %v502 = vtanh.pop %v449
    %v503 = vpack.c.bf16 %v502, %v502
    %v508 = vunpack.c.l.b16 %v479
    %v509 = vunpack.c.l.b16 %v480
    %v510 = vunpack.c.l.b16 %v481
    %v511 = vunpack.c.l.b16 %v482
    %v512 = vpack.c.b16 %v509, %v508
    %v513 = vpack.c.b16 %v511, %v510
    %v517 = vsel %vm297, %v503, 0
    %519 = vmatprep.subr.bf16.mxu0 0
    %520 = vmatpush1.bf16.msra.mxu0 0
    %521 = vmatprep.subr.bf16.mxu0 0
    %522 = vmatpush1.bf16.msra.mxu0 0
    %523 = vmatprep.subr.bf16.mxu0 0
    %524 = vmatpush1.bf16.msra.mxu0 0
    %525 = vmatprep.subr.bf16.mxu0 0
    %526 = vmatpush1.bf16.msra.mxu0 0
    %527 = vmatprep.subr.bf16.mxu0 0
    %528 = vmatpush1.bf16.msra.mxu0 0
    %529 = vmatprep.subr.bf16.mxu0 0
    %530 = vmatpush1.bf16.msra.mxu0 0
    %531 = vmatprep.subr.bf16.mxu0 0
    %532 = vmatpush1.bf16.msra.mxu0 %v513
    %533 = vmatprep.subr.bf16.mxu0 0
    %534 = vmatpush1.bf16.msra.mxu0 %v512
    %535 = vmatprep.subr.bf16.mxu0 0
    %536 = vmatpush2.bf16.msra.mxu0 0
    %537 = vmatprep.subr.bf16.mxu0 0
    %538 = vmatpush2.bf16.msra.mxu0 0
    %539 = vmatprep.subr.bf16.mxu0 0
    %540 = vmatpush2.bf16.msra.mxu0 0
    %541 = vmatprep.subr.bf16.mxu0 0
    %542 = vmatpush2.bf16.msra.mxu0 0
    %543 = vmatprep.subr.bf16.mxu0 0
    %544 = vmatpush2.bf16.msra.mxu0 0
    %545 = vmatprep.subr.bf16.mxu0 0
    %546 = vmatpush2.bf16.msra.mxu0 0
    %547 = vmatprep.subr.bf16.mxu0 0
    %548 = vmatpush2.bf16.msra.mxu0 0
    %549 = vmatprep.subr.bf16.mxu0 0
    %550 = vmatpush2.bf16.msra.mxu0 0
    %551 = vmatprep.mubr.bf16.mxu0 0
    %552 = vmatmul.mubr.bf16.gmra.mxu0 %v517
    %v553 = vpop.f32.mrf.mxu0
    %v554 = vadd.f32 0.0, %v553
    %v555 = vpop.f32.mrf.mxu0
    %v556 = vpop.f32.mrf.mxu0
    %v557 = vpop.f32.mrf.mxu0
    %558 = vdwg.mxu0
    %v559 = vadd.f32 %v452, %v554
    %v560 = vtanh.pop %v559
    %v561 = vpack.c.bf16 %v560, %v560
    %v563 = vsel %vm297, %v503, 0
    %v565 = vlaneseq
    %v566 = vshrl.u32 %v565, 7
    %v567 = vsub.s32 0, %v566
    %v568 = vrot.slane %v491, %v567
    %v578 = vunpack.c.l.b16 %v483
    %v579 = vunpack.c.l.b16 %v484
    %v580 = vunpack.c.l.b16 %v485
    %v581 = vunpack.c.l.b16 %v486
    %v582 = vunpack.c.l.b16 %v487
    %v583 = vunpack.c.l.b16 %v488
    %v584 = vunpack.c.l.b16 %v489
    %v585 = vunpack.c.l.b16 %v490
    %v586 = vpack.c.b16 %v579, %v578
    %v587 = vpack.c.b16 %v581, %v580
    %v588 = vpack.c.b16 %v583, %v582
    %v589 = vpack.c.b16 %v585, %v584
    %vm594 = vcmask 523264
    %v595 = vsel %vm594, %v563, 0
    %597 = vmatprep.subr.bf16.mxu0 0
    %598 = vmatpush1.bf16.msra.mxu0 0
    %599 = vmatprep.subr.bf16.mxu0 0
    %600 = vmatpush1.bf16.msra.mxu0 0
    %601 = vmatprep.subr.bf16.mxu0 0
    %602 = vmatpush1.bf16.msra.mxu0 0
    %603 = vmatprep.subr.bf16.mxu0 0
    %604 = vmatpush1.bf16.msra.mxu0 0
    %605 = vmatprep.subr.bf16.mxu0 0
    %606 = vmatpush1.bf16.msra.mxu0 %v589
    %607 = vmatprep.subr.bf16.mxu0 0
    %608 = vmatpush1.bf16.msra.mxu0 %v588
    %609 = vmatprep.subr.bf16.mxu0 0
    %610 = vmatpush1.bf16.msra.mxu0 %v587
    %611 = vmatprep.subr.bf16.mxu0 0
    %612 = vmatpush1.bf16.msra.mxu0 %v586
    %613 = vmatprep.subr.bf16.mxu0 0
    %614 = vmatpush2.bf16.msra.mxu0 0
    %615 = vmatprep.subr.bf16.mxu0 0
    %616 = vmatpush2.bf16.msra.mxu0 0
    %617 = vmatprep.subr.bf16.mxu0 0
    %618 = vmatpush2.bf16.msra.mxu0 0
    %619 = vmatprep.subr.bf16.mxu0 0
    %620 = vmatpush2.bf16.msra.mxu0 0
    %621 = vmatprep.subr.bf16.mxu0 0
    %622 = vmatpush2.bf16.msra.mxu0 0
    %623 = vmatprep.subr.bf16.mxu0 0
    %624 = vmatpush2.bf16.msra.mxu0 0
    %625 = vmatprep.subr.bf16.mxu0 0
    %626 = vmatpush2.bf16.msra.mxu0 0
    %627 = vmatprep.subr.bf16.mxu0 0
    %628 = vmatpush2.bf16.msra.mxu0 0
    %629 = vmatprep.mubr.bf16.mxu0 0
    %630 = vmatmul.mubr.bf16.gmra.mxu0 %v595
    %v631 = vpop.f32.mrf.mxu0
    %v632 = vadd.f32 %v568, %v631
    %v633 = vpop.f32.mrf.mxu0
    %v634 = vpop.f32.mrf.mxu0
    %v635 = vpop.f32.mrf.mxu0
    %636 = vdwg.mxu0
    %v637 = vtanh.pop %v632
    %v638 = vpack.c.bf16 %v637, %v637
    %v640 = vlaneseq
    %v641 = vshrl.u32 %v640, 7
    %v642 = vsub.s32 0, %v641
    %v643 = vrot.slane %v496, %v642
    %v649 = vunpack.c.l.b16 %v492
    %v650 = vunpack.c.l.b16 %v493
    %v651 = vunpack.c.l.b16 %v494
    %v652 = vunpack.c.l.b16 %v495
    %v653 = vpack.c.b16 %v650, %v649
    %v654 = vpack.c.b16 %v652, %v651
    %v658 = vsel %vm297, %v638, 0
    %660 = vmatprep.subr.bf16.mxu0 0
    %661 = vmatpush1.bf16.msra.mxu0 0
    %662 = vmatprep.subr.bf16.mxu0 0
    %663 = vmatpush1.bf16.msra.mxu0 0
    %664 = vmatprep.subr.bf16.mxu0 0
    %665 = vmatpush1.bf16.msra.mxu0 0
    %666 = vmatprep.subr.bf16.mxu0 0
    %667 = vmatpush1.bf16.msra.mxu0 0
    %668 = vmatprep.subr.bf16.mxu0 0
    %669 = vmatpush1.bf16.msra.mxu0 0
    %670 = vmatprep.subr.bf16.mxu0 0
    %671 = vmatpush1.bf16.msra.mxu0 0
    %672 = vmatprep.subr.bf16.mxu0 0
    %673 = vmatpush1.bf16.msra.mxu0 %v654
    %674 = vmatprep.subr.bf16.mxu0 0
    %675 = vmatpush1.bf16.msra.mxu0 %v653
    %676 = vmatprep.subr.bf16.mxu0 0
    %677 = vmatpush2.bf16.msra.mxu0 0
    %678 = vmatprep.subr.bf16.mxu0 0
    %679 = vmatpush2.bf16.msra.mxu0 0
    %680 = vmatprep.subr.bf16.mxu0 0
    %681 = vmatpush2.bf16.msra.mxu0 0
    %682 = vmatprep.subr.bf16.mxu0 0
    %683 = vmatpush2.bf16.msra.mxu0 0
    %684 = vmatprep.subr.bf16.mxu0 0
    %685 = vmatpush2.bf16.msra.mxu0 0
    %686 = vmatprep.subr.bf16.mxu0 0
    %687 = vmatpush2.bf16.msra.mxu0 0
    %688 = vmatprep.subr.bf16.mxu0 0
    %689 = vmatpush2.bf16.msra.mxu0 0
    %690 = vmatprep.subr.bf16.mxu0 0
    %691 = vmatpush2.bf16.msra.mxu0 0
    %692 = vmatprep.mubr.bf16.mxu0 0
    %693 = vmatmul.mubr.bf16.gmra.mxu0 %v658
    %v694 = vpop.f32.mrf.mxu0
    %v695 = vadd.f32 %v643, %v694
    %v696 = vpop.f32.mrf.mxu0
    %v697 = vpop.f32.mrf.mxu0
    %v698 = vpop.f32.mrf.mxu0
    %699 = vdwg.mxu0
    %v700 = vmax.f32 %v695, 0.0
    %v701 = vpack.c.bf16 %v700, %v700
    %v703 = vlaneseq
    %v704 = vshrl.u32 %v703, 7
    %v705 = vsub.s32 0, %v704
    %v706 = vrot.slane %v501, %v705
    %v712 = vunpack.c.l.b16 %v497
    %v713 = vunpack.c.l.b16 %v498
    %v714 = vunpack.c.l.b16 %v499
    %v715 = vunpack.c.l.b16 %v500
    %v716 = vpack.c.b16 %v713, %v712
    %v717 = vpack.c.b16 %v715, %v714
    %v721 = vsel %vm297, %v701, 0
    %723 = vmatprep.subr.bf16.mxu0 0
    %724 = vmatpush1.bf16.msra.mxu0 0
    %725 = vmatprep.subr.bf16.mxu0 0
    %726 = vmatpush1.bf16.msra.mxu0 0
    %727 = vmatprep.subr.bf16.mxu0 0
    %728 = vmatpush1.bf16.msra.mxu0 0
    %729 = vmatprep.subr.bf16.mxu0 0
    %730 = vmatpush1.bf16.msra.mxu0 0
    %731 = vmatprep.subr.bf16.mxu0 0
    %732 = vmatpush1.bf16.msra.mxu0 0
    %733 = vmatprep.subr.bf16.mxu0 0
    %734 = vmatpush1.bf16.msra.mxu0 0
    %735 = vmatprep.subr.bf16.mxu0 0
    %736 = vmatpush1.bf16.msra.mxu0 %v717
    %737 = vmatprep.subr.bf16.mxu0 0
    %738 = vmatpush1.bf16.msra.mxu0 %v716
    %739 = vmatprep.subr.bf16.mxu0 0
    %740 = vmatpush2.bf16.msra.mxu0 0
    %741 = vmatprep.subr.bf16.mxu0 0
    %742 = vmatpush2.bf16.msra.mxu0 0
    %743 = vmatprep.subr.bf16.mxu0 0
    %744 = vmatpush2.bf16.msra.mxu0 0
    %745 = vmatprep.subr.bf16.mxu0 0
    %746 = vmatpush2.bf16.msra.mxu0 0
    %747 = vmatprep.subr.bf16.mxu0 0
    %748 = vmatpush2.bf16.msra.mxu0 0
    %749 = vmatprep.subr.bf16.mxu0 0
    %750 = vmatpush2.bf16.msra.mxu0 0
    %751 = vmatprep.subr.bf16.mxu0 0
    %752 = vmatpush2.bf16.msra.mxu0 0
    %753 = vmatprep.subr.bf16.mxu0 0
    %754 = vmatpush2.bf16.msra.mxu0 0
    %755 = vmatprep.mubr.bf16.mxu0 0
    %756 = vmatmul.mubr.bf16.gmra.mxu0 %v721
    %v757 = vpop.f32.mrf.mxu0
    %v758 = vadd.f32 %v706, %v757
    %v759 = vpop.f32.mrf.mxu0
    %v760 = vpop.f32.mrf.mxu0
    %v761 = vpop.f32.mrf.mxu0
    %762 = vdwg.mxu0
    %v764 = vsel %vm297, %v561, 0
    %766 = vmatprep.subr.bf16.mxu0 0
    %767 = vmatpush1.bf16.msra.mxu0 0
    %768 = vmatprep.subr.bf16.mxu0 0
    %769 = vmatpush1.bf16.msra.mxu0 0
    %770 = vmatprep.subr.bf16.mxu0 0
    %771 = vmatpush1.bf16.msra.mxu0 0
    %772 = vmatprep.subr.bf16.mxu0 0
    %773 = vmatpush1.bf16.msra.mxu0 0
    %774 = vmatprep.subr.bf16.mxu0 0
    %775 = vmatpush1.bf16.msra.mxu0 0
    %776 = vmatprep.subr.bf16.mxu0 0
    %777 = vmatpush1.bf16.msra.mxu0 0
    %778 = vmatprep.subr.bf16.mxu0 0
    %779 = vmatpush1.bf16.msra.mxu0 %v513
    %780 = vmatprep.subr.bf16.mxu0 0
    %781 = vmatpush1.bf16.msra.mxu0 %v512
    %782 = vmatprep.subr.bf16.mxu0 0
    %783 = vmatpush2.bf16.msra.mxu0 0
    %784 = vmatprep.subr.bf16.mxu0 0
    %785 = vmatpush2.bf16.msra.mxu0 0
    %786 = vmatprep.subr.bf16.mxu0 0
    %787 = vmatpush2.bf16.msra.mxu0 0
    %788 = vmatprep.subr.bf16.mxu0 0
    %789 = vmatpush2.bf16.msra.mxu0 0
    %790 = vmatprep.subr.bf16.mxu0 0
    %791 = vmatpush2.bf16.msra.mxu0 0
    %792 = vmatprep.subr.bf16.mxu0 0
    %793 = vmatpush2.bf16.msra.mxu0 0
    %794 = vmatprep.subr.bf16.mxu0 0
    %795 = vmatpush2.bf16.msra.mxu0 0
    %796 = vmatprep.subr.bf16.mxu0 0
    %797 = vmatpush2.bf16.msra.mxu0 0
    %798 = vmatprep.mubr.bf16.mxu0 0
    %799 = vmatmul.mubr.bf16.gmra.mxu0 %v764
    %v800 = vpop.f32.mrf.mxu0
    %v801 = vadd.f32 0.0, %v800
    %v802 = vpop.f32.mrf.mxu0
    %v803 = vpop.f32.mrf.mxu0
    %v804 = vpop.f32.mrf.mxu0
    %805 = vdwg.mxu0
    %v806 = vadd.f32 %v457, %v801
    %v807 = vtanh.pop %v806
    %v808 = vpack.c.bf16 %v807, %v807
    %810 = vrot.lane.b32.xlu0 %v638, 32
    %v811 = vpop.permute.xlu0 %810
    %v813 = vsel %vm297, %v561, %v811
    %v814 = vsel %vm594, %v813, 0
    %816 = vmatprep.subr.bf16.mxu0 0
    %817 = vmatpush1.bf16.msra.mxu0 0
    %818 = vmatprep.subr.bf16.mxu0 0
    %819 = vmatpush1.bf16.msra.mxu0 0
    %820 = vmatprep.subr.bf16.mxu0 0
    %821 = vmatpush1.bf16.msra.mxu0 0
    %822 = vmatprep.subr.bf16.mxu0 0
    %823 = vmatpush1.bf16.msra.mxu0 0
    %824 = vmatprep.subr.bf16.mxu0 0
    %825 = vmatpush1.bf16.msra.mxu0 %v589
    %826 = vmatprep.subr.bf16.mxu0 0
    %827 = vmatpush1.bf16.msra.mxu0 %v588
    %828 = vmatprep.subr.bf16.mxu0 0
    %829 = vmatpush1.bf16.msra.mxu0 %v587
    %830 = vmatprep.subr.bf16.mxu0 0
    %831 = vmatpush1.bf16.msra.mxu0 %v586
    %832 = vmatprep.subr.bf16.mxu0 0
    %833 = vmatpush2.bf16.msra.mxu0 0
    %834 = vmatprep.subr.bf16.mxu0 0
    %835 = vmatpush2.bf16.msra.mxu0 0
    %836 = vmatprep.subr.bf16.mxu0 0
    %837 = vmatpush2.bf16.msra.mxu0 0
    %838 = vmatprep.subr.bf16.mxu0 0
    %839 = vmatpush2.bf16.msra.mxu0 0
    %840 = vmatprep.subr.bf16.mxu0 0
    %841 = vmatpush2.bf16.msra.mxu0 0
    %842 = vmatprep.subr.bf16.mxu0 0
    %843 = vmatpush2.bf16.msra.mxu0 0
    %844 = vmatprep.subr.bf16.mxu0 0
    %845 = vmatpush2.bf16.msra.mxu0 0
    %846 = vmatprep.subr.bf16.mxu0 0
    %847 = vmatpush2.bf16.msra.mxu0 0
    %848 = vmatprep.mubr.bf16.mxu0 0
    %849 = vmatmul.mubr.bf16.gmra.mxu0 %v814
    %v850 = vpop.f32.mrf.mxu0
    %v851 = vadd.f32 %v568, %v850
    %v852 = vpop.f32.mrf.mxu0
    %v853 = vpop.f32.mrf.mxu0
    %v854 = vpop.f32.mrf.mxu0
    %855 = vdwg.mxu0
    %v856 = vtanh.pop %v851
    %v857 = vpack.c.bf16 %v856, %v856
    %v859 = vsel %vm297, %v857, 0
    %861 = vmatprep.subr.bf16.mxu0 0
    %862 = vmatpush1.bf16.msra.mxu0 0
    %863 = vmatprep.subr.bf16.mxu0 0
    %864 = vmatpush1.bf16.msra.mxu0 0
    %865 = vmatprep.subr.bf16.mxu0 0
    %866 = vmatpush1.bf16.msra.mxu0 0
    %867 = vmatprep.subr.bf16.mxu0 0
    %868 = vmatpush1.bf16.msra.mxu0 0
    %869 = vmatprep.subr.bf16.mxu0 0
    %870 = vmatpush1.bf16.msra.mxu0 0
    %871 = vmatprep.subr.bf16.mxu0 0
    %872 = vmatpush1.bf16.msra.mxu0 0
    %873 = vmatprep.subr.bf16.mxu0 0
    %874 = vmatpush1.bf16.msra.mxu0 %v654
    %875 = vmatprep.subr.bf16.mxu0 0
    %876 = vmatpush1.bf16.msra.mxu0 %v653
    %877 = vmatprep.subr.bf16.mxu0 0
    %878 = vmatpush2.bf16.msra.mxu0 0
    %879 = vmatprep.subr.bf16.mxu0 0
    %880 = vmatpush2.bf16.msra.mxu0 0
    %881 = vmatprep.subr.bf16.mxu0 0
    %882 = vmatpush2.bf16.msra.mxu0 0
    %883 = vmatprep.subr.bf16.mxu0 0
    %884 = vmatpush2.bf16.msra.mxu0 0
    %885 = vmatprep.subr.bf16.mxu0 0
    %886 = vmatpush2.bf16.msra.mxu0 0
    %887 = vmatprep.subr.bf16.mxu0 0
    %888 = vmatpush2.bf16.msra.mxu0 0
    %889 = vmatprep.subr.bf16.mxu0 0
    %890 = vmatpush2.bf16.msra.mxu0 0
    %891 = vmatprep.subr.bf16.mxu0 0
    %892 = vmatpush2.bf16.msra.mxu0 0
    %893 = vmatprep.mubr.bf16.mxu0 0
    %894 = vmatmul.mubr.bf16.gmra.mxu0 %v859
    %v895 = vpop.f32.mrf.mxu0
    %v896 = vadd.f32 %v643, %v895
    %v897 = vpop.f32.mrf.mxu0
    %v898 = vpop.f32.mrf.mxu0
    %v899 = vpop.f32.mrf.mxu0
    %900 = vdwg.mxu0
    %v901 = vmax.f32 %v896, 0.0
    %v902 = vpack.c.bf16 %v901, %v901
    %v904 = vsel %vm297, %v902, 0
    %906 = vmatprep.subr.bf16.mxu0 0
    %907 = vmatpush1.bf16.msra.mxu0 0
    %908 = vmatprep.subr.bf16.mxu0 0
    %909 = vmatpush1.bf16.msra.mxu0 0
    %910 = vmatprep.subr.bf16.mxu0 0
    %911 = vmatpush1.bf16.msra.mxu0 0
    %912 = vmatprep.subr.bf16.mxu0 0
    %913 = vmatpush1.bf16.msra.mxu0 0
    %914 = vmatprep.subr.bf16.mxu0 0
    %915 = vmatpush1.bf16.msra.mxu0 0
    %916 = vmatprep.subr.bf16.mxu0 0
    %917 = vmatpush1.bf16.msra.mxu0 0
    %918 = vmatprep.subr.bf16.mxu0 0
    %919 = vmatpush1.bf16.msra.mxu0 %v717
    %920 = vmatprep.subr.bf16.mxu0 0
    %921 = vmatpush1.bf16.msra.mxu0 %v716
    %922 = vmatprep.subr.bf16.mxu0 0
    %923 = vmatpush2.bf16.msra.mxu0 0
    %924 = vmatprep.subr.bf16.mxu0 0
    %925 = vmatpush2.bf16.msra.mxu0 0
    %926 = vmatprep.subr.bf16.mxu0 0
    %927 = vmatpush2.bf16.msra.mxu0 0
    %928 = vmatprep.subr.bf16.mxu0 0
    %929 = vmatpush2.bf16.msra.mxu0 0
    %930 = vmatprep.subr.bf16.mxu0 0
    %931 = vmatpush2.bf16.msra.mxu0 0
    %932 = vmatprep.subr.bf16.mxu0 0
    %933 = vmatpush2.bf16.msra.mxu0 0
    %934 = vmatprep.subr.bf16.mxu0 0
    %935 = vmatpush2.bf16.msra.mxu0 0
    %936 = vmatprep.subr.bf16.mxu0 0
    %937 = vmatpush2.bf16.msra.mxu0 0
    %938 = vmatprep.mubr.bf16.mxu0 0
    %939 = vmatmul.mubr.bf16.gmra.mxu0 %v904
    %v940 = vpop.f32.mrf.mxu0
    %v941 = vadd.f32 %v706, %v940
    %v942 = vpop.f32.mrf.mxu0
    %v943 = vpop.f32.mrf.mxu0
    %v944 = vpop.f32.mrf.mxu0
    %945 = vdwg.mxu0
    %v946 = vmax.f32 %v758, %v941
    %v948 = vsel %vm297, %v808, 0
    %950 = vmatprep.subr.bf16.mxu0 0
    %951 = vmatpush1.bf16.msra.mxu0 0
    %952 = vmatprep.subr.bf16.mxu0 0
    %953 = vmatpush1.bf16.msra.mxu0 0
    %954 = vmatprep.subr.bf16.mxu0 0
    %955 = vmatpush1.bf16.msra.mxu0 0
    %956 = vmatprep.subr.bf16.mxu0 0
    %957 = vmatpush1.bf16.msra.mxu0 0
    %958 = vmatprep.subr.bf16.mxu0 0
    %959 = vmatpush1.bf16.msra.mxu0 0
    %960 = vmatprep.subr.bf16.mxu0 0
    %961 = vmatpush1.bf16.msra.mxu0 0
    %962 = vmatprep.subr.bf16.mxu0 0
    %963 = vmatpush1.bf16.msra.mxu0 %v513
    %964 = vmatprep.subr.bf16.mxu0 0
    %965 = vmatpush1.bf16.msra.mxu0 %v512
    %966 = vmatprep.subr.bf16.mxu0 0
    %967 = vmatpush2.bf16.msra.mxu0 0
    %968 = vmatprep.subr.bf16.mxu0 0
    %969 = vmatpush2.bf16.msra.mxu0 0
    %970 = vmatprep.subr.bf16.mxu0 0
    %971 = vmatpush2.bf16.msra.mxu0 0
    %972 = vmatprep.subr.bf16.mxu0 0
    %973 = vmatpush2.bf16.msra.mxu0 0
    %974 = vmatprep.subr.bf16.mxu0 0
    %975 = vmatpush2.bf16.msra.mxu0 0
    %976 = vmatprep.subr.bf16.mxu0 0
    %977 = vmatpush2.bf16.msra.mxu0 0
    %978 = vmatprep.subr.bf16.mxu0 0
    %979 = vmatpush2.bf16.msra.mxu0 0
    %980 = vmatprep.subr.bf16.mxu0 0
    %981 = vmatpush2.bf16.msra.mxu0 0
    %982 = vmatprep.mubr.bf16.mxu0 0
    %983 = vmatmul.mubr.bf16.gmra.mxu0 %v948
    %v984 = vpop.f32.mrf.mxu0
    %v985 = vadd.f32 0.0, %v984
    %v986 = vpop.f32.mrf.mxu0
    %v987 = vpop.f32.mrf.mxu0
    %v988 = vpop.f32.mrf.mxu0
    %989 = vdwg.mxu0
    %v990 = vadd.f32 %v460, %v985
    %v991 = vtanh.pop %v990
    %v992 = vpack.c.bf16 %v991, %v991
    %994 = vrot.lane.b32.xlu0 %v857, 32
    %v995 = vpop.permute.xlu0 %994
    %v997 = vsel %vm297, %v808, %v995
    %v998 = vsel %vm594, %v997, 0
    %1000 = vmatprep.subr.bf16.mxu0 0
    %1001 = vmatpush1.bf16.msra.mxu0 0
    %1002 = vmatprep.subr.bf16.mxu0 0
    %1003 = vmatpush1.bf16.msra.mxu0 0
    %1004 = vmatprep.subr.bf16.mxu0 0
    %1005 = vmatpush1.bf16.msra.mxu0 0
    %1006 = vmatprep.subr.bf16.mxu0 0
    %1007 = vmatpush1.bf16.msra.mxu0 0
    %1008 = vmatprep.subr.bf16.mxu0 0
    %1009 = vmatpush1.bf16.msra.mxu0 %v589
    %1010 = vmatprep.subr.bf16.mxu0 0
    %1011 = vmatpush1.bf16.msra.mxu0 %v588
    %1012 = vmatprep.subr.bf16.mxu0 0
    %1013 = vmatpush1.bf16.msra.mxu0 %v587
    %1014 = vmatprep.subr.bf16.mxu0 0
    %1015 = vmatpush1.bf16.msra.mxu0 %v586
    %1016 = vmatprep.subr.bf16.mxu0 0
    %1017 = vmatpush2.bf16.msra.mxu0 0
    %1018 = vmatprep.subr.bf16.mxu0 0
    %1019 = vmatpush2.bf16.msra.mxu0 0
    %1020 = vmatprep.subr.bf16.mxu0 0
    %1021 = vmatpush2.bf16.msra.mxu0 0
    %1022 = vmatprep.subr.bf16.mxu0 0
    %1023 = vmatpush2.bf16.msra.mxu0 0
    %1024 = vmatprep.subr.bf16.mxu0 0
    %1025 = vmatpush2.bf16.msra.mxu0 0
    %1026 = vmatprep.subr.bf16.mxu0 0
    %1027 = vmatpush2.bf16.msra.mxu0 0
    %1028 = vmatprep.subr.bf16.mxu0 0
    %1029 = vmatpush2.bf16.msra.mxu0 0
    %1030 = vmatprep.subr.bf16.mxu0 0
    %1031 = vmatpush2.bf16.msra.mxu0 0
    %1032 = vmatprep.mubr.bf16.mxu0 0
    %1033 = vmatmul.mubr.bf16.gmra.mxu0 %v998
    %v1034 = vpop.f32.mrf.mxu0
    %v1035 = vadd.f32 %v568, %v1034
    %v1036 = vpop.f32.mrf.mxu0
    %v1037 = vpop.f32.mrf.mxu0
    %v1038 = vpop.f32.mrf.mxu0
    %1039 = vdwg.mxu0
    %v1040 = vtanh.pop %v1035
    %v1041 = vpack.c.bf16 %v1040, %v1040
    %v1043 = vsel %vm297, %v1041, 0
    %1045 = vmatprep.subr.bf16.mxu0 0
    %1046 = vmatpush1.bf16.msra.mxu0 0
    %1047 = vmatprep.subr.bf16.mxu0 0
    %1048 = vmatpush1.bf16.msra.mxu0 0
    %1049 = vmatprep.subr.bf16.mxu0 0
    %1050 = vmatpush1.bf16.msra.mxu0 0
    %1051 = vmatprep.subr.bf16.mxu0 0
    %1052 = vmatpush1.bf16.msra.mxu0 0
    %1053 = vmatprep.subr.bf16.mxu0 0
    %1054 = vmatpush1.bf16.msra.mxu0 0
    %1055 = vmatprep.subr.bf16.mxu0 0
    %1056 = vmatpush1.bf16.msra.mxu0 0
    %1057 = vmatprep.subr.bf16.mxu0 0
    %1058 = vmatpush1.bf16.msra.mxu0 %v654
    %1059 = vmatprep.subr.bf16.mxu0 0
    %1060 = vmatpush1.bf16.msra.mxu0 %v653
    %1061 = vmatprep.subr.bf16.mxu0 0
    %1062 = vmatpush2.bf16.msra.mxu0 0
    %1063 = vmatprep.subr.bf16.mxu0 0
    %1064 = vmatpush2.bf16.msra.mxu0 0
    %1065 = vmatprep.subr.bf16.mxu0 0
    %1066 = vmatpush2.bf16.msra.mxu0 0
    %1067 = vmatprep.subr.bf16.mxu0 0
    %1068 = vmatpush2.bf16.msra.mxu0 0
    %1069 = vmatprep.subr.bf16.mxu0 0
    %1070 = vmatpush2.bf16.msra.mxu0 0
    %1071 = vmatprep.subr.bf16.mxu0 0
    %1072 = vmatpush2.bf16.msra.mxu0 0
    %1073 = vmatprep.subr.bf16.mxu0 0
    %1074 = vmatpush2.bf16.msra.mxu0 0
    %1075 = vmatprep.subr.bf16.mxu0 0
    %1076 = vmatpush2.bf16.msra.mxu0 0
    %1077 = vmatprep.mubr.bf16.mxu0 0
    %1078 = vmatmul.mubr.bf16.gmra.mxu0 %v1043
    %v1079 = vpop.f32.mrf.mxu0
    %v1080 = vadd.f32 %v643, %v1079
    %v1081 = vpop.f32.mrf.mxu0
    %v1082 = vpop.f32.mrf.mxu0
    %v1083 = vpop.f32.mrf.mxu0
    %1084 = vdwg.mxu0
    %v1085 = vmax.f32 %v1080, 0.0
    %v1086 = vpack.c.bf16 %v1085, %v1085
    %v1088 = vsel %vm297, %v1086, 0
    %1090 = vmatprep.subr.bf16.mxu0 0
    %1091 = vmatpush1.bf16.msra.mxu0 0
    %1092 = vmatprep.subr.bf16.mxu0 0
    %1093 = vmatpush1.bf16.msra.mxu0 0
    %1094 = vmatprep.subr.bf16.mxu0 0
    %1095 = vmatpush1.bf16.msra.mxu0 0
    %1096 = vmatprep.subr.bf16.mxu0 0
    %1097 = vmatpush1.bf16.msra.mxu0 0
    %1098 = vmatprep.subr.bf16.mxu0 0
    %1099 = vmatpush1.bf16.msra.mxu0 0
    %1100 = vmatprep.subr.bf16.mxu0 0
    %1101 = vmatpush1.bf16.msra.mxu0 0
    %1102 = vmatprep.subr.bf16.mxu0 0
    %1103 = vmatpush1.bf16.msra.mxu0 %v717
    %1104 = vmatprep.subr.bf16.mxu0 0
    %1105 = vmatpush1.bf16.msra.mxu0 %v716
    %1106 = vmatprep.subr.bf16.mxu0 0
    %1107 = vmatpush2.bf16.msra.mxu0 0
    %1108 = vmatprep.subr.bf16.mxu0 0
    %1109 = vmatpush2.bf16.msra.mxu0 0
    %1110 = vmatprep.subr.bf16.mxu0 0
    %1111 = vmatpush2.bf16.msra.mxu0 0
    %1112 = vmatprep.subr.bf16.mxu0 0
    %1113 = vmatpush2.bf16.msra.mxu0 0
    %1114 = vmatprep.subr.bf16.mxu0 0
    %1115 = vmatpush2.bf16.msra.mxu0 0
    %1116 = vmatprep.subr.bf16.mxu0 0
    %1117 = vmatpush2.bf16.msra.mxu0 0
    %1118 = vmatprep.subr.bf16.mxu0 0
    %1119 = vmatpush2.bf16.msra.mxu0 0
    %1120 = vmatprep.subr.bf16.mxu0 0
    %1121 = vmatpush2.bf16.msra.mxu0 0
    %1122 = vmatprep.mubr.bf16.mxu0 0
    %1123 = vmatmul.mubr.bf16.gmra.mxu0 %v1088
    %v1124 = vpop.f32.mrf.mxu0
    %v1125 = vadd.f32 %v706, %v1124
    %v1126 = vpop.f32.mrf.mxu0
    %v1127 = vpop.f32.mrf.mxu0
    %v1128 = vpop.f32.mrf.mxu0
    %1129 = vdwg.mxu0
    %v1130 = vmax.f32 %v946, %v1125
    %v1132 = vsel %vm297, %v992, 0
    %1134 = vmatprep.subr.bf16.mxu0 0
    %1135 = vmatpush1.bf16.msra.mxu0 0
    %1136 = vmatprep.subr.bf16.mxu0 0
    %1137 = vmatpush1.bf16.msra.mxu0 0
    %1138 = vmatprep.subr.bf16.mxu0 0
    %1139 = vmatpush1.bf16.msra.mxu0 0
    %1140 = vmatprep.subr.bf16.mxu0 0
    %1141 = vmatpush1.bf16.msra.mxu0 0
    %1142 = vmatprep.subr.bf16.mxu0 0
    %1143 = vmatpush1.bf16.msra.mxu0 0
    %1144 = vmatprep.subr.bf16.mxu0 0
    %1145 = vmatpush1.bf16.msra.mxu0 0
    %1146 = vmatprep.subr.bf16.mxu0 0
    %1147 = vmatpush1.bf16.msra.mxu0 %v513
    %1148 = vmatprep.subr.bf16.mxu0 0
    %1149 = vmatpush1.bf16.msra.mxu0 %v512
    %1150 = vmatprep.subr.bf16.mxu0 0
    %1151 = vmatpush2.bf16.msra.mxu0 0
    %1152 = vmatprep.subr.bf16.mxu0 0
    %1153 = vmatpush2.bf16.msra.mxu0 0
    %1154 = vmatprep.subr.bf16.mxu0 0
    %1155 = vmatpush2.bf16.msra.mxu0 0
    %1156 = vmatprep.subr.bf16.mxu0 0
    %1157 = vmatpush2.bf16.msra.mxu0 0
    %1158 = vmatprep.subr.bf16.mxu0 0
    %1159 = vmatpush2.bf16.msra.mxu0 0
    %1160 = vmatprep.subr.bf16.mxu0 0
    %1161 = vmatpush2.bf16.msra.mxu0 0
    %1162 = vmatprep.subr.bf16.mxu0 0
    %1163 = vmatpush2.bf16.msra.mxu0 0
    %1164 = vmatprep.subr.bf16.mxu0 0
    %1165 = vmatpush2.bf16.msra.mxu0 0
    %1166 = vmatprep.mubr.bf16.mxu0 0
    %1167 = vmatmul.mubr.bf16.gmra.mxu0 %v1132
    %v1168 = vpop.f32.mrf.mxu0
    %v1169 = vadd.f32 0.0, %v1168
    %v1170 = vpop.f32.mrf.mxu0
    %v1171 = vpop.f32.mrf.mxu0
    %v1172 = vpop.f32.mrf.mxu0
    %1173 = vdwg.mxu0
    %v1174 = vadd.f32 %v465, %v1169
    %v1175 = vtanh.pop %v1174
    %v1176 = vpack.c.bf16 %v1175, %v1175
    %1178 = vrot.lane.b32.xlu0 %v1041, 32
    %v1179 = vpop.permute.xlu0 %1178
    %v1181 = vsel %vm297, %v992, %v1179
    %v1182 = vsel %vm594, %v1181, 0
    %1184 = vmatprep.subr.bf16.mxu0 0
    %1185 = vmatpush1.bf16.msra.mxu0 0
    %1186 = vmatprep.subr.bf16.mxu0 0
    %1187 = vmatpush1.bf16.msra.mxu0 0
    %1188 = vmatprep.subr.bf16.mxu0 0
    %1189 = vmatpush1.bf16.msra.mxu0 0
    %1190 = vmatprep.subr.bf16.mxu0 0
    %1191 = vmatpush1.bf16.msra.mxu0 0
    %1192 = vmatprep.subr.bf16.mxu0 0
    %1193 = vmatpush1.bf16.msra.mxu0 %v589
    %1194 = vmatprep.subr.bf16.mxu0 0
    %1195 = vmatpush1.bf16.msra.mxu0 %v588
    %1196 = vmatprep.subr.bf16.mxu0 0
    %1197 = vmatpush1.bf16.msra.mxu0 %v587
    %1198 = vmatprep.subr.bf16.mxu0 0
    %1199 = vmatpush1.bf16.msra.mxu0 %v586
    %1200 = vmatprep.subr.bf16.mxu0 0
    %1201 = vmatpush2.bf16.msra.mxu0 0
    %1202 = vmatprep.subr.bf16.mxu0 0
    %1203 = vmatpush2.bf16.msra.mxu0 0
    %1204 = vmatprep.subr.bf16.mxu0 0
    %1205 = vmatpush2.bf16.msra.mxu0 0
    %1206 = vmatprep.subr.bf16.mxu0 0
    %1207 = vmatpush2.bf16.msra.mxu0 0
    %1208 = vmatprep.subr.bf16.mxu0 0
    %1209 = vmatpush2.bf16.msra.mxu0 0
    %1210 = vmatprep.subr.bf16.mxu0 0
    %1211 = vmatpush2.bf16.msra.mxu0 0
    %1212 = vmatprep.subr.bf16.mxu0 0
    %1213 = vmatpush2.bf16.msra.mxu0 0
    %1214 = vmatprep.subr.bf16.mxu0 0
    %1215 = vmatpush2.bf16.msra.mxu0 0
    %1216 = vmatprep.mubr.bf16.mxu0 0
    %1217 = vmatmul.mubr.bf16.gmra.mxu0 %v1182
    %v1218 = vpop.f32.mrf.mxu0
    %v1219 = vadd.f32 %v568, %v1218
    %v1220 = vpop.f32.mrf.mxu0
    %v1221 = vpop.f32.mrf.mxu0
    %v1222 = vpop.f32.mrf.mxu0
    %1223 = vdwg.mxu0
    %v1224 = vtanh.pop %v1219
    %v1225 = vpack.c.bf16 %v1224, %v1224
    %v1227 = vsel %vm297, %v1225, 0
    %1229 = vmatprep.subr.bf16.mxu0 0
    %1230 = vmatpush1.bf16.msra.mxu0 0
    %1231 = vmatprep.subr.bf16.mxu0 0
    %1232 = vmatpush1.bf16.msra.mxu0 0
    %1233 = vmatprep.subr.bf16.mxu0 0
    %1234 = vmatpush1.bf16.msra.mxu0 0
    %1235 = vmatprep.subr.bf16.mxu0 0
    %1236 = vmatpush1.bf16.msra.mxu0 0
    %1237 = vmatprep.subr.bf16.mxu0 0
    %1238 = vmatpush1.bf16.msra.mxu0 0
    %1239 = vmatprep.subr.bf16.mxu0 0
    %1240 = vmatpush1.bf16.msra.mxu0 0
    %1241 = vmatprep.subr.bf16.mxu0 0
    %1242 = vmatpush1.bf16.msra.mxu0 %v654
    %1243 = vmatprep.subr.bf16.mxu0 0
    %1244 = vmatpush1.bf16.msra.mxu0 %v653
    %1245 = vmatprep.subr.bf16.mxu0 0
    %1246 = vmatpush2.bf16.msra.mxu0 0
    %1247 = vmatprep.subr.bf16.mxu0 0
    %1248 = vmatpush2.bf16.msra.mxu0 0
    %1249 = vmatprep.subr.bf16.mxu0 0
    %1250 = vmatpush2.bf16.msra.mxu0 0
    %1251 = vmatprep.subr.bf16.mxu0 0
    %1252 = vmatpush2.bf16.msra.mxu0 0
    %1253 = vmatprep.subr.bf16.mxu0 0
    %1254 = vmatpush2.bf16.msra.mxu0 0
    %1255 = vmatprep.subr.bf16.mxu0 0
    %1256 = vmatpush2.bf16.msra.mxu0 0
    %1257 = vmatprep.subr.bf16.mxu0 0
    %1258 = vmatpush2.bf16.msra.mxu0 0
    %1259 = vmatprep.subr.bf16.mxu0 0
    %1260 = vmatpush2.bf16.msra.mxu0 0
    %1261 = vmatprep.mubr.bf16.mxu0 0
    %1262 = vmatmul.mubr.bf16.gmra.mxu0 %v1227
    %v1263 = vpop.f32.mrf.mxu0
    %v1264 = vadd.f32 %v643, %v1263
    %v1265 = vpop.f32.mrf.mxu0
    %v1266 = vpop.f32.mrf.mxu0
    %v1267 = vpop.f32.mrf.mxu0
    %1268 = vdwg.mxu0
    %v1269 = vmax.f32 %v1264, 0.0
    %v1270 = vpack.c.bf16 %v1269, %v1269
    %v1272 = vsel %vm297, %v1270, 0
    %1274 = vmatprep.subr.bf16.mxu0 0
    %1275 = vmatpush1.bf16.msra.mxu0 0
    %1276 = vmatprep.subr.bf16.mxu0 0
    %1277 = vmatpush1.bf16.msra.mxu0 0
    %1278 = vmatprep.subr.bf16.mxu0 0
    %1279 = vmatpush1.bf16.msra.mxu0 0
    %1280 = vmatprep.subr.bf16.mxu0 0
    %1281 = vmatpush1.bf16.msra.mxu0 0
    %1282 = vmatprep.subr.bf16.mxu0 0
    %1283 = vmatpush1.bf16.msra.mxu0 0
    %1284 = vmatprep.subr.bf16.mxu0 0
    %1285 = vmatpush1.bf16.msra.mxu0 0
    %1286 = vmatprep.subr.bf16.mxu0 0
    %1287 = vmatpush1.bf16.msra.mxu0 %v717
    %1288 = vmatprep.subr.bf16.mxu0 0
    %1289 = vmatpush1.bf16.msra.mxu0 %v716
    %1290 = vmatprep.subr.bf16.mxu0 0
    %1291 = vmatpush2.bf16.msra.mxu0 0
    %1292 = vmatprep.subr.bf16.mxu0 0
    %1293 = vmatpush2.bf16.msra.mxu0 0
    %1294 = vmatprep.subr.bf16.mxu0 0
    %1295 = vmatpush2.bf16.msra.mxu0 0
    %1296 = vmatprep.subr.bf16.mxu0 0
    %1297 = vmatpush2.bf16.msra.mxu0 0
    %1298 = vmatprep.subr.bf16.mxu0 0
    %1299 = vmatpush2.bf16.msra.mxu0 0
    %1300 = vmatprep.subr.bf16.mxu0 0
    %1301 = vmatpush2.bf16.msra.mxu0 0
    %1302 = vmatprep.subr.bf16.mxu0 0
    %1303 = vmatpush2.bf16.msra.mxu0 0
    %1304 = vmatprep.subr.bf16.mxu0 0
    %1305 = vmatpush2.bf16.msra.mxu0 0
    %1306 = vmatprep.mubr.bf16.mxu0 0
    %1307 = vmatmul.mubr.bf16.gmra.mxu0 %v1272
    %v1308 = vpop.f32.mrf.mxu0
    %v1309 = vadd.f32 %v706, %v1308
    %v1310 = vpop.f32.mrf.mxu0
    %v1311 = vpop.f32.mrf.mxu0
    %v1312 = vpop.f32.mrf.mxu0
    %1313 = vdwg.mxu0
    %v1314 = vmax.f32 %v1130, %v1309
    %v1316 = vsel %vm297, %v1176, 0
    %1318 = vmatprep.subr.bf16.mxu0 0
    %1319 = vmatpush1.bf16.msra.mxu0 0
    %1320 = vmatprep.subr.bf16.mxu0 0
    %1321 = vmatpush1.bf16.msra.mxu0 0
    %1322 = vmatprep.subr.bf16.mxu0 0
    %1323 = vmatpush1.bf16.msra.mxu0 0
    %1324 = vmatprep.subr.bf16.mxu0 0
    %1325 = vmatpush1.bf16.msra.mxu0 0
    %1326 = vmatprep.subr.bf16.mxu0 0
    %1327 = vmatpush1.bf16.msra.mxu0 0
    %1328 = vmatprep.subr.bf16.mxu0 0
    %1329 = vmatpush1.bf16.msra.mxu0 0
    %1330 = vmatprep.subr.bf16.mxu0 0
    %1331 = vmatpush1.bf16.msra.mxu0 %v513
    %1332 = vmatprep.subr.bf16.mxu0 0
    %1333 = vmatpush1.bf16.msra.mxu0 %v512
    %1334 = vmatprep.subr.bf16.mxu0 0
    %1335 = vmatpush2.bf16.msra.mxu0 0
    %1336 = vmatprep.subr.bf16.mxu0 0
    %1337 = vmatpush2.bf16.msra.mxu0 0
    %1338 = vmatprep.subr.bf16.mxu0 0
    %1339 = vmatpush2.bf16.msra.mxu0 0
    %1340 = vmatprep.subr.bf16.mxu0 0
    %1341 = vmatpush2.bf16.msra.mxu0 0
    %1342 = vmatprep.subr.bf16.mxu0 0
    %1343 = vmatpush2.bf16.msra.mxu0 0
    %1344 = vmatprep.subr.bf16.mxu0 0
    %1345 = vmatpush2.bf16.msra.mxu0 0
    %1346 = vmatprep.subr.bf16.mxu0 0
    %1347 = vmatpush2.bf16.msra.mxu0 0
    %1348 = vmatprep.subr.bf16.mxu0 0
    %1349 = vmatpush2.bf16.msra.mxu0 0
    %1350 = vmatprep.mubr.bf16.mxu0 0
    %1351 = vmatmul.mubr.bf16.gmra.mxu0 %v1316
    %v1352 = vpop.f32.mrf.mxu0
    %v1353 = vadd.f32 0.0, %v1352
    %v1354 = vpop.f32.mrf.mxu0
    %v1355 = vpop.f32.mrf.mxu0
    %v1356 = vpop.f32.mrf.mxu0
    %1357 = vdwg.mxu0
    %v1358 = vadd.f32 %v468, %v1353
    %v1359 = vtanh.pop %v1358
    %v1360 = vpack.c.bf16 %v1359, %v1359
    %1362 = vrot.lane.b32.xlu0 %v1225, 32
    %v1363 = vpop.permute.xlu0 %1362
    %v1365 = vsel %vm297, %v1176, %v1363
    %v1366 = vsel %vm594, %v1365, 0
    %1368 = vmatprep.subr.bf16.mxu0 0
    %1369 = vmatpush1.bf16.msra.mxu0 0
    %1370 = vmatprep.subr.bf16.mxu0 0
    %1371 = vmatpush1.bf16.msra.mxu0 0
    %1372 = vmatprep.subr.bf16.mxu0 0
    %1373 = vmatpush1.bf16.msra.mxu0 0
    %1374 = vmatprep.subr.bf16.mxu0 0
    %1375 = vmatpush1.bf16.msra.mxu0 0
    %1376 = vmatprep.subr.bf16.mxu0 0
    %1377 = vmatpush1.bf16.msra.mxu0 %v589
    %1378 = vmatprep.subr.bf16.mxu0 0
    %1379 = vmatpush1.bf16.msra.mxu0 %v588
    %1380 = vmatprep.subr.bf16.mxu0 0
    %1381 = vmatpush1.bf16.msra.mxu0 %v587
    %1382 = vmatprep.subr.bf16.mxu0 0
    %1383 = vmatpush1.bf16.msra.mxu0 %v586
    %1384 = vmatprep.subr.bf16.mxu0 0
    %1385 = vmatpush2.bf16.msra.mxu0 0
    %1386 = vmatprep.subr.bf16.mxu0 0
    %1387 = vmatpush2.bf16.msra.mxu0 0
    %1388 = vmatprep.subr.bf16.mxu0 0
    %1389 = vmatpush2.bf16.msra.mxu0 0
    %1390 = vmatprep.subr.bf16.mxu0 0
    %1391 = vmatpush2.bf16.msra.mxu0 0
    %1392 = vmatprep.subr.bf16.mxu0 0
    %1393 = vmatpush2.bf16.msra.mxu0 0
    %1394 = vmatprep.subr.bf16.mxu0 0
    %1395 = vmatpush2.bf16.msra.mxu0 0
    %1396 = vmatprep.subr.bf16.mxu0 0
    %1397 = vmatpush2.bf16.msra.mxu0 0
    %1398 = vmatprep.subr.bf16.mxu0 0
    %1399 = vmatpush2.bf16.msra.mxu0 0
    %1400 = vmatprep.mubr.bf16.mxu0 0
    %1401 = vmatmul.mubr.bf16.gmra.mxu0 %v1366
    %v1402 = vpop.f32.mrf.mxu0
    %v1403 = vadd.f32 %v568, %v1402
    %v1404 = vpop.f32.mrf.mxu0
    %v1405 = vpop.f32.mrf.mxu0
    %v1406 = vpop.f32.mrf.mxu0
    %1407 = vdwg.mxu0
    %v1408 = vtanh.pop %v1403
    %v1409 = vpack.c.bf16 %v1408, %v1408
    %v1411 = vsel %vm297, %v1409, 0
    %1413 = vmatprep.subr.bf16.mxu0 0
    %1414 = vmatpush1.bf16.msra.mxu0 0
    %1415 = vmatprep.subr.bf16.mxu0 0
    %1416 = vmatpush1.bf16.msra.mxu0 0
    %1417 = vmatprep.subr.bf16.mxu0 0
    %1418 = vmatpush1.bf16.msra.mxu0 0
    %1419 = vmatprep.subr.bf16.mxu0 0
    %1420 = vmatpush1.bf16.msra.mxu0 0
    %1421 = vmatprep.subr.bf16.mxu0 0
    %1422 = vmatpush1.bf16.msra.mxu0 0
    %1423 = vmatprep.subr.bf16.mxu0 0
    %1424 = vmatpush1.bf16.msra.mxu0 0
    %1425 = vmatprep.subr.bf16.mxu0 0
    %1426 = vmatpush1.bf16.msra.mxu0 %v654
    %1427 = vmatprep.subr.bf16.mxu0 0
    %1428 = vmatpush1.bf16.msra.mxu0 %v653
    %1429 = vmatprep.subr.bf16.mxu0 0
    %1430 = vmatpush2.bf16.msra.mxu0 0
    %1431 = vmatprep.subr.bf16.mxu0 0
    %1432 = vmatpush2.bf16.msra.mxu0 0
    %1433 = vmatprep.subr.bf16.mxu0 0
    %1434 = vmatpush2.bf16.msra.mxu0 0
    %1435 = vmatprep.subr.bf16.mxu0 0
    %1436 = vmatpush2.bf16.msra.mxu0 0
    %1437 = vmatprep.subr.bf16.mxu0 0
    %1438 = vmatpush2.bf16.msra.mxu0 0
    %1439 = vmatprep.subr.bf16.mxu0 0
    %1440 = vmatpush2.bf16.msra.mxu0 0
    %1441 = vmatprep.subr.bf16.mxu0 0
    %1442 = vmatpush2.bf16.msra.mxu0 0
    %1443 = vmatprep.subr.bf16.mxu0 0
    %1444 = vmatpush2.bf16.msra.mxu0 0
    %1445 = vmatprep.mubr.bf16.mxu0 0
    %1446 = vmatmul.mubr.bf16.gmra.mxu0 %v1411
    %v1447 = vpop.f32.mrf.mxu0
    %v1448 = vadd.f32 %v643, %v1447
    %v1449 = vpop.f32.mrf.mxu0
    %v1450 = vpop.f32.mrf.mxu0
    %v1451 = vpop.f32.mrf.mxu0
    %1452 = vdwg.mxu0
    %v1453 = vmax.f32 %v1448, 0.0
    %v1454 = vpack.c.bf16 %v1453, %v1453
    %v1456 = vsel %vm297, %v1454, 0
    %1458 = vmatprep.subr.bf16.mxu0 0
    %1459 = vmatpush1.bf16.msra.mxu0 0
    %1460 = vmatprep.subr.bf16.mxu0 0
    %1461 = vmatpush1.bf16.msra.mxu0 0
    %1462 = vmatprep.subr.bf16.mxu0 0
    %1463 = vmatpush1.bf16.msra.mxu0 0
    %1464 = vmatprep.subr.bf16.mxu0 0
    %1465 = vmatpush1.bf16.msra.mxu0 0
    %1466 = vmatprep.subr.bf16.mxu0 0
    %1467 = vmatpush1.bf16.msra.mxu0 0
    %1468 = vmatprep.subr.bf16.mxu0 0
    %1469 = vmatpush1.bf16.msra.mxu0 0
    %1470 = vmatprep.subr.bf16.mxu0 0
    %1471 = vmatpush1.bf16.msra.mxu0 %v717
    %1472 = vmatprep.subr.bf16.mxu0 0
    %1473 = vmatpush1.bf16.msra.mxu0 %v716
    %1474 = vmatprep.subr.bf16.mxu0 0
    %1475 = vmatpush2.bf16.msra.mxu0 0
    %1476 = vmatprep.subr.bf16.mxu0 0
    %1477 = vmatpush2.bf16.msra.mxu0 0
    %1478 = vmatprep.subr.bf16.mxu0 0
    %1479 = vmatpush2.bf16.msra.mxu0 0
    %1480 = vmatprep.subr.bf16.mxu0 0
    %1481 = vmatpush2.bf16.msra.mxu0 0
    %1482 = vmatprep.subr.bf16.mxu0 0
    %1483 = vmatpush2.bf16.msra.mxu0 0
    %1484 = vmatprep.subr.bf16.mxu0 0
    %1485 = vmatpush2.bf16.msra.mxu0 0
    %1486 = vmatprep.subr.bf16.mxu0 0
    %1487 = vmatpush2.bf16.msra.mxu0 0
    %1488 = vmatprep.subr.bf16.mxu0 0
    %1489 = vmatpush2.bf16.msra.mxu0 0
    %1490 = vmatprep.mubr.bf16.mxu0 0
    %1491 = vmatmul.mubr.bf16.gmra.mxu0 %v1456
    %v1492 = vpop.f32.mrf.mxu0
    %v1493 = vadd.f32 %v706, %v1492
    %v1494 = vpop.f32.mrf.mxu0
    %v1495 = vpop.f32.mrf.mxu0
    %v1496 = vpop.f32.mrf.mxu0
    %1497 = vdwg.mxu0
    %v1498 = vmax.f32 %v1314, %v1493
    %v1500 = vsel %vm297, %v1360, 0
    %1502 = vmatprep.subr.bf16.mxu0 0
    %1503 = vmatpush1.bf16.msra.mxu0 0
    %1504 = vmatprep.subr.bf16.mxu0 0
    %1505 = vmatpush1.bf16.msra.mxu0 0
    %1506 = vmatprep.subr.bf16.mxu0 0
    %1507 = vmatpush1.bf16.msra.mxu0 0
    %1508 = vmatprep.subr.bf16.mxu0 0
    %1509 = vmatpush1.bf16.msra.mxu0 0
    %1510 = vmatprep.subr.bf16.mxu0 0
    %1511 = vmatpush1.bf16.msra.mxu0 0
    %1512 = vmatprep.subr.bf16.mxu0 0
    %1513 = vmatpush1.bf16.msra.mxu0 0
    %1514 = vmatprep.subr.bf16.mxu0 0
    %1515 = vmatpush1.bf16.msra.mxu0 %v513
    %1516 = vmatprep.subr.bf16.mxu0 0
    %1517 = vmatpush1.bf16.msra.mxu0 %v512
    %1518 = vmatprep.subr.bf16.mxu0 0
    %1519 = vmatpush2.bf16.msra.mxu0 0
    %1520 = vmatprep.subr.bf16.mxu0 0
    %1521 = vmatpush2.bf16.msra.mxu0 0
    %1522 = vmatprep.subr.bf16.mxu0 0
    %1523 = vmatpush2.bf16.msra.mxu0 0
    %1524 = vmatprep.subr.bf16.mxu0 0
    %1525 = vmatpush2.bf16.msra.mxu0 0
    %1526 = vmatprep.subr.bf16.mxu0 0
    %1527 = vmatpush2.bf16.msra.mxu0 0
    %1528 = vmatprep.subr.bf16.mxu0 0
    %1529 = vmatpush2.bf16.msra.mxu0 0
    %1530 = vmatprep.subr.bf16.mxu0 0
    %1531 = vmatpush2.bf16.msra.mxu0 0
    %1532 = vmatprep.subr.bf16.mxu0 0
    %1533 = vmatpush2.bf16.msra.mxu0 0
    %1534 = vmatprep.mubr.bf16.mxu0 0
    %1535 = vmatmul.mubr.bf16.gmra.mxu0 %v1500
    %v1536 = vpop.f32.mrf.mxu0
    %v1537 = vadd.f32 0.0, %v1536
    %v1538 = vpop.f32.mrf.mxu0
    %v1539 = vpop.f32.mrf.mxu0
    %v1540 = vpop.f32.mrf.mxu0
    %1541 = vdwg.mxu0
    %v1542 = vadd.f32 %v473, %v1537
    %v1543 = vtanh.pop %v1542
    %v1544 = vpack.c.bf16 %v1543, %v1543
    %1546 = vrot.lane.b32.xlu0 %v1409, 32
    %v1547 = vpop.permute.xlu0 %1546
    %v1549 = vsel %vm297, %v1360, %v1547
    %v1550 = vsel %vm594, %v1549, 0
    %1552 = vmatprep.subr.bf16.mxu0 0
    %1553 = vmatpush1.bf16.msra.mxu0 0
    %1554 = vmatprep.subr.bf16.mxu0 0
    %1555 = vmatpush1.bf16.msra.mxu0 0
    %1556 = vmatprep.subr.bf16.mxu0 0
    %1557 = vmatpush1.bf16.msra.mxu0 0
    %1558 = vmatprep.subr.bf16.mxu0 0
    %1559 = vmatpush1.bf16.msra.mxu0 0
    %1560 = vmatprep.subr.bf16.mxu0 0
    %1561 = vmatpush1.bf16.msra.mxu0 %v589
    %1562 = vmatprep.subr.bf16.mxu0 0
    %1563 = vmatpush1.bf16.msra.mxu0 %v588
    %1564 = vmatprep.subr.bf16.mxu0 0
    %1565 = vmatpush1.bf16.msra.mxu0 %v587
    %1566 = vmatprep.subr.bf16.mxu0 0
    %1567 = vmatpush1.bf16.msra.mxu0 %v586
    %1568 = vmatprep.subr.bf16.mxu0 0
    %1569 = vmatpush2.bf16.msra.mxu0 0
    %1570 = vmatprep.subr.bf16.mxu0 0
    %1571 = vmatpush2.bf16.msra.mxu0 0
    %1572 = vmatprep.subr.bf16.mxu0 0
    %1573 = vmatpush2.bf16.msra.mxu0 0
    %1574 = vmatprep.subr.bf16.mxu0 0
    %1575 = vmatpush2.bf16.msra.mxu0 0
    %1576 = vmatprep.subr.bf16.mxu0 0
    %1577 = vmatpush2.bf16.msra.mxu0 0
    %1578 = vmatprep.subr.bf16.mxu0 0
    %1579 = vmatpush2.bf16.msra.mxu0 0
    %1580 = vmatprep.subr.bf16.mxu0 0
    %1581 = vmatpush2.bf16.msra.mxu0 0
    %1582 = vmatprep.subr.bf16.mxu0 0
    %1583 = vmatpush2.bf16.msra.mxu0 0
    %1584 = vmatprep.mubr.bf16.mxu0 0
    %1585 = vmatmul.mubr.bf16.gmra.mxu0 %v1550
    %v1586 = vpop.f32.mrf.mxu0
    %v1587 = vadd.f32 %v568, %v1586
    %v1588 = vpop.f32.mrf.mxu0
    %v1589 = vpop.f32.mrf.mxu0
    %v1590 = vpop.f32.mrf.mxu0
    %1591 = vdwg.mxu0
    %v1592 = vtanh.pop %v1587
    %v1593 = vpack.c.bf16 %v1592, %v1592
    %v1595 = vsel %vm297, %v1593, 0
    %1597 = vmatprep.subr.bf16.mxu0 0
    %1598 = vmatpush1.bf16.msra.mxu0 0
    %1599 = vmatprep.subr.bf16.mxu0 0
    %1600 = vmatpush1.bf16.msra.mxu0 0
    %1601 = vmatprep.subr.bf16.mxu0 0
    %1602 = vmatpush1.bf16.msra.mxu0 0
    %1603 = vmatprep.subr.bf16.mxu0 0
    %1604 = vmatpush1.bf16.msra.mxu0 0
    %1605 = vmatprep.subr.bf16.mxu0 0
    %1606 = vmatpush1.bf16.msra.mxu0 0
    %1607 = vmatprep.subr.bf16.mxu0 0
    %1608 = vmatpush1.bf16.msra.mxu0 0
    %1609 = vmatprep.subr.bf16.mxu0 0
    %1610 = vmatpush1.bf16.msra.mxu0 %v654
    %1611 = vmatprep.subr.bf16.mxu0 0
    %1612 = vmatpush1.bf16.msra.mxu0 %v653
    %1613 = vmatprep.subr.bf16.mxu0 0
    %1614 = vmatpush2.bf16.msra.mxu0 0
    %1615 = vmatprep.subr.bf16.mxu0 0
    %1616 = vmatpush2.bf16.msra.mxu0 0
    %1617 = vmatprep.subr.bf16.mxu0 0
    %1618 = vmatpush2.bf16.msra.mxu0 0
    %1619 = vmatprep.subr.bf16.mxu0 0
    %1620 = vmatpush2.bf16.msra.mxu0 0
    %1621 = vmatprep.subr.bf16.mxu0 0
    %1622 = vmatpush2.bf16.msra.mxu0 0
    %1623 = vmatprep.subr.bf16.mxu0 0
    %1624 = vmatpush2.bf16.msra.mxu0 0
    %1625 = vmatprep.subr.bf16.mxu0 0
    %1626 = vmatpush2.bf16.msra.mxu0 0
    %1627 = vmatprep.subr.bf16.mxu0 0
    %1628 = vmatpush2.bf16.msra.mxu0 0
    %1629 = vmatprep.mubr.bf16.mxu0 0
    %1630 = vmatmul.mubr.bf16.gmra.mxu0 %v1595
    %v1631 = vpop.f32.mrf.mxu0
    %v1632 = vadd.f32 %v643, %v1631
    %v1633 = vpop.f32.mrf.mxu0
    %v1634 = vpop.f32.mrf.mxu0
    %v1635 = vpop.f32.mrf.mxu0
    %1636 = vdwg.mxu0
    %v1637 = vmax.f32 %v1632, 0.0
    %v1638 = vpack.c.bf16 %v1637, %v1637
    %v1640 = vsel %vm297, %v1638, 0
    %1642 = vmatprep.subr.bf16.mxu0 0
    %1643 = vmatpush1.bf16.msra.mxu0 0
    %1644 = vmatprep.subr.bf16.mxu0 0
    %1645 = vmatpush1.bf16.msra.mxu0 0
    %1646 = vmatprep.subr.bf16.mxu0 0
    %1647 = vmatpush1.bf16.msra.mxu0 0
    %1648 = vmatprep.subr.bf16.mxu0 0
    %1649 = vmatpush1.bf16.msra.mxu0 0
    %1650 = vmatprep.subr.bf16.mxu0 0
    %1651 = vmatpush1.bf16.msra.mxu0 0
    %1652 = vmatprep.subr.bf16.mxu0 0
    %1653 = vmatpush1.bf16.msra.mxu0 0
    %1654 = vmatprep.subr.bf16.mxu0 0
    %1655 = vmatpush1.bf16.msra.mxu0 %v717
    %1656 = vmatprep.subr.bf16.mxu0 0
    %1657 = vmatpush1.bf16.msra.mxu0 %v716
    %1658 = vmatprep.subr.bf16.mxu0 0
    %1659 = vmatpush2.bf16.msra.mxu0 0
    %1660 = vmatprep.subr.bf16.mxu0 0
    %1661 = vmatpush2.bf16.msra.mxu0 0
    %1662 = vmatprep.subr.bf16.mxu0 0
    %1663 = vmatpush2.bf16.msra.mxu0 0
    %1664 = vmatprep.subr.bf16.mxu0 0
    %1665 = vmatpush2.bf16.msra.mxu0 0
    %1666 = vmatprep.subr.bf16.mxu0 0
    %1667 = vmatpush2.bf16.msra.mxu0 0
    %1668 = vmatprep.subr.bf16.mxu0 0
    %1669 = vmatpush2.bf16.msra.mxu0 0
    %1670 = vmatprep.subr.bf16.mxu0 0
    %1671 = vmatpush2.bf16.msra.mxu0 0
    %1672 = vmatprep.subr.bf16.mxu0 0
    %1673 = vmatpush2.bf16.msra.mxu0 0
    %1674 = vmatprep.mubr.bf16.mxu0 0
    %1675 = vmatmul.mubr.bf16.gmra.mxu0 %v1640
    %v1676 = vpop.f32.mrf.mxu0
    %v1677 = vadd.f32 %v706, %v1676
    %v1678 = vpop.f32.mrf.mxu0
    %v1679 = vpop.f32.mrf.mxu0
    %v1680 = vpop.f32.mrf.mxu0
    %1681 = vdwg.mxu0
    %v1682 = vmax.f32 %v1498, %v1677
    %v1684 = vsel %vm297, %v1544, 0
    %1686 = vmatprep.subr.bf16.mxu0 0
    %1687 = vmatpush1.bf16.msra.mxu0 0
    %1688 = vmatprep.subr.bf16.mxu0 0
    %1689 = vmatpush1.bf16.msra.mxu0 0
    %1690 = vmatprep.subr.bf16.mxu0 0
    %1691 = vmatpush1.bf16.msra.mxu0 0
    %1692 = vmatprep.subr.bf16.mxu0 0
    %1693 = vmatpush1.bf16.msra.mxu0 0
    %1694 = vmatprep.subr.bf16.mxu0 0
    %1695 = vmatpush1.bf16.msra.mxu0 0
    %1696 = vmatprep.subr.bf16.mxu0 0
    %1697 = vmatpush1.bf16.msra.mxu0 0
    %1698 = vmatprep.subr.bf16.mxu0 0
    %1699 = vmatpush1.bf16.msra.mxu0 %v513
    %1700 = vmatprep.subr.bf16.mxu0 0
    %1701 = vmatpush1.bf16.msra.mxu0 %v512
    %1702 = vmatprep.subr.bf16.mxu0 0
    %1703 = vmatpush2.bf16.msra.mxu0 0
    %1704 = vmatprep.subr.bf16.mxu0 0
    %1705 = vmatpush2.bf16.msra.mxu0 0
    %1706 = vmatprep.subr.bf16.mxu0 0
    %1707 = vmatpush2.bf16.msra.mxu0 0
    %1708 = vmatprep.subr.bf16.mxu0 0
    %1709 = vmatpush2.bf16.msra.mxu0 0
    %1710 = vmatprep.subr.bf16.mxu0 0
    %1711 = vmatpush2.bf16.msra.mxu0 0
    %1712 = vmatprep.subr.bf16.mxu0 0
    %1713 = vmatpush2.bf16.msra.mxu0 0
    %1714 = vmatprep.subr.bf16.mxu0 0
    %1715 = vmatpush2.bf16.msra.mxu0 0
    %1716 = vmatprep.subr.bf16.mxu0 0
    %1717 = vmatpush2.bf16.msra.mxu0 0
    %1718 = vmatprep.mubr.bf16.mxu0 0
    %1719 = vmatmul.mubr.bf16.gmra.mxu0 %v1684
    %v1720 = vpop.f32.mrf.mxu0
    %v1721 = vadd.f32 0.0, %v1720
    %v1722 = vpop.f32.mrf.mxu0
    %v1723 = vpop.f32.mrf.mxu0
    %v1724 = vpop.f32.mrf.mxu0
    %1725 = vdwg.mxu0
    %v1726 = vadd.f32 %v476, %v1721
    %v1727 = vtanh.pop %v1726
    %v1728 = vpack.c.bf16 %v1727, %v1727
    %1730 = vrot.lane.b32.xlu0 %v1593, 32
    %v1731 = vpop.permute.xlu0 %1730
    %v1733 = vsel %vm297, %v1544, %v1731
    %v1734 = vsel %vm594, %v1733, 0
    %1736 = vmatprep.subr.bf16.mxu0 0
    %1737 = vmatpush1.bf16.msra.mxu0 0
    %1738 = vmatprep.subr.bf16.mxu0 0
    %1739 = vmatpush1.bf16.msra.mxu0 0
    %1740 = vmatprep.subr.bf16.mxu0 0
    %1741 = vmatpush1.bf16.msra.mxu0 0
    %1742 = vmatprep.subr.bf16.mxu0 0
    %1743 = vmatpush1.bf16.msra.mxu0 0
    %1744 = vmatprep.subr.bf16.mxu0 0
    %1745 = vmatpush1.bf16.msra.mxu0 %v589
    %1746 = vmatprep.subr.bf16.mxu0 0
    %1747 = vmatpush1.bf16.msra.mxu0 %v588
    %1748 = vmatprep.subr.bf16.mxu0 0
    %1749 = vmatpush1.bf16.msra.mxu0 %v587
    %1750 = vmatprep.subr.bf16.mxu0 0
    %1751 = vmatpush1.bf16.msra.mxu0 %v586
    %1752 = vmatprep.subr.bf16.mxu0 0
    %1753 = vmatpush2.bf16.msra.mxu0 0
    %1754 = vmatprep.subr.bf16.mxu0 0
    %1755 = vmatpush2.bf16.msra.mxu0 0
    %1756 = vmatprep.subr.bf16.mxu0 0
    %1757 = vmatpush2.bf16.msra.mxu0 0
    %1758 = vmatprep.subr.bf16.mxu0 0
    %1759 = vmatpush2.bf16.msra.mxu0 0
    %1760 = vmatprep.subr.bf16.mxu0 0
    %1761 = vmatpush2.bf16.msra.mxu0 0
    %1762 = vmatprep.subr.bf16.mxu0 0
    %1763 = vmatpush2.bf16.msra.mxu0 0
    %1764 = vmatprep.subr.bf16.mxu0 0
    %1765 = vmatpush2.bf16.msra.mxu0 0
    %1766 = vmatprep.subr.bf16.mxu0 0
    %1767 = vmatpush2.bf16.msra.mxu0 0
    %1768 = vmatprep.mubr.bf16.mxu0 0
    %1769 = vmatmul.mubr.bf16.gmra.mxu0 %v1734
    %v1770 = vpop.f32.mrf.mxu0
    %v1771 = vadd.f32 %v568, %v1770
    %v1772 = vpop.f32.mrf.mxu0
    %v1773 = vpop.f32.mrf.mxu0
    %v1774 = vpop.f32.mrf.mxu0
    %1775 = vdwg.mxu0
    %v1776 = vtanh.pop %v1771
    %v1777 = vpack.c.bf16 %v1776, %v1776
    %v1779 = vsel %vm297, %v1777, 0
    %1781 = vmatprep.subr.bf16.mxu0 0
    %1782 = vmatpush1.bf16.msra.mxu0 0
    %1783 = vmatprep.subr.bf16.mxu0 0
    %1784 = vmatpush1.bf16.msra.mxu0 0
    %1785 = vmatprep.subr.bf16.mxu0 0
    %1786 = vmatpush1.bf16.msra.mxu0 0
    %1787 = vmatprep.subr.bf16.mxu0 0
    %1788 = vmatpush1.bf16.msra.mxu0 0
    %1789 = vmatprep.subr.bf16.mxu0 0
    %1790 = vmatpush1.bf16.msra.mxu0 0
    %1791 = vmatprep.subr.bf16.mxu0 0
    %1792 = vmatpush1.bf16.msra.mxu0 0
    %1793 = vmatprep.subr.bf16.mxu0 0
    %1794 = vmatpush1.bf16.msra.mxu0 %v654
    %1795 = vmatprep.subr.bf16.mxu0 0
    %1796 = vmatpush1.bf16.msra.mxu0 %v653
    %1797 = vmatprep.subr.bf16.mxu0 0
    %1798 = vmatpush2.bf16.msra.mxu0 0
    %1799 = vmatprep.subr.bf16.mxu0 0
    %1800 = vmatpush2.bf16.msra.mxu0 0
    %1801 = vmatprep.subr.bf16.mxu0 0
    %1802 = vmatpush2.bf16.msra.mxu0 0
    %1803 = vmatprep.subr.bf16.mxu0 0
    %1804 = vmatpush2.bf16.msra.mxu0 0
    %1805 = vmatprep.subr.bf16.mxu0 0
    %1806 = vmatpush2.bf16.msra.mxu0 0
    %1807 = vmatprep.subr.bf16.mxu0 0
    %1808 = vmatpush2.bf16.msra.mxu0 0
    %1809 = vmatprep.subr.bf16.mxu0 0
    %1810 = vmatpush2.bf16.msra.mxu0 0
    %1811 = vmatprep.subr.bf16.mxu0 0
    %1812 = vmatpush2.bf16.msra.mxu0 0
    %1813 = vmatprep.mubr.bf16.mxu0 0
    %1814 = vmatmul.mubr.bf16.gmra.mxu0 %v1779
    %v1815 = vpop.f32.mrf.mxu0
    %v1816 = vadd.f32 %v643, %v1815
    %v1817 = vpop.f32.mrf.mxu0
    %v1818 = vpop.f32.mrf.mxu0
    %v1819 = vpop.f32.mrf.mxu0
    %1820 = vdwg.mxu0
    %v1821 = vmax.f32 %v1816, 0.0
    %v1822 = vpack.c.bf16 %v1821, %v1821
    %v1824 = vsel %vm297, %v1822, 0
    %1826 = vmatprep.subr.bf16.mxu0 0
    %1827 = vmatpush1.bf16.msra.mxu0 0
    %1828 = vmatprep.subr.bf16.mxu0 0
    %1829 = vmatpush1.bf16.msra.mxu0 0
    %1830 = vmatprep.subr.bf16.mxu0 0
    %1831 = vmatpush1.bf16.msra.mxu0 0
    %1832 = vmatprep.subr.bf16.mxu0 0
    %1833 = vmatpush1.bf16.msra.mxu0 0
    %1834 = vmatprep.subr.bf16.mxu0 0
    %1835 = vmatpush1.bf16.msra.mxu0 0
    %1836 = vmatprep.subr.bf16.mxu0 0
    %1837 = vmatpush1.bf16.msra.mxu0 0
    %1838 = vmatprep.subr.bf16.mxu0 0
    %1839 = vmatpush1.bf16.msra.mxu0 %v717
    %1840 = vmatprep.subr.bf16.mxu0 0
    %1841 = vmatpush1.bf16.msra.mxu0 %v716
    %1842 = vmatprep.subr.bf16.mxu0 0
    %1843 = vmatpush2.bf16.msra.mxu0 0
    %1844 = vmatprep.subr.bf16.mxu0 0
    %1845 = vmatpush2.bf16.msra.mxu0 0
    %1846 = vmatprep.subr.bf16.mxu0 0
    %1847 = vmatpush2.bf16.msra.mxu0 0
    %1848 = vmatprep.subr.bf16.mxu0 0
    %1849 = vmatpush2.bf16.msra.mxu0 0
    %1850 = vmatprep.subr.bf16.mxu0 0
    %1851 = vmatpush2.bf16.msra.mxu0 0
    %1852 = vmatprep.subr.bf16.mxu0 0
    %1853 = vmatpush2.bf16.msra.mxu0 0
    %1854 = vmatprep.subr.bf16.mxu0 0
    %1855 = vmatpush2.bf16.msra.mxu0 0
    %1856 = vmatprep.subr.bf16.mxu0 0
    %1857 = vmatpush2.bf16.msra.mxu0 0
    %1858 = vmatprep.mubr.bf16.mxu0 0
    %1859 = vmatmul.mubr.bf16.gmra.mxu0 %v1824
    %v1860 = vpop.f32.mrf.mxu0
    %v1861 = vadd.f32 %v706, %v1860
    %v1862 = vpop.f32.mrf.mxu0
    %v1863 = vpop.f32.mrf.mxu0
    %v1864 = vpop.f32.mrf.mxu0
    %1865 = vdwg.mxu0
    %v1866 = vmax.f32 %v1682, %v1861
    %1868 = vrot.lane.b32.xlu0 %v1777, 32
    %v1869 = vpop.permute.xlu0 %1868
    %v1872 = vsel %vm297, %v1728, %v1869
    %v1873 = vsel %vm594, %v1872, 0
    %1875 = vmatprep.subr.bf16.mxu0 0
    %1876 = vmatpush1.bf16.msra.mxu0 0
    %1877 = vmatprep.subr.bf16.mxu0 0
    %1878 = vmatpush1.bf16.msra.mxu0 0
    %1879 = vmatprep.subr.bf16.mxu0 0
    %1880 = vmatpush1.bf16.msra.mxu0 0
    %1881 = vmatprep.subr.bf16.mxu0 0
    %1882 = vmatpush1.bf16.msra.mxu0 0
    %1883 = vmatprep.subr.bf16.mxu0 0
    %1884 = vmatpush1.bf16.msra.mxu0 %v589
    %1885 = vmatprep.subr.bf16.mxu0 0
    %1886 = vmatpush1.bf16.msra.mxu0 %v588
    %1887 = vmatprep.subr.bf16.mxu0 0
    %1888 = vmatpush1.bf16.msra.mxu0 %v587
    %1889 = vmatprep.subr.bf16.mxu0 0
    %1890 = vmatpush1.bf16.msra.mxu0 %v586
    %1891 = vmatprep.subr.bf16.mxu0 0
    %1892 = vmatpush2.bf16.msra.mxu0 0
    %1893 = vmatprep.subr.bf16.mxu0 0
    %1894 = vmatpush2.bf16.msra.mxu0 0
    %1895 = vmatprep.subr.bf16.mxu0 0
    %1896 = vmatpush2.bf16.msra.mxu0 0
    %1897 = vmatprep.subr.bf16.mxu0 0
    %1898 = vmatpush2.bf16.msra.mxu0 0
    %1899 = vmatprep.subr.bf16.mxu0 0
    %1900 = vmatpush2.bf16.msra.mxu0 0
    %1901 = vmatprep.subr.bf16.mxu0 0
    %1902 = vmatpush2.bf16.msra.mxu0 0
    %1903 = vmatprep.subr.bf16.mxu0 0
    %1904 = vmatpush2.bf16.msra.mxu0 0
    %1905 = vmatprep.subr.bf16.mxu0 0
    %1906 = vmatpush2.bf16.msra.mxu0 0
    %1907 = vmatprep.mubr.bf16.mxu0 0
    %1908 = vmatmul.mubr.bf16.gmra.mxu0 %v1873
    %v1909 = vpop.f32.mrf.mxu0
    %v1910 = vadd.f32 %v568, %v1909
    %v1911 = vpop.f32.mrf.mxu0
    %v1912 = vpop.f32.mrf.mxu0
    %v1913 = vpop.f32.mrf.mxu0
    %1914 = vdwg.mxu0
    %v1915 = vtanh.pop %v1910
    %v1916 = vpack.c.bf16 %v1915, %v1915
    %v1918 = vsel %vm297, %v1916, 0
    %1920 = vmatprep.subr.bf16.mxu0 0
    %1921 = vmatpush1.bf16.msra.mxu0 0
    %1922 = vmatprep.subr.bf16.mxu0 0
    %1923 = vmatpush1.bf16.msra.mxu0 0
    %1924 = vmatprep.subr.bf16.mxu0 0
    %1925 = vmatpush1.bf16.msra.mxu0 0
    %1926 = vmatprep.subr.bf16.mxu0 0
    %1927 = vmatpush1.bf16.msra.mxu0 0
    %1928 = vmatprep.subr.bf16.mxu0 0
    %1929 = vmatpush1.bf16.msra.mxu0 0
    %1930 = vmatprep.subr.bf16.mxu0 0
    %1931 = vmatpush1.bf16.msra.mxu0 0
    %1932 = vmatprep.subr.bf16.mxu0 0
    %1933 = vmatpush1.bf16.msra.mxu0 %v654
    %1934 = vmatprep.subr.bf16.mxu0 0
    %1935 = vmatpush1.bf16.msra.mxu0 %v653
    %1936 = vmatprep.subr.bf16.mxu0 0
    %1937 = vmatpush2.bf16.msra.mxu0 0
    %1938 = vmatprep.subr.bf16.mxu0 0
    %1939 = vmatpush2.bf16.msra.mxu0 0
    %1940 = vmatprep.subr.bf16.mxu0 0
    %1941 = vmatpush2.bf16.msra.mxu0 0
    %1942 = vmatprep.subr.bf16.mxu0 0
    %1943 = vmatpush2.bf16.msra.mxu0 0
    %1944 = vmatprep.subr.bf16.mxu0 0
    %1945 = vmatpush2.bf16.msra.mxu0 0
    %1946 = vmatprep.subr.bf16.mxu0 0
    %1947 = vmatpush2.bf16.msra.mxu0 0
    %1948 = vmatprep.subr.bf16.mxu0 0
    %1949 = vmatpush2.bf16.msra.mxu0 0
    %1950 = vmatprep.subr.bf16.mxu0 0
    %1951 = vmatpush2.bf16.msra.mxu0 0
    %1952 = vmatprep.mubr.bf16.mxu0 0
    %1953 = vmatmul.mubr.bf16.gmra.mxu0 %v1918
    %v1954 = vpop.f32.mrf.mxu0
    %v1955 = vadd.f32 %v643, %v1954
    %v1956 = vpop.f32.mrf.mxu0
    %v1957 = vpop.f32.mrf.mxu0
    %v1958 = vpop.f32.mrf.mxu0
    %1959 = vdwg.mxu0
    %v1960 = vmax.f32 %v1955, 0.0
    %v1961 = vpack.c.bf16 %v1960, %v1960
    %v1963 = vsel %vm297, %v1961, 0
    %1965 = vmatprep.subr.bf16.mxu0 0
    %1966 = vmatpush1.bf16.msra.mxu0 0
    %1967 = vmatprep.subr.bf16.mxu0 0
    %1968 = vmatpush1.bf16.msra.mxu0 0
    %1969 = vmatprep.subr.bf16.mxu0 0
    %1970 = vmatpush1.bf16.msra.mxu0 0
    %1971 = vmatprep.subr.bf16.mxu0 0
    %1972 = vmatpush1.bf16.msra.mxu0 0
    %1973 = vmatprep.subr.bf16.mxu0 0
    %1974 = vmatpush1.bf16.msra.mxu0 0
    %1975 = vmatprep.subr.bf16.mxu0 0
    %1976 = vmatpush1.bf16.msra.mxu0 0
    %1977 = vmatprep.subr.bf16.mxu0 0
    %1978 = vmatpush1.bf16.msra.mxu0 %v717
    %1979 = vmatprep.subr.bf16.mxu0 0
    %1980 = vmatpush1.bf16.msra.mxu0 %v716
    %1981 = vmatprep.subr.bf16.mxu0 0
    %1982 = vmatpush2.bf16.msra.mxu0 0
    %1983 = vmatprep.subr.bf16.mxu0 0
    %1984 = vmatpush2.bf16.msra.mxu0 0
    %1985 = vmatprep.subr.bf16.mxu0 0
    %1986 = vmatpush2.bf16.msra.mxu0 0
    %1987 = vmatprep.subr.bf16.mxu0 0
    %1988 = vmatpush2.bf16.msra.mxu0 0
    %1989 = vmatprep.subr.bf16.mxu0 0
    %1990 = vmatpush2.bf16.msra.mxu0 0
    %1991 = vmatprep.subr.bf16.mxu0 0
    %1992 = vmatpush2.bf16.msra.mxu0 0
    %1993 = vmatprep.subr.bf16.mxu0 0
    %1994 = vmatpush2.bf16.msra.mxu0 0
    %1995 = vmatprep.subr.bf16.mxu0 0
    %1996 = vmatpush2.bf16.msra.mxu0 0
    %1997 = vmatprep.mubr.bf16.mxu0 0
    %1998 = vmatmul.mubr.bf16.gmra.mxu0 %v1963
    %v1999 = vpop.f32.mrf.mxu0
    %v2000 = vadd.f32 %v706, %v1999
    %v2001 = vpop.f32.mrf.mxu0
    %v2002 = vpop.f32.mrf.mxu0
    %v2003 = vpop.f32.mrf.mxu0
    %2004 = vdwg.mxu0
    %v2005 = vmax.f32 %v1866, %v2000
    %v2006 = vld [vmem:[#allocation2] sm:$0xff]
    %v2007 = vpack.c.bf16 %v2006, %v2006
    %v2008 = vld [vmem:[%s15] sm:$0xf]
    %v2009 = vld [vmem:[#allocation13] sm:$0x1]
    %v2011 = vlaneseq
    %v2012 = vshrl.u32 %v2011, 7
    %v2013 = vsub.s32 0, %v2012
    %v2014 = vrot.slane %v2009, %v2013
    %v2017 = vsel %vm180, %v2007, 0
    %v2020 = vsel %vm193, %v2008, 0
    %2022 = vmatprep.subr.bf16.mxu0 0
    %2023 = vmatpush1.bf16.msra.mxu0 0
    %2024 = vmatprep.subr.bf16.mxu0 0
    %2025 = vmatpush1.bf16.msra.mxu0 0
    %2026 = vmatprep.subr.bf16.mxu0 0
    %2027 = vmatpush1.bf16.msra.mxu0 0
    %2028 = vmatprep.subr.bf16.mxu0 0
    %2029 = vmatpush1.bf16.msra.mxu0 0
    %2030 = vmatprep.subr.bf16.mxu0 0
    %2031 = vmatpush1.bf16.msra.mxu0 0
    %2032 = vmatprep.subr.bf16.mxu0 0
    %2033 = vmatpush1.bf16.msra.mxu0 0
    %2034 = vmatprep.subr.bf16.mxu0 0
    %2035 = vmatpush1.bf16.msra.mxu0 0
    %2036 = vmatprep.subr.bf16.mxu0 0
    %2037 = vmatpush1.bf16.msra.mxu0 %v2020
    %2038 = vmatprep.subr.bf16.mxu0 0
    %2039 = vmatpush2.bf16.msra.mxu0 0
    %2040 = vmatprep.subr.bf16.mxu0 0
    %2041 = vmatpush2.bf16.msra.mxu0 0
    %2042 = vmatprep.subr.bf16.mxu0 0
    %2043 = vmatpush2.bf16.msra.mxu0 0
    %2044 = vmatprep.subr.bf16.mxu0 0
    %2045 = vmatpush2.bf16.msra.mxu0 0
    %2046 = vmatprep.subr.bf16.mxu0 0
    %2047 = vmatpush2.bf16.msra.mxu0 0
    %2048 = vmatprep.subr.bf16.mxu0 0
    %2049 = vmatpush2.bf16.msra.mxu0 0
    %2050 = vmatprep.subr.bf16.mxu0 0
    %2051 = vmatpush2.bf16.msra.mxu0 0
    %2052 = vmatprep.subr.bf16.mxu0 0
    %2053 = vmatpush2.bf16.msra.mxu0 0
    %2054 = vmatprep.mubr.bf16.mxu0 0
    %2055 = vmatmul.mubr.bf16.gmra.mxu0 %v2017
    %v2056 = vpop.f32.mrf.mxu0
    %v2057 = vadd.f32 %v2014, %v2056
    %v2058 = vpop.f32.mrf.mxu0
    %v2059 = vpop.f32.mrf.mxu0
    %v2060 = vpop.f32.mrf.mxu0
    %2061 = vdwg.mxu0
    %v2062 = vmax.f32 %v2057, 0.0
    %v2063 = vpack.c.bf16 %v2062, %v2062
    %v2064 = vld [vmem:[%s17] sm:$0xf]
    %v2065 = vld [vmem:[%s18] sm:$0x1]
    %v2067 = vlaneseq
    %v2068 = vshrl.u32 %v2067, 7
    %v2069 = vsub.s32 0, %v2068
    %v2070 = vrot.slane %v2065, %v2069
    %v2073 = vsel %vm180, %v2063, 0
    %v2076 = vsel %vm193, %v2064, 0
    %2078 = vmatprep.subr.bf16.mxu0 0
    %2079 = vmatpush1.bf16.msra.mxu0 0
    %2080 = vmatprep.subr.bf16.mxu0 0
    %2081 = vmatpush1.bf16.msra.mxu0 0
    %2082 = vmatprep.subr.bf16.mxu0 0
    %2083 = vmatpush1.bf16.msra.mxu0 0
    %2084 = vmatprep.subr.bf16.mxu0 0
    %2085 = vmatpush1.bf16.msra.mxu0 0
    %2086 = vmatprep.subr.bf16.mxu0 0
    %2087 = vmatpush1.bf16.msra.mxu0 0
    %2088 = vmatprep.subr.bf16.mxu0 0
    %2089 = vmatpush1.bf16.msra.mxu0 0
    %2090 = vmatprep.subr.bf16.mxu0 0
    %2091 = vmatpush1.bf16.msra.mxu0 0
    %2092 = vmatprep.subr.bf16.mxu0 0
    %2093 = vmatpush1.bf16.msra.mxu0 %v2076
    %2094 = vmatprep.subr.bf16.mxu0 0
    %2095 = vmatpush2.bf16.msra.mxu0 0
    %2096 = vmatprep.subr.bf16.mxu0 0
    %2097 = vmatpush2.bf16.msra.mxu0 0
    %2098 = vmatprep.subr.bf16.mxu0 0
    %2099 = vmatpush2.bf16.msra.mxu0 0
    %2100 = vmatprep.subr.bf16.mxu0 0
    %2101 = vmatpush2.bf16.msra.mxu0 0
    %2102 = vmatprep.subr.bf16.mxu0 0
    %2103 = vmatpush2.bf16.msra.mxu0 0
    %2104 = vmatprep.subr.bf16.mxu0 0
    %2105 = vmatpush2.bf16.msra.mxu0 0
    %2106 = vmatprep.subr.bf16.mxu0 0
    %2107 = vmatpush2.bf16.msra.mxu0 0
    %2108 = vmatprep.subr.bf16.mxu0 0
    %2109 = vmatpush2.bf16.msra.mxu0 0
    %2110 = vmatprep.mubr.bf16.mxu0 0
    %2111 = vmatmul.mubr.bf16.gmra.mxu0 %v2073
    %v2112 = vpop.f32.mrf.mxu0
    %v2113 = vadd.f32 %v2070, %v2112
    %v2114 = vpop.f32.mrf.mxu0
    %v2115 = vpop.f32.mrf.mxu0
    %v2116 = vpop.f32.mrf.mxu0
    %2117 = vdwg.mxu0
    %v2118 = vpack.c.bf16 %v2005, %v2005
    %v2119 = vld [vmem:[%s19] sm:$0xf]
    %v2120 = vld [vmem:[%s19 + $0x4] sm:$0xf]
    %v2121 = vld [vmem:[%s19 + $0x8] sm:$0xf]
    %v2122 = vld [vmem:[%s19 + $0xc] sm:$0xf]
    %v2123 = vpack.c.bf16 %v2113, %v2113
    %v2124 = vld [vmem:[%s20] sm:$0xf]
    %v2126 = vsel %vm180, %v2123, 0
    %v2129 = vsel %vm193, %v2124, 0
    %2131 = vmatprep.subr.bf16.mxu0 0
    %2132 = vmatpush1.bf16.msra.mxu0 0
    %2133 = vmatprep.subr.bf16.mxu0 0
    %2134 = vmatpush1.bf16.msra.mxu0 0
    %2135 = vmatprep.subr.bf16.mxu0 0
    %2136 = vmatpush1.bf16.msra.mxu0 0
    %2137 = vmatprep.subr.bf16.mxu0 0
    %2138 = vmatpush1.bf16.msra.mxu0 0
    %2139 = vmatprep.subr.bf16.mxu0 0
    %2140 = vmatpush1.bf16.msra.mxu0 0
    %2141 = vmatprep.subr.bf16.mxu0 0
    %2142 = vmatpush1.bf16.msra.mxu0 0
    %2143 = vmatprep.subr.bf16.mxu0 0
    %2144 = vmatpush1.bf16.msra.mxu0 0
    %2145 = vmatprep.subr.bf16.mxu0 0
    %2146 = vmatpush1.bf16.msra.mxu0 %v2129
    %2147 = vmatprep.subr.bf16.mxu0 0
    %2148 = vmatpush2.bf16.msra.mxu0 0
    %2149 = vmatprep.subr.bf16.mxu0 0
    %2150 = vmatpush2.bf16.msra.mxu0 0
    %2151 = vmatprep.subr.bf16.mxu0 0
    %2152 = vmatpush2.bf16.msra.mxu0 0
    %2153 = vmatprep.subr.bf16.mxu0 0
    %2154 = vmatpush2.bf16.msra.mxu0 0
    %2155 = vmatprep.subr.bf16.mxu0 0
    %2156 = vmatpush2.bf16.msra.mxu0 0
    %2157 = vmatprep.subr.bf16.mxu0 0
    %2158 = vmatpush2.bf16.msra.mxu0 0
    %2159 = vmatprep.subr.bf16.mxu0 0
    %2160 = vmatpush2.bf16.msra.mxu0 0
    %2161 = vmatprep.subr.bf16.mxu0 0
    %2162 = vmatpush2.bf16.msra.mxu0 0
    %2163 = vmatprep.mubr.bf16.mxu0 0
    %2164 = vmatmul.mubr.bf16.gmra.mxu0 %v2126
    %v2165 = vpop.f32.mrf.mxu0
    %v2166 = vadd.f32 0.0, %v2165
    %v2167 = vpop.f32.mrf.mxu0
    %v2168 = vpop.f32.mrf.mxu0
    %v2169 = vpop.f32.mrf.mxu0
    %2170 = vdwg.mxu0
    %v2175 = vunpack.c.l.b16 %v2119
    %v2176 = vunpack.c.l.b16 %v2120
    %v2177 = vunpack.c.l.b16 %v2121
    %v2178 = vunpack.c.l.b16 %v2122
    %v2179 = vpack.c.b16 %v2176, %v2175
    %v2180 = vpack.c.b16 %v2178, %v2177
    %v2184 = vsel %vm297, %v2118, 0
    %2186 = vmatprep.subr.bf16.mxu0 0
    %2187 = vmatpush1.bf16.msra.mxu0 0
    %2188 = vmatprep.subr.bf16.mxu0 0
    %2189 = vmatpush1.bf16.msra.mxu0 0
    %2190 = vmatprep.subr.bf16.mxu0 0
    %2191 = vmatpush1.bf16.msra.mxu0 0
    %2192 = vmatprep.subr.bf16.mxu0 0
    %2193 = vmatpush1.bf16.msra.mxu0 0
    %2194 = vmatprep.subr.bf16.mxu0 0
    %2195 = vmatpush1.bf16.msra.mxu0 0
    %2196 = vmatprep.subr.bf16.mxu0 0
    %2197 = vmatpush1.bf16.msra.mxu0 0
    %2198 = vmatprep.subr.bf16.mxu0 0
    %2199 = vmatpush1.bf16.msra.mxu0 %v2180
    %2200 = vmatprep.subr.bf16.mxu0 0
    %2201 = vmatpush1.bf16.msra.mxu0 %v2179
    %2202 = vmatprep.subr.bf16.mxu0 0
    %2203 = vmatpush2.bf16.msra.mxu0 0
    %2204 = vmatprep.subr.bf16.mxu0 0
    %2205 = vmatpush2.bf16.msra.mxu0 0
    %2206 = vmatprep.subr.bf16.mxu0 0
    %2207 = vmatpush2.bf16.msra.mxu0 0
    %2208 = vmatprep.subr.bf16.mxu0 0
    %2209 = vmatpush2.bf16.msra.mxu0 0
    %2210 = vmatprep.subr.bf16.mxu0 0
    %2211 = vmatpush2.bf16.msra.mxu0 0
    %2212 = vmatprep.subr.bf16.mxu0 0
    %2213 = vmatpush2.bf16.msra.mxu0 0
    %2214 = vmatprep.subr.bf16.mxu0 0
    %2215 = vmatpush2.bf16.msra.mxu0 0
    %2216 = vmatprep.subr.bf16.mxu0 0
    %2217 = vmatpush2.bf16.msra.mxu0 0
    %2218 = vmatprep.mubr.bf16.mxu0 0
    %2219 = vmatmul.mubr.bf16.gmra.mxu0 %v2184
    %v2220 = vpop.f32.mrf.mxu0
    %v2221 = vadd.f32 %v2166, %v2220
    %v2222 = vpop.f32.mrf.mxu0
    %v2223 = vpop.f32.mrf.mxu0
    %v2224 = vpop.f32.mrf.mxu0
    %2225 = vdwg.mxu0
    %v2226 = vld [vmem:[%s21] sm:$0x1]
    %v2228 = vlaneseq
    %v2229 = vshrl.u32 %v2228, 7
    %v2230 = vsub.s32 0, %v2229
    %v2231 = vrot.slane %v2226, %v2230
    %v2233 = vadd.f32 %v2221, %v2231
    %v2234 = vmax.f32 %v2233, 0.0
    %v2235 = vpack.c.bf16 %v2234, %v2234
    %v2236 = vld [vmem:[%s22] sm:$0xf]
    %v2237 = vld [vmem:[%s22 + $0x4] sm:$0xf]
    %v2238 = vld [vmem:[%s22 + $0x8] sm:$0xf]
    %v2239 = vld [vmem:[%s22 + $0xc] sm:$0xf]
    %v2240 = vld [vmem:[%s22 + $0x10] sm:$0xf]
    %v2241 = vld [vmem:[%s23] sm:$0x1]
    %v2243 = vlaneseq
    %v2244 = vshrl.u32 %v2243, 7
    %v2245 = vsub.s32 0, %v2244
    %v2246 = vrot.slane %v2241, %v2245
    %v2253 = vunpack.c.l.b16 %v2236
    %v2254 = vunpack.c.l.b16 %v2237
    %v2255 = vunpack.c.l.b16 %v2238
    %v2256 = vunpack.c.l.b16 %v2239
    %v2257 = vunpack.c.l.b16 %v2240
    %v2258 = vpack.c.b16 %v2254, %v2253
    %v2259 = vpack.c.b16 %v2256, %v2255
    %v2260 = vpack.c.b16 %v2257, %v2257
    %vm2263 = vcmask 326656
    %v2265 = vsel %vm2263, %v2235, 0
    %v2268 = vsel %vm193, %v2260, 0
    %2270 = vmatprep.subr.bf16.mxu0 0
    %2271 = vmatpush1.bf16.msra.mxu0 0
    %2272 = vmatprep.subr.bf16.mxu0 0
    %2273 = vmatpush1.bf16.msra.mxu0 0
    %2274 = vmatprep.subr.bf16.mxu0 0
    %2275 = vmatpush1.bf16.msra.mxu0 0
    %2276 = vmatprep.subr.bf16.mxu0 0
    %2277 = vmatpush1.bf16.msra.mxu0 0
    %2278 = vmatprep.subr.bf16.mxu0 0
    %2279 = vmatpush1.bf16.msra.mxu0 0
    %2280 = vmatprep.subr.bf16.mxu0 0
    %2281 = vmatpush1.bf16.msra.mxu0 %v2268
    %2282 = vmatprep.subr.bf16.mxu0 0
    %2283 = vmatpush1.bf16.msra.mxu0 %v2259
    %2284 = vmatprep.subr.bf16.mxu0 0
    %2285 = vmatpush1.bf16.msra.mxu0 %v2258
    %2286 = vmatprep.subr.bf16.mxu0 0
    %2287 = vmatpush2.bf16.msra.mxu0 0
    %2288 = vmatprep.subr.bf16.mxu0 0
    %2289 = vmatpush2.bf16.msra.mxu0 0
    %2290 = vmatprep.subr.bf16.mxu0 0
    %2291 = vmatpush2.bf16.msra.mxu0 0
    %2292 = vmatprep.subr.bf16.mxu0 0
    %2293 = vmatpush2.bf16.msra.mxu0 0
    %2294 = vmatprep.subr.bf16.mxu0 0
    %2295 = vmatpush2.bf16.msra.mxu0 0
    %2296 = vmatprep.subr.bf16.mxu0 0
    %2297 = vmatpush2.bf16.msra.mxu0 0
    %2298 = vmatprep.subr.bf16.mxu0 0
    %2299 = vmatpush2.bf16.msra.mxu0 0
    %2300 = vmatprep.subr.bf16.mxu0 0
    %2301 = vmatpush2.bf16.msra.mxu0 0
    %2302 = vmatprep.mubr.bf16.mxu0 0
    %2303 = vmatmul.mubr.bf16.gmra.mxu0 %v2265
    %v2304 = vpop.f32.mrf.mxu0
    %v2305 = vadd.f32 %v2246, %v2304
    %v2306 = vpop.f32.mrf.mxu0
    %v2307 = vpop.f32.mrf.mxu0
    %v2308 = vpop.f32.mrf.mxu0
    %2309 = vdwg.mxu0
    %2310 = vst [vmem:[#allocation14] sm:$0xff] %v2305
    // Predicated region
    $region126: #{tpu_custom_call.1} parent=1 // pred_check
      _
    $region127: #{tpu_custom_call.1} parent=1 // pred_check_branch
      %2312 = sbr.rel (0) target = $region129
    $region128: #{tpu_custom_call.1} parent=1 // pred_region
      %s2314 = ssub.s32 128, 128
      %2315 = vsyncadd [#allocation4], %s2314
      %s2317 = sshll.u32 [#allocation14], 4
      %s2318 = int_to_ptr.vmem [resolvable:$true] %s2317
      %2320 = dma.vmem_to_hbm [thread:$0]  %s2318, 128, %s24, [#allocation4]
    $region129: #{tpu_custom_call.1} parent=1 // pred_fallthru
      _
    // Predicated region
    $region130: #{tpu_custom_call.1} parent=1 // pred_check
      _
    $region131: #{tpu_custom_call.1} parent=1 // pred_check_branch
      %2322 = sbr.rel (0) target = $region133
    $region132: #{tpu_custom_call.1} parent=1 // pred_region
      %2323 = dma.done [#allocation4], 128
    $region133: #{tpu_custom_call.1} parent=1 // pred_fallthru
      _
    %2324 = vsyncpa [#allocation3], 1
    %2325 = vsyncpa [#allocation6], 1
    %2326 = vsyncpa [#allocation9], 1
    %2327 = vsyncpa [#allocation12], 1
    %2328 = vsyncpa [#allocation4], 1

</llo_original>
